<compile_context>
chip_gen: v7x
topology: tpu7x:2x2x1
jax: 0.10.0
libtpu: 0.0.40
codegen_flags: <defaults>
</compile_context>

<pallas_src>
import math
import functools

import jax
import jax.numpy as jnp
from jax.experimental import pallas as pl
from jax.experimental.pallas import tpu as pltpu


def _rga_fused_kernel(x_ref, wqkv_ref, bqkv_ref, er_ref, out_ref,
                      *, num_heads, d_head):
    """One batch element per grid step; all O(S^2) intermediates stay in VMEM."""
    S = x_ref.shape[1]
    D = num_heads * d_head
    inv_sqrt = 1.0 / math.sqrt(d_head)

    x_bf = x_ref[0]                 # (S, D)      bf16 (cast in wrapper)
    er_bf = er_ref[...]             # (S, d_head) bf16 = Er[max_len - S:, :]

    # --- Projections: one full-width matmul, f32 accumulate, one lane-dense bias add.
    qkv = jnp.dot(x_bf, wqkv_ref[...],
                  preferred_element_type=jnp.float32) + bqkv_ref[...]        # (S, 3D) f32

    # 128-lane-aligned slices, cast once to bf16 MXU operands.
    q_all = qkv[:, :D].astype(jnp.bfloat16)
    k_all = qkv[:, D:2 * D].astype(jnp.bfloat16)
    v_all = qkv[:, 2 * D:].astype(jnp.bfloat16)

    # --- Additive causal mask, built once per grid step (iotas/bool die right away).
    row = jax.lax.broadcasted_iota(jnp.int32, (S, S), 0)
    col = jax.lax.broadcasted_iota(jnp.int32, (S, S), 1)
    mask_add = jnp.where(col <= row, 0.0, -1e30).astype(jnp.float32)         # (S, S)

    dn_nt = (((1,), (1,)), ((), ()))   # contract last dims (A @ B.T without a transpose op)
    dn_nn = (((1,), (0,)), ((), ()))   # standard A @ B

    for h in range(num_heads):         # static unroll; one (S, 2S) score block live at a time
        ls = slice(h * d_head, (h + 1) * d_head)
        q_h = q_all[:, ls]             # (S, d_head) bf16
        k_h = k_all[:, ls]
        v_h = v_all[:, ls]

        # Fused QK^T / QEr^T: N = 2S = 256 fills the 256-wide MXU on v6e/v7x.
        k_er = jnp.concatenate([k_h, er_bf], axis=0)                         # (2S, d_head)
        qk_qer = jax.lax.dot_general(q_h, k_er, dn_nt,
                                     preferred_element_type=jnp.float32)     # (S, 2S) f32
        qk = qk_qer[:, :S]             # lane-aligned splits (S = 128)
        qer = qk_qer[:, S:]

        # In-VMEM skew: per-row right-rotate by (i + 1)  =>  srel[i, j] = qer[i, S-1-i+j]
        # for j <= i (the j > i half is garbage but masked below).  XLU op, off the VPU path.
        srel = pltpu.roll(qer, shift=1, axis=1, stride=1, stride_axis=0)

        scores = (qk + srel) * inv_sqrt + mask_add
        m = jnp.max(scores, axis=-1, keepdims=True)
        e = jnp.exp(scores - m)                                              # f32 softmax
        p = e / jnp.sum(e, axis=-1, keepdims=True)                           # exact division

        o_h = jax.lax.dot_general(p.astype(jnp.bfloat16), v_h, dn_nn,
                                  preferred_element_type=jnp.float32)        # (S, d_head)

        # Store straight into the output block's lane slice (VMEM); no concat, and the
        # HBM writeback of the whole (1, S, D) block stays lane-dense.
        out_ref[0, :, ls] = o_h


def relative_global_attention(x, params, *, num_heads, max_len):
    B, S, D = x.shape
    assert D % num_heads == 0, "incompatible d_model / num_heads"
    d_head = D // num_heads
    assert S <= max_len, "sequence length exceeds model capacity"

    # One-time wrapper-side prep (amortized over the whole batch):
    #  * weights transposed to (in, out) layout and fused into a single (D, 3D) matrix
    #    -> one full-width projection matmul in-kernel, zero in-kernel weight transposes.
    #  * MXU-only operands stored as bf16 -> half the HBM->VMEM DMA bytes.
    w_qkv = jnp.concatenate(
        [params["wq"].T, params["wk"].T, params["wv"].T], axis=1).astype(jnp.bfloat16)   # (D, 3D)
    b_qkv = jnp.concatenate(
        [params["bq"], params["bk"], params["bv"]]).reshape(1, 3 * D).astype(jnp.float32)
    er_slice = params["er"][max_len - S:, :].astype(jnp.bfloat16)                         # (S, d_head)
    x_bf = x.astype(jnp.bfloat16)

    kernel = functools.partial(_rga_fused_kernel, num_heads=num_heads, d_head=d_head)
    full2 = lambda b: (0, 0)

    out = pl.pallas_call(
        kernel,
        grid=(B,),
        in_specs=[
            pl.BlockSpec((1, S, D), lambda b: (b, 0, 0)),   # x (bf16)
            pl.BlockSpec((D, 3 * D), full2),                # fused qkv weight (bf16, (in,out))
            pl.BlockSpec((1, 3 * D), full2),                # fused qkv bias (f32)
            pl.BlockSpec((S, d_head), full2),               # Er[max_len-S:, :] (bf16)
        ],
        out_specs=pl.BlockSpec((1, S, D), lambda b: (b, 0, 0)),
        out_shape=jax.ShapeDtypeStruct((B, S, D), jnp.float32),
        compiler_params=pltpu.CompilerParams(
            dimension_semantics=("parallel",),
            # Real footprint at S=128, D=128 is a few MiB; 32 MiB leaves headroom on
            # every generation (v7x has only 64 MiB of physical VMEM per TensorCore).
            vmem_limit_bytes=32 * 1024 * 1024,
        ),
    )(x_bf, w_qkv, b_qkv, er_slice)
    return out


def _reference(x, params, *, num_heads, max_len):
    # Pure-JAX f32 re-implementation of the PyTorch forward, for verification.
    B, S, D = x.shape
    d_head = D // num_heads
    q = x @ params["wq"].T + params["bq"]
    k = x @ params["wk"].T + params["bk"]
    v = x @ params["wv"].T + params["bv"]
    q = q.reshape(B, S, num_heads, d_head).transpose(0, 2, 1, 3)
    k_t = k.reshape(B, S, num_heads, d_head).transpose(0, 2, 3, 1)
    v = v.reshape(B, S, num_heads, d_head).transpose(0, 2, 1, 3)
    er_t = params["er"][max_len - S:, :].T
    qer = q @ er_t
    padded = jnp.pad(qer, ((0, 0), (0, 0), (0, 0), (1, 0)))
    srel = padded.reshape(B, num_heads, S + 1, S)[:, :, 1:, :]
    attn = (q @ k_t + srel) / math.sqrt(d_head)
    mask = jnp.tril(jnp.ones((S, S), jnp.float32))
    attn = jnp.where(mask == 0, -jnp.inf, attn)
    attn = jax.nn.softmax(attn, axis=-1)
    out = attn @ v
    return out.transpose(0, 2, 1, 3).reshape(B, S, D)


if __name__ == "__main__":
    # Small but TPU-aligned shapes: batch=2, seq=128, d_model=128, heads=4 (d_head=32).
    B, S, D, H, MAX_LEN = 2, 128, 128, 4, 256
    d_head = D // H

    key = jax.random.PRNGKey(0)
    ks = jax.random.split(key, 8)
    params = {
        "wq": jax.random.normal(ks[0], (D, D), jnp.float32) * 0.03,
        "bq": jax.random.normal(ks[1], (D,), jnp.float32) * 0.02,
        "wk": jax.random.normal(ks[2], (D, D), jnp.float32) * 0.03,
        "bk": jax.random.normal(ks[3], (D,), jnp.float32) * 0.02,
        "wv": jax.random.normal(ks[4], (D, D), jnp.float32) * 0.03,
        "bv": jax.random.normal(ks[5], (D,), jnp.float32) * 0.02,
        "er": jax.random.normal(ks[6], (MAX_LEN, d_head), jnp.float32) * 0.5,
    }
    x = jax.random.normal(ks[7], (B, S, D), jnp.float32)

    out = relative_global_attention(x, params, num_heads=H, max_len=MAX_LEN)
    out = jax.block_until_ready(out)

    ref = _reference(x, params, num_heads=H, max_len=MAX_LEN)
    assert out.shape == (B, S, D)
    max_err = float(jnp.max(jnp.abs(out - ref)))
    # bf16 MXU operands with f32 accumulation -> loosened tolerance vs. the f32 reference.
    assert jnp.allclose(out, ref, atol=2e-2, rtol=2e-2), f"mismatch vs reference (max abs err {max_err})"
    print("KERNEL_OK")
</pallas_src>

<mosaic_0001>
module attributes {stable_mosaic.version = 11 : i64} {
  func.func @_rga_fused_kernel(%arg0: i32, %arg1: memref<1x128x128xbf16, #tpu.memory_space<vmem>>, %arg2: memref<128x384xbf16, #tpu.memory_space<vmem>>, %arg3: memref<1x384xf32, #tpu.memory_space<vmem>>, %arg4: memref<128x32xbf16, #tpu.memory_space<vmem>>, %arg5: memref<1x128x128xf32, #tpu.memory_space<vmem>>) attributes {dimension_semantics = [#tpu.dimension_semantics<parallel>], iteration_bounds = array<i64: 2>, scalar_prefetch = 0 : i64, scratch_operands = 0 : i64, tpu.core_type = #tpu.core_type<tc>, window_params = [{transform_indices = @transform_0, window_bounds = array<i64: 1, 128, 128>}, {pipeline_mode = #tpu.pipeline_mode<synchronous>, transform_indices = @transform_1, window_bounds = array<i64: 128, 384>}, {pipeline_mode = #tpu.pipeline_mode<synchronous>, transform_indices = @transform_2, window_bounds = array<i64: 1, 384>}, {pipeline_mode = #tpu.pipeline_mode<synchronous>, transform_indices = @transform_3, window_bounds = array<i64: 128, 32>}, {transform_indices = @transform_4, window_bounds = array<i64: 1, 128, 128>}]} {
    %c0 = arith.constant 0 : index
    %c0_0 = arith.constant 0 : index
    %c0_1 = arith.constant 0 : index
    %0 = vector.load %arg1[%c0, %c0_0, %c0_1] : memref<1x128x128xbf16, #tpu.memory_space<vmem>>, vector<1x128x128xbf16>
    %1 = vector.shape_cast %0 : vector<1x128x128xbf16> to vector<128x128xbf16>
    %c0_2 = arith.constant 0 : index
    %c0_3 = arith.constant 0 : index
    %2 = vector.load %arg4[%c0_2, %c0_3] : memref<128x32xbf16, #tpu.memory_space<vmem>>, vector<128x32xbf16>
    %c0_4 = arith.constant 0 : index
    %c0_5 = arith.constant 0 : index
    %3 = vector.load %arg2[%c0_4, %c0_5] : memref<128x384xbf16, #tpu.memory_space<vmem>>, vector<128x384xbf16>
    %cst = arith.constant dense<0.000000e+00> : vector<128x384xf32>
    %4 = tpu.matmul %1, %3, %cst {dimension_numbers = #tpu.dot_dimension_numbers<[1], [0], [0], [1], [0, 0, 1, 1], [], []>} : vector<128x128xbf16>, vector<128x384xbf16>, vector<128x384xf32> -> vector<128x384xf32>
    %c0_6 = arith.constant 0 : index
    %c0_7 = arith.constant 0 : index
    %5 = vector.load %arg3[%c0_6, %c0_7] : memref<1x384xf32, #tpu.memory_space<vmem>>, vector<1x384xf32>
    %6 = vector.broadcast %5 : vector<1x384xf32> to vector<128x384xf32>
    %7 = arith.addf %4, %6 : vector<128x384xf32>
    %8 = vector.extract_strided_slice %7 {offsets = [0, 0], sizes = [128, 128], strides = [1, 1]} : vector<128x384xf32> to vector<128x128xf32>
    %9 = arith.truncf %8 : vector<128x128xf32> to vector<128x128xbf16>
    %10 = vector.extract_strided_slice %7 {offsets = [0, 128], sizes = [128, 128], strides = [1, 1]} : vector<128x384xf32> to vector<128x128xf32>
    %11 = arith.truncf %10 : vector<128x128xf32> to vector<128x128xbf16>
    %12 = vector.extract_strided_slice %7 {offsets = [0, 256], sizes = [128, 128], strides = [1, 1]} : vector<128x384xf32> to vector<128x128xf32>
    %13 = arith.truncf %12 : vector<128x128xf32> to vector<128x128xbf16>
    %14 = tpu.iota {dimensions = array<i32: 0>} : vector<128x128xi32>
    %15 = tpu.iota {dimensions = array<i32: 1>} : vector<128x128xi32>
    %16 = arith.cmpi sle, %15, %14 : vector<128x128xi32>
    %cst_8 = arith.constant 0.000000e+00 : f32
    %cst_9 = arith.constant -1.000000e+30 : f32
    %17 = vector.broadcast %cst_8 : f32 to vector<128x128xf32>
    %18 = vector.broadcast %cst_9 : f32 to vector<128x128xf32>
    %19 = arith.select %16, %17, %18 : vector<128x128xi1>, vector<128x128xf32>
    %20 = vector.extract_strided_slice %9 {offsets = [0, 0], sizes = [128, 32], strides = [1, 1]} : vector<128x128xbf16> to vector<128x32xbf16>
    %21 = vector.extract_strided_slice %11 {offsets = [0, 0], sizes = [128, 32], strides = [1, 1]} : vector<128x128xbf16> to vector<128x32xbf16>
    %22 = vector.extract_strided_slice %13 {offsets = [0, 0], sizes = [128, 32], strides = [1, 1]} : vector<128x128xbf16> to vector<128x32xbf16>
    %23 = tpu.concatenate %21, %2 in 0 : vector<128x32xbf16>, vector<128x32xbf16> -> vector<256x32xbf16>
    %cst_10 = arith.constant dense<0.000000e+00> : vector<128x256xf32>
    %24 = tpu.matmul %20, %23, %cst_10 {dimension_numbers = #tpu.dot_dimension_numbers<[1], [1], [0], [0], [0, 0, 1, 0], [], []>} : vector<128x32xbf16>, vector<256x32xbf16>, vector<128x256xf32> -> vector<128x256xf32>
    %25 = vector.extract_strided_slice %24 {offsets = [0, 0], sizes = [128, 128], strides = [1, 1]} : vector<128x256xf32> to vector<128x128xf32>
    %26 = vector.extract_strided_slice %24 {offsets = [0, 128], sizes = [128, 128], strides = [1, 1]} : vector<128x256xf32> to vector<128x128xf32>
    %c1_i32 = arith.constant 1 : i32
    %27 = tpu.dynamic_rotate %26 by %c1_i32 dim 1 {stride = 1 : si32, stride_dimension = 0 : si32} : vector<128x128xf32>, i32 -> vector<128x128xf32>
    %28 = arith.addf %25, %27 : vector<128x128xf32>
    %cst_11 = arith.constant 0.176776692 : f32
    %29 = vector.broadcast %cst_11 : f32 to vector<128x128xf32>
    %30 = arith.mulf %28, %29 : vector<128x128xf32>
    %31 = arith.addf %30, %19 : vector<128x128xf32>
    %cst_12 = arith.constant dense<0xFF800000> : vector<128xf32>
    %32 = vector.multi_reduction <maximumf>, %31, %cst_12 [1] : vector<128x128xf32> to vector<128xf32>
    %33 = vector.shape_cast %32 : vector<128xf32> to vector<128x1xf32>
    %34 = vector.broadcast %33 : vector<128x1xf32> to vector<128x128xf32>
    %35 = arith.subf %31, %34 : vector<128x128xf32>
    %36 = math.exp %35 : vector<128x128xf32>
    %cst_13 = arith.constant dense<0.000000e+00> : vector<128xf32>
    %37 = vector.multi_reduction <add>, %36, %cst_13 [1] : vector<128x128xf32> to vector<128xf32>
    %38 = vector.shape_cast %37 : vector<128xf32> to vector<128x1xf32>
    %39 = vector.broadcast %38 : vector<128x1xf32> to vector<128x128xf32>
    %40 = arith.divf %36, %39 : vector<128x128xf32>
    %41 = arith.truncf %40 : vector<128x128xf32> to vector<128x128xbf16>
    %cst_14 = arith.constant dense<0.000000e+00> : vector<128x32xf32>
    %42 = tpu.matmul %41, %22, %cst_14 {dimension_numbers = #tpu.dot_dimension_numbers<[1], [0], [0], [1], [0, 0, 1, 1], [], []>} : vector<128x128xbf16>, vector<128x32xbf16>, vector<128x32xf32> -> vector<128x32xf32>
    %c0_15 = arith.constant 0 : index
    %c0_16 = arith.constant 0 : index
    %c0_17 = arith.constant 0 : index
    %43 = vector.load %arg5[%c0_15, %c0_16, %c0_17] : memref<1x128x128xf32, #tpu.memory_space<vmem>>, vector<1x128x32xf32>
    %44 = vector.shape_cast %43 : vector<1x128x32xf32> to vector<128x32xf32>
    %45 = vector.shape_cast %42 : vector<128x32xf32> to vector<1x128x32xf32>
    tpu.vector_store %arg5[%c0_15, %c0_16, %c0_17], %45 {strides = array<i32>} : memref<1x128x128xf32, #tpu.memory_space<vmem>>, vector<1x128x32xf32>,
    %46 = vector.extract_strided_slice %9 {offsets = [0, 32], sizes = [128, 32], strides = [1, 1]} : vector<128x128xbf16> to vector<128x32xbf16>
    %47 = vector.extract_strided_slice %11 {offsets = [0, 32], sizes = [128, 32], strides = [1, 1]} : vector<128x128xbf16> to vector<128x32xbf16>
    %48 = vector.extract_strided_slice %13 {offsets = [0, 32], sizes = [128, 32], strides = [1, 1]} : vector<128x128xbf16> to vector<128x32xbf16>
    %49 = tpu.concatenate %47, %2 in 0 : vector<128x32xbf16>, vector<128x32xbf16> -> vector<256x32xbf16>
    %cst_18 = arith.constant dense<0.000000e+00> : vector<128x256xf32>
    %50 = tpu.matmul %46, %49, %cst_18 {dimension_numbers = #tpu.dot_dimension_numbers<[1], [1], [0], [0], [0, 0, 1, 0], [], []>} : vector<128x32xbf16>, vector<256x32xbf16>, vector<128x256xf32> -> vector<128x256xf32>
    %51 = vector.extract_strided_slice %50 {offsets = [0, 0], sizes = [128, 128], strides = [1, 1]} : vector<128x256xf32> to vector<128x128xf32>
    %52 = vector.extract_strided_slice %50 {offsets = [0, 128], sizes = [128, 128], strides = [1, 1]} : vector<128x256xf32> to vector<128x128xf32>
    %c1_i32_19 = arith.constant 1 : i32
    %53 = tpu.dynamic_rotate %52 by %c1_i32_19 dim 1 {stride = 1 : si32, stride_dimension = 0 : si32} : vector<128x128xf32>, i32 -> vector<128x128xf32>
    %54 = arith.addf %51, %53 : vector<128x128xf32>
    %cst_20 = arith.constant 0.176776692 : f32
    %55 = vector.broadcast %cst_20 : f32 to vector<128x128xf32>
    %56 = arith.mulf %54, %55 : vector<128x128xf32>
    %57 = arith.addf %56, %19 : vector<128x128xf32>
    %cst_21 = arith.constant dense<0xFF800000> : vector<128xf32>
    %58 = vector.multi_reduction <maximumf>, %57, %cst_21 [1] : vector<128x128xf32> to vector<128xf32>
    %59 = vector.shape_cast %58 : vector<128xf32> to vector<128x1xf32>
    %60 = vector.broadcast %59 : vector<128x1xf32> to vector<128x128xf32>
    %61 = arith.subf %57, %60 : vector<128x128xf32>
    %62 = math.exp %61 : vector<128x128xf32>
    %cst_22 = arith.constant dense<0.000000e+00> : vector<128xf32>
    %63 = vector.multi_reduction <add>, %62, %cst_22 [1] : vector<128x128xf32> to vector<128xf32>
    %64 = vector.shape_cast %63 : vector<128xf32> to vector<128x1xf32>
    %65 = vector.broadcast %64 : vector<128x1xf32> to vector<128x128xf32>
    %66 = arith.divf %62, %65 : vector<128x128xf32>
    %67 = arith.truncf %66 : vector<128x128xf32> to vector<128x128xbf16>
    %cst_23 = arith.constant dense<0.000000e+00> : vector<128x32xf32>
    %68 = tpu.matmul %67, %48, %cst_23 {dimension_numbers = #tpu.dot_dimension_numbers<[1], [0], [0], [1], [0, 0, 1, 1], [], []>} : vector<128x128xbf16>, vector<128x32xbf16>, vector<128x32xf32> -> vector<128x32xf32>
    %c0_24 = arith.constant 0 : index
    %c0_25 = arith.constant 0 : index
    %c32 = arith.constant 32 : index
    %69 = vector.load %arg5[%c0_24, %c0_25, %c32] : memref<1x128x128xf32, #tpu.memory_space<vmem>>, vector<1x128x32xf32>
    %70 = vector.shape_cast %69 : vector<1x128x32xf32> to vector<128x32xf32>
    %71 = vector.shape_cast %68 : vector<128x32xf32> to vector<1x128x32xf32>
    tpu.vector_store %arg5[%c0_24, %c0_25, %c32], %71 {strides = array<i32>} : memref<1x128x128xf32, #tpu.memory_space<vmem>>, vector<1x128x32xf32>,
    %72 = vector.extract_strided_slice %9 {offsets = [0, 64], sizes = [128, 32], strides = [1, 1]} : vector<128x128xbf16> to vector<128x32xbf16>
    %73 = vector.extract_strided_slice %11 {offsets = [0, 64], sizes = [128, 32], strides = [1, 1]} : vector<128x128xbf16> to vector<128x32xbf16>
    %74 = vector.extract_strided_slice %13 {offsets = [0, 64], sizes = [128, 32], strides = [1, 1]} : vector<128x128xbf16> to vector<128x32xbf16>
    %75 = tpu.concatenate %73, %2 in 0 : vector<128x32xbf16>, vector<128x32xbf16> -> vector<256x32xbf16>
    %cst_26 = arith.constant dense<0.000000e+00> : vector<128x256xf32>
    %76 = tpu.matmul %72, %75, %cst_26 {dimension_numbers = #tpu.dot_dimension_numbers<[1], [1], [0], [0], [0, 0, 1, 0], [], []>} : vector<128x32xbf16>, vector<256x32xbf16>, vector<128x256xf32> -> vector<128x256xf32>
    %77 = vector.extract_strided_slice %76 {offsets = [0, 0], sizes = [128, 128], strides = [1, 1]} : vector<128x256xf32> to vector<128x128xf32>
    %78 = vector.extract_strided_slice %76 {offsets = [0, 128], sizes = [128, 128], strides = [1, 1]} : vector<128x256xf32> to vector<128x128xf32>
    %c1_i32_27 = arith.constant 1 : i32
    %79 = tpu.dynamic_rotate %78 by %c1_i32_27 dim 1 {stride = 1 : si32, stride_dimension = 0 : si32} : vector<128x128xf32>, i32 -> vector<128x128xf32>
    %80 = arith.addf %77, %79 : vector<128x128xf32>
    %cst_28 = arith.constant 0.176776692 : f32
    %81 = vector.broadcast %cst_28 : f32 to vector<128x128xf32>
    %82 = arith.mulf %80, %81 : vector<128x128xf32>
    %83 = arith.addf %82, %19 : vector<128x128xf32>
    %cst_29 = arith.constant dense<0xFF800000> : vector<128xf32>
    %84 = vector.multi_reduction <maximumf>, %83, %cst_29 [1] : vector<128x128xf32> to vector<128xf32>
    %85 = vector.shape_cast %84 : vector<128xf32> to vector<128x1xf32>
    %86 = vector.broadcast %85 : vector<128x1xf32> to vector<128x128xf32>
    %87 = arith.subf %83, %86 : vector<128x128xf32>
    %88 = math.exp %87 : vector<128x128xf32>
    %cst_30 = arith.constant dense<0.000000e+00> : vector<128xf32>
    %89 = vector.multi_reduction <add>, %88, %cst_30 [1] : vector<128x128xf32> to vector<128xf32>
    %90 = vector.shape_cast %89 : vector<128xf32> to vector<128x1xf32>
    %91 = vector.broadcast %90 : vector<128x1xf32> to vector<128x128xf32>
    %92 = arith.divf %88, %91 : vector<128x128xf32>
    %93 = arith.truncf %92 : vector<128x128xf32> to vector<128x128xbf16>
    %cst_31 = arith.constant dense<0.000000e+00> : vector<128x32xf32>
    %94 = tpu.matmul %93, %74, %cst_31 {dimension_numbers = #tpu.dot_dimension_numbers<[1], [0], [0], [1], [0, 0, 1, 1], [], []>} : vector<128x128xbf16>, vector<128x32xbf16>, vector<128x32xf32> -> vector<128x32xf32>
    %c0_32 = arith.constant 0 : index
    %c0_33 = arith.constant 0 : index
    %c64 = arith.constant 64 : index
    %95 = vector.load %arg5[%c0_32, %c0_33, %c64] : memref<1x128x128xf32, #tpu.memory_space<vmem>>, vector<1x128x32xf32>
    %96 = vector.shape_cast %95 : vector<1x128x32xf32> to vector<128x32xf32>
    %97 = vector.shape_cast %94 : vector<128x32xf32> to vector<1x128x32xf32>
    tpu.vector_store %arg5[%c0_32, %c0_33, %c64], %97 {strides = array<i32>} : memref<1x128x128xf32, #tpu.memory_space<vmem>>, vector<1x128x32xf32>,
    %98 = vector.extract_strided_slice %9 {offsets = [0, 96], sizes = [128, 32], strides = [1, 1]} : vector<128x128xbf16> to vector<128x32xbf16>
    %99 = vector.extract_strided_slice %11 {offsets = [0, 96], sizes = [128, 32], strides = [1, 1]} : vector<128x128xbf16> to vector<128x32xbf16>
    %100 = vector.extract_strided_slice %13 {offsets = [0, 96], sizes = [128, 32], strides = [1, 1]} : vector<128x128xbf16> to vector<128x32xbf16>
    %101 = tpu.concatenate %99, %2 in 0 : vector<128x32xbf16>, vector<128x32xbf16> -> vector<256x32xbf16>
    %cst_34 = arith.constant dense<0.000000e+00> : vector<128x256xf32>
    %102 = tpu.matmul %98, %101, %cst_34 {dimension_numbers = #tpu.dot_dimension_numbers<[1], [1], [0], [0], [0, 0, 1, 0], [], []>} : vector<128x32xbf16>, vector<256x32xbf16>, vector<128x256xf32> -> vector<128x256xf32>
    %103 = vector.extract_strided_slice %102 {offsets = [0, 0], sizes = [128, 128], strides = [1, 1]} : vector<128x256xf32> to vector<128x128xf32>
    %104 = vector.extract_strided_slice %102 {offsets = [0, 128], sizes = [128, 128], strides = [1, 1]} : vector<128x256xf32> to vector<128x128xf32>
    %c1_i32_35 = arith.constant 1 : i32
    %105 = tpu.dynamic_rotate %104 by %c1_i32_35 dim 1 {stride = 1 : si32, stride_dimension = 0 : si32} : vector<128x128xf32>, i32 -> vector<128x128xf32>
    %106 = arith.addf %103, %105 : vector<128x128xf32>
    %cst_36 = arith.constant 0.176776692 : f32
    %107 = vector.broadcast %cst_36 : f32 to vector<128x128xf32>
    %108 = arith.mulf %106, %107 : vector<128x128xf32>
    %109 = arith.addf %108, %19 : vector<128x128xf32>
    %cst_37 = arith.constant dense<0xFF800000> : vector<128xf32>
    %110 = vector.multi_reduction <maximumf>, %109, %cst_37 [1] : vector<128x128xf32> to vector<128xf32>
    %111 = vector.shape_cast %110 : vector<128xf32> to vector<128x1xf32>
    %112 = vector.broadcast %111 : vector<128x1xf32> to vector<128x128xf32>
    %113 = arith.subf %109, %112 : vector<128x128xf32>
    %114 = math.exp %113 : vector<128x128xf32>
    %cst_38 = arith.constant dense<0.000000e+00> : vector<128xf32>
    %115 = vector.multi_reduction <add>, %114, %cst_38 [1] : vector<128x128xf32> to vector<128xf32>
    %116 = vector.shape_cast %115 : vector<128xf32> to vector<128x1xf32>
    %117 = vector.broadcast %116 : vector<128x1xf32> to vector<128x128xf32>
    %118 = arith.divf %114, %117 : vector<128x128xf32>
    %119 = arith.truncf %118 : vector<128x128xf32> to vector<128x128xbf16>
    %cst_39 = arith.constant dense<0.000000e+00> : vector<128x32xf32>
    %120 = tpu.matmul %119, %100, %cst_39 {dimension_numbers = #tpu.dot_dimension_numbers<[1], [0], [0], [1], [0, 0, 1, 1], [], []>} : vector<128x128xbf16>, vector<128x32xbf16>, vector<128x32xf32> -> vector<128x32xf32>
    %c0_40 = arith.constant 0 : index
    %c0_41 = arith.constant 0 : index
    %c96 = arith.constant 96 : index
    %121 = vector.load %arg5[%c0_40, %c0_41, %c96] : memref<1x128x128xf32, #tpu.memory_space<vmem>>, vector<1x128x32xf32>
    %122 = vector.shape_cast %121 : vector<1x128x32xf32> to vector<128x32xf32>
    %123 = vector.shape_cast %120 : vector<128x32xf32> to vector<1x128x32xf32>
    tpu.vector_store %arg5[%c0_40, %c0_41, %c96], %123 {strides = array<i32>} : memref<1x128x128xf32, #tpu.memory_space<vmem>>, vector<1x128x32xf32>,
    return
  }
  func.func @transform_0(%arg0: i32) -> (i32, i32, i32) {
    %c0_i32 = arith.constant 0 : i32
    %c0_i32_0 = arith.constant 0 : i32
    %c0_i32_1 = arith.constant 0 : i32
    return %arg0, %c0_i32, %c0_i32_0 : i32, i32, i32
  }
  func.func @transform_1(%arg0: i32) -> (i32, i32) {
    %c0_i32 = arith.constant 0 : i32
    %c0_i32_0 = arith.constant 0 : i32
    %c0_i32_1 = arith.constant 0 : i32
    return %c0_i32, %c0_i32_0 : i32, i32
  }
  func.func @transform_2(%arg0: i32) -> (i32, i32) {
    %c0_i32 = arith.constant 0 : i32
    %c0_i32_0 = arith.constant 0 : i32
    %c0_i32_1 = arith.constant 0 : i32
    return %c0_i32, %c0_i32_0 : i32, i32
  }
  func.func @transform_3(%arg0: i32) -> (i32, i32) {
    %c0_i32 = arith.constant 0 : i32
    %c0_i32_0 = arith.constant 0 : i32
    %c0_i32_1 = arith.constant 0 : i32
    return %c0_i32, %c0_i32_0 : i32, i32
  }
  func.func @transform_4(%arg0: i32) -> (i32, i32, i32) {
    %c0_i32 = arith.constant 0 : i32
    %c0_i32_0 = arith.constant 0 : i32
    %c0_i32_1 = arith.constant 0 : i32
    return %arg0, %c0_i32, %c0_i32_0 : i32, i32, i32
  }
}

</mosaic_0001>

<llo_original>
// kernel: tpu_custom_call.1
$region0: #{tpu_custom_call.1}
  #allocation0 [shape = 'u32[]', space=smem, size = 0x4, offset = 0x4, fixed_abs, tag = 'smem constant byte address 0x4 - core index']
  #allocation1 [shape = 'u32[144,128]{1,0:T(1,128)}', space=vmem, size = 0x12000, scoped, tag = 'internal scratch']
  %s0 = inlined_call_operand.hbm [shape: bf16[2,128,128], index: 0, kind: input, shape index: {}]
  %s1 = inlined_call_operand.hbm [shape: bf16[128,384], index: 1, kind: input, shape index: {}]
  %s2 = inlined_call_operand.vmem [shape: f32[1,384], index: 2, kind: input, shape index: {}]
  %s3 = inlined_call_operand.vmem [shape: bf16[128,32], index: 3, kind: input, shape index: {}]
  %s4 = inlined_call_operand.hbm [shape: f32[2,128,128], index: 4, kind: output, shape index: {}]
  %s5 = sld [smem:[#allocation0]]
  $region57: #{tpu_custom_call.1} parent=0
    _
  %s7 = ssub.s32 1, %s5
  %s8 = scalar_select 0, %s7, %s5
  $region1: #{tpu_custom_call.1} parent=0
    #allocation2 [shape = 'u8[65536]{0}', space=vmem, size = 0x10000, scoped, tag = 'input window, operand 0']
    #allocation3 [shape = 's32[2]{0}', space=sflag, size = 0x8, scoped, tag = 'scoped memory for tpu_custom_call.1']
    #allocation4 [shape = 's32[2]{0}', space=sflag, size = 0x8, scoped, tag = 'scoped memory for tpu_custom_call.1']
    #allocation5 [shape = 'u8[98304]{0}', space=vmem, size = 0x18000, scoped, tag = 'input window, operand 1, single buffered']
    #allocation6 [shape = 's32[1]{0}', space=sflag, size = 0x4, scoped, tag = 'scoped memory for tpu_custom_call.1']
    #allocation7 [shape = 'u8[131072]{0}', space=vmem, size = 0x20000, scoped, tag = 'output window, operand 0']
    %9 = vsyncpa [#allocation3], 0
    %s10 = scalar_lea.sflag [#allocation3], 1
    %11 = vsyncpa %s10, 0
    %12 = vsyncpa [#allocation6], 0
    %13 = vsyncpa [#allocation4], 0
    %s14 = scalar_lea.sflag [#allocation4], 1
    %15 = vsyncpa %s14, 0
    loop: start=0, step=1, limit=4
    $region2: #{tpu_custom_call.1} parent=1 // loop_pre_header
      _
    $region3: #{tpu_custom_call.1} parent=1 // loop_header
      %s17 = sphi 0, %s21
      %p18 = scmp.ge.s32.totalorder %s17, 4
      %s27 = sphi 0, %s29
      %s30 = sphi 0, %s27
      %s31 = sphi 0, %s30
      %s47 = sphi 0, %s31
      %s51 = sphi 0, %s51
      %s53 = sphi 0, %s51
      %s54 = sphi 0, %s53
      %s68 = sphi 0, %s54
      %s72 = sphi 0, %s72
      %s74 = sphi 0, %s72
      %s75 = sphi 0, %s74
      %s89 = sphi 0, %s75
      %s93 = sphi 0, %s93
      %s95 = sphi 0, %s93
      %s96 = sphi 0, %s95
      %s110 = sphi 0, %s96
      %s116 = sphi 0, %s118
      %s119 = sphi 0, %s116
      %s120 = sphi 0, %s119
      %s136 = sphi 0, %s120
    $region4: #{tpu_custom_call.1} parent=1 // loop_header_branch
      %20 = sbr.rel (%p18) target = $region8
    $region5: #{tpu_custom_call.1} parent=1 // loop_body
      %s22 = ssub.s32 %s17, 1
      %s23 = ssub.s32 %s17, 2
      %s24 = sadd.s32 %s17, 1
      %s25 = ssub.s32 %s17, %s24
      %p26 = scmp.eq.s32.totalorder %s25, 0
      %s28 = sadd.s32 %s27, 1
      %s29 = scalar_select %p26, %s27, %s28
      %p32 = pneg %p26
      %p33 = scmp.eq.s32.totalorder %s17, 1
      %p34 = por %p32, %p33
      %p35 = scmp.ne.s32.totalorder %s27, %s30
      %p36 = scmp.eq.s32.totalorder %s17, 0
      %p37 = por %p35, %p36
      %p38 = scmp.ne.s32.totalorder %s27, %s30
      %p39 = scmp.eq.s32.totalorder %s22, 1
      %p40 = por %p38, %p39
      %p41 = scmp.ne.s32.totalorder %s30, %s31
      %p42 = scmp.eq.s32.totalorder %s22, 0
      %p43 = por %p41, %p42
      %p44 = scmp.ne.s32.totalorder %s30, %s31
      %p45 = scmp.eq.s32.totalorder %s23, 1
      %p46 = por %p44, %p45
      %p48 = scmp.ne.s32.totalorder %s31, %s47
      %p49 = scmp.eq.s32.totalorder %s23, 0
      %p50 = por %p48, %p49
      %s52 = sadd.s32 %s51, 1
      %p55 = scmp.eq.s32.totalorder %s17, 1
      %p56 = scmp.ne.s32.totalorder %s51, %s53
      %p57 = scmp.eq.s32.totalorder %s17, 0
      %p58 = por %p56, %p57
      %p59 = scmp.ne.s32.totalorder %s51, %s53
      %p60 = scmp.eq.s32.totalorder %s22, 1
      %p61 = por %p59, %p60
      %p62 = scmp.ne.s32.totalorder %s53, %s54
      %p63 = scmp.eq.s32.totalorder %s22, 0
      %p64 = por %p62, %p63
      %p65 = scmp.ne.s32.totalorder %s53, %s54
      %p66 = scmp.eq.s32.totalorder %s23, 1
      %p67 = por %p65, %p66
      %p69 = scmp.ne.s32.totalorder %s54, %s68
      %p70 = scmp.eq.s32.totalorder %s23, 0
      %p71 = por %p69, %p70
      %s73 = sadd.s32 %s72, 1
      %p76 = scmp.eq.s32.totalorder %s17, 1
      %p77 = scmp.ne.s32.totalorder %s72, %s74
      %p78 = scmp.eq.s32.totalorder %s17, 0
      %p79 = por %p77, %p78
      %p80 = scmp.ne.s32.totalorder %s72, %s74
      %p81 = scmp.eq.s32.totalorder %s22, 1
      %p82 = por %p80, %p81
      %p83 = scmp.ne.s32.totalorder %s74, %s75
      %p84 = scmp.eq.s32.totalorder %s22, 0
      %p85 = por %p83, %p84
      %p86 = scmp.ne.s32.totalorder %s74, %s75
      %p87 = scmp.eq.s32.totalorder %s23, 1
      %p88 = por %p86, %p87
      %p90 = scmp.ne.s32.totalorder %s75, %s89
      %p91 = scmp.eq.s32.totalorder %s23, 0
      %p92 = por %p90, %p91
      %s94 = sadd.s32 %s93, 1
      %p97 = scmp.eq.s32.totalorder %s17, 1
      %p98 = scmp.ne.s32.totalorder %s93, %s95
      %p99 = scmp.eq.s32.totalorder %s17, 0
      %p100 = por %p98, %p99
      %p101 = scmp.ne.s32.totalorder %s93, %s95
      %p102 = scmp.eq.s32.totalorder %s22, 1
      %p103 = por %p101, %p102
      %p104 = scmp.ne.s32.totalorder %s95, %s96
      %p105 = scmp.eq.s32.totalorder %s22, 0
      %p106 = por %p104, %p105
      %p107 = scmp.ne.s32.totalorder %s95, %s96
      %p108 = scmp.eq.s32.totalorder %s23, 1
      %p109 = por %p107, %p108
      %p111 = scmp.ne.s32.totalorder %s96, %s110
      %p112 = scmp.eq.s32.totalorder %s23, 0
      %p113 = por %p111, %p112
      %s114 = ssub.s32 %s17, %s24
      %p115 = scmp.eq.s32.totalorder %s114, 0
      %s117 = sadd.s32 %s116, 1
      %s118 = scalar_select %p115, %s116, %s117
      %p121 = pneg %p115
      %p122 = scmp.eq.s32.totalorder %s17, 1
      %p123 = por %p121, %p122
      %p124 = scmp.ne.s32.totalorder %s116, %s119
      %p125 = scmp.eq.s32.totalorder %s17, 0
      %p126 = por %p124, %p125
      %p127 = scmp.ne.s32.totalorder %s116, %s119
      %p128 = scmp.eq.s32.totalorder %s22, 1
      %p129 = por %p127, %p128
      %p130 = scmp.ne.s32.totalorder %s119, %s120
      %p131 = scmp.eq.s32.totalorder %s22, 0
      %p132 = por %p130, %p131
      %p133 = scmp.ne.s32.totalorder %s119, %s120
      %p134 = scmp.eq.s32.totalorder %s23, 1
      %p135 = por %p133, %p134
      %p137 = scmp.ne.s32.totalorder %s120, %s136
      %p138 = scmp.eq.s32.totalorder %s23, 0
      %p139 = por %p137, %p138
      %p140 = scmp.le.s32.totalorder 1, %s17
      %p141 = scmp.lt.s32.totalorder %s17, 3
      %p142 = pnand %p140, %p141
      %p143 = pneg %p142
      // Predicated region
      $region9: #{tpu_custom_call.1} parent=5 // pred_check
        _
      $region10: #{tpu_custom_call.1} parent=5 // pred_check_branch
        %145 = sbr.rel (%p142) target = $region12
      $region11: #{tpu_custom_call.1} parent=5 // pred_region
        %s146 = ssub.s32 %s17, 1
        // Predicated region
        $region13: #{tpu_custom_call.1} parent=11 // pred_check
          %p147 = pneg %p64
        $region14: #{tpu_custom_call.1} parent=11 // pred_check_branch
          %149 = sbr.rel (%p147) target = $region16
        $region15: #{tpu_custom_call.1} parent=11 // pred_region
          %s151 = ssub.s32 3072, 3072
          %152 = vsyncadd [#allocation6], %s151
          %s153 = sshll.u32 [#allocation5], 4
          %s154 = int_to_ptr.vmem [resolvable:$true] %s153
          %159 = dma.hbm_to_vmem [thread:$0]  %s1, 3072, %s154, [#allocation6], 192, 192, 12
        $region16: #{tpu_custom_call.1} parent=11 // pred_fallthru
          _
        // Predicated region
        $region17: #{tpu_custom_call.1} parent=11 // pred_check
          %p160 = pneg %p85
        $region18: #{tpu_custom_call.1} parent=11 // pred_check_branch
          %162 = sbr.rel (%p160) target = $region20
        $region19: #{tpu_custom_call.1} parent=11 // pred_region
          _
        $region20: #{tpu_custom_call.1} parent=11 // pred_fallthru
          _
        // Predicated region
        $region21: #{tpu_custom_call.1} parent=11 // pred_check
          %p163 = pneg %p106
        $region22: #{tpu_custom_call.1} parent=11 // pred_check_branch
          %165 = sbr.rel (%p163) target = $region24
        $region23: #{tpu_custom_call.1} parent=11 // pred_region
          _
        $region24: #{tpu_custom_call.1} parent=11 // pred_fallthru
          _
      $region12: #{tpu_custom_call.1} parent=5 // pred_fallthru
        _
      %p166 = scmp.lt.s32.totalorder %s17, 2
      // Predicated region
      $region25: #{tpu_custom_call.1} parent=5 // pred_check
        %p167 = pneg %p166
      $region26: #{tpu_custom_call.1} parent=5 // pred_check_branch
        %169 = sbr.rel (%p167) target = $region28
      $region27: #{tpu_custom_call.1} parent=5 // pred_region
        // Predicated region
        $region29: #{tpu_custom_call.1} parent=27 // pred_check
          %p170 = pneg %p37
        $region30: #{tpu_custom_call.1} parent=27 // pred_check_branch
          %172 = sbr.rel (%p170) target = $region32
        $region31: #{tpu_custom_call.1} parent=27 // pred_region
          %s173 = sand.u32 %s27, 1
          %s174 = scalar_lea.sflag [#allocation3], %s173
          %s175 = sand.u32 %s27, 1
          %s176 = smul.addr %s175, 64
          %s177 = scalar_lea.vmem [#allocation2], %s176
          %s179 = ssub.s32 1024, 1024
          %180 = vsyncadd %s174, %s179
          %s181 = smul.addr %s17, 16
          %s182 = smul.addr %s181, 64
          %s183 = scalar_lea.hbm %s0, %s182
          %s184 = sshll.u32 %s177, 4
          %s185 = int_to_ptr.vmem [resolvable:$true] %s184
          %190 = dma.hbm_to_vmem [thread:$0]  %s183, 1024, %s185, %s174, 64, 64, 4
        $region32: #{tpu_custom_call.1} parent=27 // pred_fallthru
          _
      $region28: #{tpu_custom_call.1} parent=5 // pred_fallthru
        _
      %p191 = scmp.le.s32.totalorder 1, %s17
      %p192 = scmp.lt.s32.totalorder %s17, 3
      %p193 = pnand %p191, %p192
      %p194 = pneg %p193
      // Predicated region
      $region33: #{tpu_custom_call.1} parent=5 // pred_check
        _
      $region34: #{tpu_custom_call.1} parent=5 // pred_check_branch
        %196 = sbr.rel (%p193) target = $region36
      $region35: #{tpu_custom_call.1} parent=5 // pred_region
        %s197 = ssub.s32 %s17, 1
        %s198 = sand.u32 %s30, 1
        %s199 = scalar_lea.sflag [#allocation3], %s198
        %s200 = sand.u32 %s30, 1
        %s201 = smul.addr %s200, 64
        %s202 = scalar_lea.vmem [#allocation2], %s201
        // Predicated region
        $region37: #{tpu_custom_call.1} parent=35 // pred_check
          %p203 = pneg %p43
        $region38: #{tpu_custom_call.1} parent=35 // pred_check_branch
          %205 = sbr.rel (%p203) target = $region40
        $region39: #{tpu_custom_call.1} parent=35 // pred_region
          %206 = dma.done %s199, 1024
        $region40: #{tpu_custom_call.1} parent=35 // pred_fallthru
          _
        // Predicated region
        $region41: #{tpu_custom_call.1} parent=35 // pred_check
          %p207 = pneg %p64
        $region42: #{tpu_custom_call.1} parent=35 // pred_check_branch
          %209 = sbr.rel (%p207) target = $region44
        $region43: #{tpu_custom_call.1} parent=35 // pred_region
          %210 = dma.done [#allocation6], 3072
        $region44: #{tpu_custom_call.1} parent=35 // pred_fallthru
          _
        %s211 = sand.u32 %s30, 1
        %s212 = scalar_lea.sflag [#allocation3], %s211
        %s213 = sand.u32 %s30, 1
        %s214 = smul.addr %s213, 64
        %s215 = scalar_lea.vmem [#allocation2], %s214
        %p216 = pneg %p43
        %p217 = pneg %p40
        %p218 = pneg %p64
        %p219 = pneg %p61
        %p220 = pneg %p85
        %p221 = pneg %p82
        %p222 = pneg %p106
        %p223 = pneg %p103
        %p224 = pneg %p132
        %p225 = pneg %p129
        %s226 = sand.u32 %s119, 1
        %s227 = scalar_lea.sflag [#allocation4], %s226
        %s228 = sand.u32 %s119, 1
        %s229 = smul.addr %s228, 128
        %s230 = scalar_lea.vmem [#allocation7], %s229
        %v232 = vld [vmem:[%s202] sm:$0xf]
        %v233 = vld [vmem:[%s202 + $0x4] sm:$0xf]
        %v234 = vld [vmem:[%s202 + $0x8] sm:$0xf]
        %v235 = vld [vmem:[%s202 + $0xc] sm:$0xf]
        %v236 = vld [vmem:[%s202 + $0x10] sm:$0xf]
        %v237 = vld [vmem:[%s202 + $0x14] sm:$0xf]
        %v238 = vld [vmem:[%s202 + $0x18] sm:$0xf]
        %v239 = vld [vmem:[%s202 + $0x1c] sm:$0xf]
        %v240 = vld [vmem:[%s202 + $0x20] sm:$0xf]
        %v241 = vld [vmem:[%s202 + $0x24] sm:$0xf]
        %v242 = vld [vmem:[%s202 + $0x28] sm:$0xf]
        %v243 = vld [vmem:[%s202 + $0x2c] sm:$0xf]
        %v244 = vld [vmem:[%s202 + $0x30] sm:$0xf]
        %v245 = vld [vmem:[%s202 + $0x34] sm:$0xf]
        %v246 = vld [vmem:[%s202 + $0x38] sm:$0xf]
        %v247 = vld [vmem:[%s202 + $0x3c] sm:$0xf]
        %v248 = vld [vmem:[%s3] sm:$0xf]
        %v249 = vld [vmem:[%s3 + $0x4] sm:$0xf]
        %v250 = vld [vmem:[%s3 + $0x8] sm:$0xf]
        %v251 = vld [vmem:[%s3 + $0xc] sm:$0xf]
        %v252 = vld [vmem:[%s3 + $0x10] sm:$0xf]
        %v253 = vld [vmem:[%s3 + $0x14] sm:$0xf]
        %v254 = vld [vmem:[%s3 + $0x18] sm:$0xf]
        %v255 = vld [vmem:[%s3 + $0x1c] sm:$0xf]
        %v256 = vld [vmem:[%s3 + $0x20] sm:$0xf]
        %v257 = vld [vmem:[%s3 + $0x24] sm:$0xf]
        %v258 = vld [vmem:[%s3 + $0x28] sm:$0xf]
        %v259 = vld [vmem:[%s3 + $0x2c] sm:$0xf]
        %v260 = vld [vmem:[%s3 + $0x30] sm:$0xf]
        %v261 = vld [vmem:[%s3 + $0x34] sm:$0xf]
        %v262 = vld [vmem:[%s3 + $0x38] sm:$0xf]
        %v263 = vld [vmem:[%s3 + $0x3c] sm:$0xf]
        %v264 = vld [vmem:[#allocation5] sm:$0xff]
        %v265 = vld [vmem:[#allocation5 + $0x8] sm:$0xf]
        %v266 = vld [vmem:[#allocation5 + $0xc] sm:$0xff]
        %v267 = vld [vmem:[#allocation5 + $0x14] sm:$0xf]
        %v268 = vld [vmem:[#allocation5 + $0x18] sm:$0xff]
        %v269 = vld [vmem:[#allocation5 + $0x20] sm:$0xf]
        %v270 = vld [vmem:[#allocation5 + $0x24] sm:$0xff]
        %v271 = vld [vmem:[#allocation5 + $0x2c] sm:$0xf]
        %v272 = vld [vmem:[#allocation5 + $0x30] sm:$0xff]
        %v273 = vld [vmem:[#allocation5 + $0x38] sm:$0xf]
        %v274 = vld [vmem:[#allocation5 + $0x3c] sm:$0xff]
        %v275 = vld [vmem:[#allocation5 + $0x44] sm:$0xf]
        %v276 = vld [vmem:[#allocation5 + $0x48] sm:$0xff]
        %v277 = vld [vmem:[#allocation5 + $0x50] sm:$0xf]
        %v278 = vld [vmem:[#allocation5 + $0x54] sm:$0xff]
        %v279 = vld [vmem:[#allocation5 + $0x5c] sm:$0xf]
        %v280 = vld [vmem:[#allocation5 + $0x60] sm:$0xff]
        %v281 = vld [vmem:[#allocation5 + $0x68] sm:$0xf]
        %v282 = vld [vmem:[#allocation5 + $0x6c] sm:$0xff]
        %v283 = vld [vmem:[#allocation5 + $0x74] sm:$0xf]
        %v284 = vld [vmem:[#allocation5 + $0x78] sm:$0xff]
        %v285 = vld [vmem:[#allocation5 + $0x80] sm:$0xf]
        %v286 = vld [vmem:[#allocation5 + $0x84] sm:$0xff]
        %v287 = vld [vmem:[#allocation5 + $0x8c] sm:$0xf]
        %v288 = vld [vmem:[#allocation5 + $0x90] sm:$0xff]
        %v289 = vld [vmem:[#allocation5 + $0x98] sm:$0xf]
        %v290 = vld [vmem:[#allocation5 + $0x9c] sm:$0xff]
        %v291 = vld [vmem:[#allocation5 + $0xa4] sm:$0xf]
        %v292 = vld [vmem:[#allocation5 + $0xa8] sm:$0xff]
        %v293 = vld [vmem:[#allocation5 + $0xb0] sm:$0xf]
        %v294 = vld [vmem:[#allocation5 + $0xb4] sm:$0xff]
        %v295 = vld [vmem:[#allocation5 + $0xbc] sm:$0xf]
        %v296 = vld [vmem:[%s2] sm:$0x7]
        %v298 = vlaneseq
        %v299 = vshrl.u32 %v298, 7
        %v300 = vsub.s32 0, %v299
        %v301 = vrot.slane %v296, %v300
        %v302 = vlaneseq
        %v303 = vshrl.u32 %v302, 7
        %v304 = vsub.s32 1, %v303
        %v305 = vrot.slane %v296, %v304
        %v306 = vlaneseq
        %v307 = vshrl.u32 %v306, 7
        %v308 = vsub.s32 2, %v307
        %v309 = vrot.slane %v296, %v308
        %v329 = vunpack.c.l.b16 %v232
        %v330 = vunpack.c.l.b16 %v233
        %v331 = vunpack.c.l.b16 %v234
        %v332 = vunpack.c.l.b16 %v235
        %v333 = vunpack.c.l.b16 %v236
        %v334 = vunpack.c.l.b16 %v237
        %v335 = vunpack.c.l.b16 %v238
        %v336 = vunpack.c.l.b16 %v239
        %v337 = vunpack.c.l.b16 %v240
        %v338 = vunpack.c.l.b16 %v241
        %v339 = vunpack.c.l.b16 %v242
        %v340 = vunpack.c.l.b16 %v243
        %v341 = vunpack.c.l.b16 %v244
        %v342 = vunpack.c.l.b16 %v245
        %v343 = vunpack.c.l.b16 %v246
        %v344 = vunpack.c.l.b16 %v247
        %v345 = vpack.c.b16 %v330, %v329
        %v346 = vpack.c.b16 %v332, %v331
        %v347 = vpack.c.b16 %v334, %v333
        %v348 = vpack.c.b16 %v336, %v335
        %v349 = vpack.c.b16 %v338, %v337
        %v350 = vpack.c.b16 %v340, %v339
        %v351 = vpack.c.b16 %v342, %v341
        %v352 = vpack.c.b16 %v344, %v343
        %v393 = vunpack.c.l.b16 %v264
        %v394 = vunpack.c.h.b16 %v264
        %v395 = vunpack.c.l.b16 %v265
        %v396 = vunpack.c.l.b16 %v266
        %v397 = vunpack.c.h.b16 %v266
        %v398 = vunpack.c.l.b16 %v267
        %v399 = vunpack.c.l.b16 %v268
        %v400 = vunpack.c.h.b16 %v268
        %v401 = vunpack.c.l.b16 %v269
        %v402 = vunpack.c.l.b16 %v270
        %v403 = vunpack.c.h.b16 %v270
        %v404 = vunpack.c.l.b16 %v271
        %v405 = vunpack.c.l.b16 %v272
        %v406 = vunpack.c.h.b16 %v272
        %v407 = vunpack.c.l.b16 %v273
        %v408 = vunpack.c.l.b16 %v274
        %v409 = vunpack.c.h.b16 %v274
        %v410 = vunpack.c.l.b16 %v275
        %v411 = vunpack.c.l.b16 %v276
        %v412 = vunpack.c.h.b16 %v276
        %v413 = vunpack.c.l.b16 %v277
        %v414 = vunpack.c.l.b16 %v278
        %v415 = vunpack.c.h.b16 %v278
        %v416 = vunpack.c.l.b16 %v279
        %v417 = vunpack.c.l.b16 %v280
        %v418 = vunpack.c.h.b16 %v280
        %v419 = vunpack.c.l.b16 %v281
        %v420 = vunpack.c.l.b16 %v282
        %v421 = vunpack.c.h.b16 %v282
        %v422 = vunpack.c.l.b16 %v283
        %v423 = vunpack.c.l.b16 %v284
        %v424 = vunpack.c.h.b16 %v284
        %v425 = vunpack.c.l.b16 %v285
        %v426 = vunpack.c.l.b16 %v286
        %v427 = vunpack.c.h.b16 %v286
        %v428 = vunpack.c.l.b16 %v287
        %v429 = vunpack.c.l.b16 %v288
        %v430 = vunpack.c.h.b16 %v288
        %v431 = vunpack.c.l.b16 %v289
        %v432 = vunpack.c.l.b16 %v290
        %v433 = vunpack.c.h.b16 %v290
        %v434 = vunpack.c.l.b16 %v291
        %v435 = vunpack.c.l.b16 %v292
        %v436 = vunpack.c.h.b16 %v292
        %v437 = vunpack.c.l.b16 %v293
        %v438 = vunpack.c.l.b16 %v294
        %v439 = vunpack.c.h.b16 %v294
        %v440 = vunpack.c.l.b16 %v295
        %v441 = vpack.c.b16 %v396, %v393
        %v442 = vpack.c.b16 %v397, %v394
        %v443 = vpack.c.b16 %v398, %v395
        %v444 = vpack.c.b16 %v402, %v399
        %v445 = vpack.c.b16 %v403, %v400
        %v446 = vpack.c.b16 %v404, %v401
        %v447 = vpack.c.b16 %v408, %v405
        %v448 = vpack.c.b16 %v409, %v406
        %v449 = vpack.c.b16 %v410, %v407
        %v450 = vpack.c.b16 %v414, %v411
        %v451 = vpack.c.b16 %v415, %v412
        %v452 = vpack.c.b16 %v416, %v413
        %v453 = vpack.c.b16 %v420, %v417
        %v454 = vpack.c.b16 %v421, %v418
        %v455 = vpack.c.b16 %v422, %v419
        %v456 = vpack.c.b16 %v426, %v423
        %v457 = vpack.c.b16 %v427, %v424
        %v458 = vpack.c.b16 %v428, %v425
        %v459 = vpack.c.b16 %v432, %v429
        %v460 = vpack.c.b16 %v433, %v430
        %v461 = vpack.c.b16 %v434, %v431
        %v462 = vpack.c.b16 %v438, %v435
        %v463 = vpack.c.b16 %v439, %v436
        %v464 = vpack.c.b16 %v440, %v437
        %489 = vmatprep.subr.bf16.mxu0 %v442
        %490 = vmatpush1.bf16.msra.mxu0 %v441
        %491 = vmatprep.subr.bf16.mxu0 %v445
        %492 = vmatpush1.bf16.msra.mxu0 %v444
        %493 = vmatprep.subr.bf16.mxu0 %v448
        %494 = vmatpush1.bf16.msra.mxu0 %v447
        %495 = vmatprep.subr.bf16.mxu0 %v451
        %496 = vmatpush1.bf16.msra.mxu0 %v450
        %497 = vmatprep.subr.bf16.mxu0 %v454
        %498 = vmatpush1.bf16.msra.mxu0 %v453
        %499 = vmatprep.subr.bf16.mxu0 %v457
        %500 = vmatpush1.bf16.msra.mxu0 %v456
        %501 = vmatprep.subr.bf16.mxu0 %v460
        %502 = vmatpush1.bf16.msra.mxu0 %v459
        %503 = vmatprep.subr.bf16.mxu0 %v463
        %504 = vmatpush1.bf16.msra.mxu0 %v462
        %505 = vmatprep.subr.bf16.mxu0 0
        %506 = vmatpush1.bf16.msra.mxu0 0
        %507 = vmatprep.subr.bf16.mxu0 0
        %508 = vmatpush1.bf16.msra.mxu0 0
        %509 = vmatprep.subr.bf16.mxu0 0
        %510 = vmatpush1.bf16.msra.mxu0 0
        %511 = vmatprep.subr.bf16.mxu0 0
        %512 = vmatpush1.bf16.msra.mxu0 0
        %513 = vmatprep.subr.bf16.mxu0 0
        %514 = vmatpush1.bf16.msra.mxu0 0
        %515 = vmatprep.subr.bf16.mxu0 0
        %516 = vmatpush1.bf16.msra.mxu0 0
        %517 = vmatprep.subr.bf16.mxu0 0
        %518 = vmatpush1.bf16.msra.mxu0 0
        %519 = vmatprep.subr.bf16.mxu0 0
        %520 = vmatpush1.bf16.msra.mxu0 0
        %521 = vmatprep.mubr.bf16.mxu0 0
        %522 = vmatmul.mubr.bf16.gmra.mrb[0].mxu0 %v345
        %v523 = vpop.f32.mrb[0].mxu0
        %v524 = vadd.f32 %v301, %v523
        %v525 = vpop.f32.mrb[0].mxu0
        %v526 = vadd.f32 %v305, %v525
        %v527 = vpop.f32.mrb[0].mxu0
        %v528 = vadd.f32 %v301, %v527
        %v529 = vpop.f32.mrb[0].mxu0
        %v530 = vadd.f32 %v305, %v529
        %531 = vmatprep.mubr.bf16.mxu0 0
        %532 = vmatmul.mubr.bf16.gmra.mrb[0].mxu0 %v346
        %v533 = vpop.f32.mrb[0].mxu0
        %v534 = vadd.f32 %v301, %v533
        %v535 = vpop.f32.mrb[0].mxu0
        %v536 = vadd.f32 %v305, %v535
        %v537 = vpop.f32.mrb[0].mxu0
        %v538 = vadd.f32 %v301, %v537
        %v539 = vpop.f32.mrb[0].mxu0
        %v540 = vadd.f32 %v305, %v539
        %541 = vmatprep.mubr.bf16.mxu0 0
        %542 = vmatmul.mubr.bf16.gmra.mrb[0].mxu0 %v347
        %v543 = vpop.f32.mrb[0].mxu0
        %v544 = vadd.f32 %v301, %v543
        %v545 = vpop.f32.mrb[0].mxu0
        %v546 = vadd.f32 %v305, %v545
        %v547 = vpop.f32.mrb[0].mxu0
        %v548 = vadd.f32 %v301, %v547
        %v549 = vpop.f32.mrb[0].mxu0
        %v550 = vadd.f32 %v305, %v549
        %551 = vmatprep.mubr.bf16.mxu0 0
        %552 = vmatmul.mubr.bf16.gmra.mrb[0].mxu0 %v348
        %v553 = vpop.f32.mrb[0].mxu0
        %v554 = vadd.f32 %v301, %v553
        %v555 = vpop.f32.mrb[0].mxu0
        %v556 = vadd.f32 %v305, %v555
        %v557 = vpop.f32.mrb[0].mxu0
        %v558 = vadd.f32 %v301, %v557
        %v559 = vpop.f32.mrb[0].mxu0
        %v560 = vadd.f32 %v305, %v559
        %561 = vmatprep.mubr.bf16.mxu0 0
        %562 = vmatmul.mubr.bf16.gmra.mrb[0].mxu0 %v349
        %v563 = vpop.f32.mrb[0].mxu0
        %v564 = vadd.f32 %v301, %v563
        %v565 = vpop.f32.mrb[0].mxu0
        %v566 = vadd.f32 %v305, %v565
        %v567 = vpop.f32.mrb[0].mxu0
        %v568 = vadd.f32 %v301, %v567
        %v569 = vpop.f32.mrb[0].mxu0
        %v570 = vadd.f32 %v305, %v569
        %571 = vmatprep.mubr.bf16.mxu0 0
        %572 = vmatmul.mubr.bf16.gmra.mrb[0].mxu0 %v350
        %v573 = vpop.f32.mrb[0].mxu0
        %v574 = vadd.f32 %v301, %v573
        %v575 = vpop.f32.mrb[0].mxu0
        %v576 = vadd.f32 %v305, %v575
        %v577 = vpop.f32.mrb[0].mxu0
        %v578 = vadd.f32 %v301, %v577
        %v579 = vpop.f32.mrb[0].mxu0
        %v580 = vadd.f32 %v305, %v579
        %581 = vmatprep.mubr.bf16.mxu0 0
        %582 = vmatmul.mubr.bf16.gmra.mrb[0].mxu0 %v351
        %v583 = vpop.f32.mrb[0].mxu0
        %v584 = vadd.f32 %v301, %v583
        %v585 = vpop.f32.mrb[0].mxu0
        %v586 = vadd.f32 %v305, %v585
        %v587 = vpop.f32.mrb[0].mxu0
        %v588 = vadd.f32 %v301, %v587
        %v589 = vpop.f32.mrb[0].mxu0
        %v590 = vadd.f32 %v305, %v589
        %591 = vmatprep.mubr.bf16.mxu0 0
        %592 = vmatmul.mubr.bf16.gmra.mrb[0].mxu0 %v352
        %v593 = vpop.f32.mrb[0].mxu0
        %v594 = vadd.f32 %v301, %v593
        %v595 = vpop.f32.mrb[0].mxu0
        %v596 = vadd.f32 %v305, %v595
        %v597 = vpop.f32.mrb[0].mxu0
        %v598 = vadd.f32 %v301, %v597
        %v599 = vpop.f32.mrb[0].mxu0
        %v600 = vadd.f32 %v305, %v599
        %601 = vdwg.mxu0
        %602 = vmatprep.subr.bf16.mxu0 0
        %603 = vmatpush1.bf16.msra.mxu0 %v443
        %604 = vmatprep.subr.bf16.mxu0 0
        %605 = vmatpush1.bf16.msra.mxu0 %v446
        %606 = vmatprep.subr.bf16.mxu0 0
        %607 = vmatpush1.bf16.msra.mxu0 %v449
        %608 = vmatprep.subr.bf16.mxu0 0
        %609 = vmatpush1.bf16.msra.mxu0 %v452
        %610 = vmatprep.subr.bf16.mxu0 0
        %611 = vmatpush1.bf16.msra.mxu0 %v455
        %612 = vmatprep.subr.bf16.mxu0 0
        %613 = vmatpush1.bf16.msra.mxu0 %v458
        %614 = vmatprep.subr.bf16.mxu0 0
        %615 = vmatpush1.bf16.msra.mxu0 %v461
        %616 = vmatprep.subr.bf16.mxu0 0
        %617 = vmatpush1.bf16.msra.mxu0 %v464
        %618 = vmatprep.subr.bf16.mxu0 0
        %619 = vmatpush1.bf16.msra.mxu0 0
        %620 = vmatprep.subr.bf16.mxu0 0
        %621 = vmatpush1.bf16.msra.mxu0 0
        %622 = vmatprep.subr.bf16.mxu0 0
        %623 = vmatpush1.bf16.msra.mxu0 0
        %624 = vmatprep.subr.bf16.mxu0 0
        %625 = vmatpush1.bf16.msra.mxu0 0
        %626 = vmatprep.subr.bf16.mxu0 0
        %627 = vmatpush1.bf16.msra.mxu0 0
        %628 = vmatprep.subr.bf16.mxu0 0
        %629 = vmatpush1.bf16.msra.mxu0 0
        %630 = vmatprep.subr.bf16.mxu0 0
        %631 = vmatpush1.bf16.msra.mxu0 0
        %632 = vmatprep.subr.bf16.mxu0 0
        %633 = vmatpush1.bf16.msra.mxu0 0
        %634 = vmatprep.mubr.bf16.mxu0 0
        %635 = vmatmul.mubr.bf16.gmra.mrb[0].mxu0 %v345
        %v636 = vpop.f32.mrb[0].mxu0
        %v637 = vadd.f32 %v309, %v636
        %v638 = vpop.f32.mrb[0].mxu0
        %v639 = vpop.f32.mrb[0].mxu0
        %v640 = vadd.f32 %v309, %v639
        %v641 = vpop.f32.mrb[0].mxu0
        %642 = vmatprep.mubr.bf16.mxu0 0
        %643 = vmatmul.mubr.bf16.gmra.mrb[0].mxu0 %v346
        %v644 = vpop.f32.mrb[0].mxu0
        %v645 = vadd.f32 %v309, %v644
        %v646 = vpop.f32.mrb[0].mxu0
        %v647 = vpop.f32.mrb[0].mxu0
        %v648 = vadd.f32 %v309, %v647
        %v649 = vpop.f32.mrb[0].mxu0
        %650 = vmatprep.mubr.bf16.mxu0 0
        %651 = vmatmul.mubr.bf16.gmra.mrb[0].mxu0 %v347
        %v652 = vpop.f32.mrb[0].mxu0
        %v653 = vadd.f32 %v309, %v652
        %v654 = vpop.f32.mrb[0].mxu0
        %v655 = vpop.f32.mrb[0].mxu0
        %v656 = vadd.f32 %v309, %v655
        %v657 = vpop.f32.mrb[0].mxu0
        %658 = vmatprep.mubr.bf16.mxu0 0
        %659 = vmatmul.mubr.bf16.gmra.mrb[0].mxu0 %v348
        %v660 = vpop.f32.mrb[0].mxu0
        %v661 = vadd.f32 %v309, %v660
        %v662 = vpop.f32.mrb[0].mxu0
        %v663 = vpop.f32.mrb[0].mxu0
        %v664 = vadd.f32 %v309, %v663
        %v665 = vpop.f32.mrb[0].mxu0
        %666 = vmatprep.mubr.bf16.mxu0 0
        %667 = vmatmul.mubr.bf16.gmra.mrb[0].mxu0 %v349
        %v668 = vpop.f32.mrb[0].mxu0
        %v669 = vadd.f32 %v309, %v668
        %v670 = vpop.f32.mrb[0].mxu0
        %v671 = vpop.f32.mrb[0].mxu0
        %v672 = vadd.f32 %v309, %v671
        %v673 = vpop.f32.mrb[0].mxu0
        %674 = vmatprep.mubr.bf16.mxu0 0
        %675 = vmatmul.mubr.bf16.gmra.mrb[0].mxu0 %v350
        %v676 = vpop.f32.mrb[0].mxu0
        %v677 = vadd.f32 %v309, %v676
        %v678 = vpop.f32.mrb[0].mxu0
        %v679 = vpop.f32.mrb[0].mxu0
        %v680 = vadd.f32 %v309, %v679
        %v681 = vpop.f32.mrb[0].mxu0
        %682 = vmatprep.mubr.bf16.mxu0 0
        %683 = vmatmul.mubr.bf16.gmra.mrb[0].mxu0 %v351
        %v684 = vpop.f32.mrb[0].mxu0
        %v685 = vadd.f32 %v309, %v684
        %v686 = vpop.f32.mrb[0].mxu0
        %v687 = vpop.f32.mrb[0].mxu0
        %v688 = vadd.f32 %v309, %v687
        %v689 = vpop.f32.mrb[0].mxu0
        %690 = vmatprep.mubr.bf16.mxu0 0
        %691 = vmatmul.mubr.bf16.gmra.mrb[0].mxu0 %v352
        %v692 = vpop.f32.mrb[0].mxu0
        %v693 = vadd.f32 %v309, %v692
        %v694 = vpop.f32.mrb[0].mxu0
        %v695 = vpop.f32.mrb[0].mxu0
        %v696 = vadd.f32 %v309, %v695
        %v697 = vpop.f32.mrb[0].mxu0
        %698 = vdwg.mxu0
        %v699 = vpack.c.bf16 %v528, %v524
        %v700 = vpack.c.bf16 %v538, %v534
        %v701 = vpack.c.bf16 %v548, %v544
        %v702 = vpack.c.bf16 %v558, %v554
        %v703 = vpack.c.bf16 %v568, %v564
        %v704 = vpack.c.bf16 %v578, %v574
        %v705 = vpack.c.bf16 %v588, %v584
        %v706 = vpack.c.bf16 %v598, %v594
        %v707 = vpack.c.bf16 %v530, %v526
        %v708 = vpack.c.bf16 %v540, %v536
        %v709 = vpack.c.bf16 %v550, %v546
        %v710 = vpack.c.bf16 %v560, %v556
        %v711 = vpack.c.bf16 %v570, %v566
        %v712 = vpack.c.bf16 %v580, %v576
        %v713 = vpack.c.bf16 %v590, %v586
        %v714 = vpack.c.bf16 %v600, %v596
        %v715 = vpack.c.bf16 %v640, %v637
        %v716 = vpack.c.bf16 %v648, %v645
        %v717 = vpack.c.bf16 %v656, %v653
        %v718 = vpack.c.bf16 %v664, %v661
        %v719 = vpack.c.bf16 %v672, %v669
        %v720 = vpack.c.bf16 %v680, %v677
        %v721 = vpack.c.bf16 %v688, %v685
        %v722 = vpack.c.bf16 %v696, %v693
        %v723 = vlaneseq
        %v724 = vshrl.u32 %v723, 7
        %v725 = vadd.s32 %v724, 8
        %v726 = vadd.s32 %v724, 16
        %v727 = vadd.s32 %v724, 24
        %v728 = vadd.s32 %v724, 32
        %v729 = vadd.s32 %v724, 40
        %v730 = vadd.s32 %v724, 48
        %v731 = vadd.s32 %v724, 56
        %v732 = vadd.s32 %v724, 64
        %v733 = vadd.s32 %v724, 72
        %v734 = vadd.s32 %v724, 80
        %v735 = vadd.s32 %v724, 88
        %v736 = vadd.s32 %v724, 96
        %v737 = vadd.s32 %v724, 104
        %v738 = vadd.s32 %v724, 112
        %v739 = vadd.s32 %v724, 120
        %v740 = vlaneseq
        %v741 = vand.u32 %v740, 127
        %vm742 = vcmp.le.s32.totalorder %v741, %v724
        %vm743 = vcmp.le.s32.totalorder %v741, %v725
        %vm744 = vcmp.le.s32.totalorder %v741, %v726
        %vm745 = vcmp.le.s32.totalorder %v741, %v727
        %vm746 = vcmp.le.s32.totalorder %v741, %v728
        %vm747 = vcmp.le.s32.totalorder %v741, %v729
        %vm748 = vcmp.le.s32.totalorder %v741, %v730
        %vm749 = vcmp.le.s32.totalorder %v741, %v731
        %vm750 = vcmp.le.s32.totalorder %v741, %v732
        %vm751 = vcmp.le.s32.totalorder %v741, %v733
        %vm752 = vcmp.le.s32.totalorder %v741, %v734
        %vm753 = vcmp.le.s32.totalorder %v741, %v735
        %vm754 = vcmp.le.s32.totalorder %v741, %v736
        %vm755 = vcmp.le.s32.totalorder %v741, %v737
        %vm756 = vcmp.le.s32.totalorder %v741, %v738
        %vm757 = vcmp.le.s32.totalorder %v741, %v739
        %v758 = vsel %vm742, 0.0, -1e+30
        %v759 = vsel %vm743, 0.0, -1e+30
        %v760 = vsel %vm744, 0.0, -1e+30
        %v761 = vsel %vm745, 0.0, -1e+30
        %v762 = vsel %vm746, 0.0, -1e+30
        %v763 = vsel %vm747, 0.0, -1e+30
        %v764 = vsel %vm748, 0.0, -1e+30
        %v765 = vsel %vm749, 0.0, -1e+30
        %v766 = vsel %vm750, 0.0, -1e+30
        %v767 = vsel %vm751, 0.0, -1e+30
        %v768 = vsel %vm752, 0.0, -1e+30
        %v769 = vsel %vm753, 0.0, -1e+30
        %v770 = vsel %vm754, 0.0, -1e+30
        %v771 = vsel %vm755, 0.0, -1e+30
        %v772 = vsel %vm756, 0.0, -1e+30
        %v773 = vsel %vm757, 0.0, -1e+30
        %v790 = vunpack.c.l.b16 %v248
        %v791 = vunpack.c.l.b16 %v249
        %v792 = vunpack.c.l.b16 %v250
        %v793 = vunpack.c.l.b16 %v251
        %v794 = vunpack.c.l.b16 %v252
        %v795 = vunpack.c.l.b16 %v253
        %v796 = vunpack.c.l.b16 %v254
        %v797 = vunpack.c.l.b16 %v255
        %v798 = vunpack.c.l.b16 %v256
        %v799 = vunpack.c.l.b16 %v257
        %v800 = vunpack.c.l.b16 %v258
        %v801 = vunpack.c.l.b16 %v259
        %v802 = vunpack.c.l.b16 %v260
        %v803 = vunpack.c.l.b16 %v261
        %v804 = vunpack.c.l.b16 %v262
        %v805 = vunpack.c.l.b16 %v263
        %v806 = vpack.c.b16 %v791, %v790
        %v807 = vpack.c.b16 %v793, %v792
        %v808 = vpack.c.b16 %v795, %v794
        %v809 = vpack.c.b16 %v797, %v796
        %v810 = vpack.c.b16 %v799, %v798
        %v811 = vpack.c.b16 %v801, %v800
        %v812 = vpack.c.b16 %v803, %v802
        %v813 = vpack.c.b16 %v805, %v804
        %vm814 = vcmask 261120
        %v816 = vsel %vm814, %v699, 0
        %v819 = vsel %vm814, %v700, 0
        %v822 = vsel %vm814, %v701, 0
        %v825 = vsel %vm814, %v702, 0
        %v828 = vsel %vm814, %v703, 0
        %v831 = vsel %vm814, %v704, 0
        %v834 = vsel %vm814, %v705, 0
        %v837 = vsel %vm814, %v706, 0
        %v840 = vsel %vm814, %v707, 0
        %v843 = vsel %vm814, %v708, 0
        %v846 = vsel %vm814, %v709, 0
        %v849 = vsel %vm814, %v710, 0
        %v852 = vsel %vm814, %v711, 0
        %v855 = vsel %vm814, %v712, 0
        %v858 = vsel %vm814, %v713, 0
        %v861 = vsel %vm814, %v714, 0
        %v864 = vsel %vm814, %v806, 0
        %v867 = vsel %vm814, %v807, 0
        %v870 = vsel %vm814, %v808, 0
        %v873 = vsel %vm814, %v809, 0
        %v876 = vsel %vm814, %v810, 0
        %v879 = vsel %vm814, %v811, 0
        %v882 = vsel %vm814, %v812, 0
        %v885 = vsel %vm814, %v813, 0
        %887 = vmatprep.subr.bf16.mxu0 0
        %888 = vmatpush1.bf16.xpose.msra.mxu0 %v840
        %889 = vmatprep.subr.bf16.mxu0 0
        %890 = vmatpush1.bf16.xpose.msra.mxu0 %v843
        %891 = vmatprep.subr.bf16.mxu0 0
        %892 = vmatpush1.bf16.xpose.msra.mxu0 %v846
        %893 = vmatprep.subr.bf16.mxu0 0
        %894 = vmatpush1.bf16.xpose.msra.mxu0 %v849
        %895 = vmatprep.subr.bf16.mxu0 0
        %896 = vmatpush1.bf16.xpose.msra.mxu0 %v852
        %897 = vmatprep.subr.bf16.mxu0 0
        %898 = vmatpush1.bf16.xpose.msra.mxu0 %v855
        %899 = vmatprep.subr.bf16.mxu0 0
        %900 = vmatpush1.bf16.xpose.msra.mxu0 %v858
        %901 = vmatprep.subr.bf16.mxu0 0
        %902 = vmatpush1.bf16.xpose.msra.mxu0 %v861
        %903 = vmatprep.subr.bf16.mxu0 0
        %904 = vmatpush1.bf16.xpose.msra.mxu0 %v864
        %905 = vmatprep.subr.bf16.mxu0 0
        %906 = vmatpush1.bf16.xpose.msra.mxu0 %v867
        %907 = vmatprep.subr.bf16.mxu0 0
        %908 = vmatpush1.bf16.xpose.msra.mxu0 %v870
        %909 = vmatprep.subr.bf16.mxu0 0
        %910 = vmatpush1.bf16.xpose.msra.mxu0 %v873
        %911 = vmatprep.subr.bf16.mxu0 0
        %912 = vmatpush1.bf16.xpose.msra.mxu0 %v876
        %913 = vmatprep.subr.bf16.mxu0 0
        %914 = vmatpush1.bf16.xpose.msra.mxu0 %v879
        %915 = vmatprep.subr.bf16.mxu0 0
        %916 = vmatpush1.bf16.xpose.msra.mxu0 %v882
        %917 = vmatprep.subr.bf16.mxu0 0
        %918 = vmatpush1.bf16.xpose.msra.mxu0 %v885
        %919 = vmatprep.mubr.bf16.mxu0 0
        %920 = vmatmul.mubr.bf16.gmra.mrb[0].mxu0 %v816
        %v921 = vpop.f32.mrb[0].mxu0
        %v922 = vadd.f32 0.0, %v921
        %v923 = vpop.f32.mrb[0].mxu0
        %v924 = vadd.f32 0.0, %v923
        %v925 = vpop.f32.mrb[0].mxu0
        %v926 = vadd.f32 0.0, %v925
        %v927 = vpop.f32.mrb[0].mxu0
        %v928 = vadd.f32 0.0, %v927
        %929 = vmatprep.mubr.bf16.mxu0 0
        %930 = vmatmul.mubr.bf16.gmra.mrb[0].mxu0 %v819
        %v931 = vpop.f32.mrb[0].mxu0
        %v932 = vadd.f32 0.0, %v931
        %v933 = vpop.f32.mrb[0].mxu0
        %v934 = vadd.f32 0.0, %v933
        %v935 = vpop.f32.mrb[0].mxu0
        %v936 = vadd.f32 0.0, %v935
        %v937 = vpop.f32.mrb[0].mxu0
        %v938 = vadd.f32 0.0, %v937
        %939 = vmatprep.mubr.bf16.mxu0 0
        %940 = vmatmul.mubr.bf16.gmra.mrb[0].mxu0 %v822
        %v941 = vpop.f32.mrb[0].mxu0
        %v942 = vadd.f32 0.0, %v941
        %v943 = vpop.f32.mrb[0].mxu0
        %v944 = vadd.f32 0.0, %v943
        %v945 = vpop.f32.mrb[0].mxu0
        %v946 = vadd.f32 0.0, %v945
        %v947 = vpop.f32.mrb[0].mxu0
        %v948 = vadd.f32 0.0, %v947
        %949 = vmatprep.mubr.bf16.mxu0 0
        %950 = vmatmul.mubr.bf16.gmra.mrb[0].mxu0 %v825
        %v951 = vpop.f32.mrb[0].mxu0
        %v952 = vadd.f32 0.0, %v951
        %v953 = vpop.f32.mrb[0].mxu0
        %v954 = vadd.f32 0.0, %v953
        %v955 = vpop.f32.mrb[0].mxu0
        %v956 = vadd.f32 0.0, %v955
        %v957 = vpop.f32.mrb[0].mxu0
        %v958 = vadd.f32 0.0, %v957
        %959 = vmatprep.mubr.bf16.mxu0 0
        %960 = vmatmul.mubr.bf16.gmra.mrb[0].mxu0 %v828
        %v961 = vpop.f32.mrb[0].mxu0
        %v962 = vadd.f32 0.0, %v961
        %v963 = vpop.f32.mrb[0].mxu0
        %v964 = vadd.f32 0.0, %v963
        %v965 = vpop.f32.mrb[0].mxu0
        %v966 = vadd.f32 0.0, %v965
        %v967 = vpop.f32.mrb[0].mxu0
        %v968 = vadd.f32 0.0, %v967
        %969 = vmatprep.mubr.bf16.mxu0 0
        %970 = vmatmul.mubr.bf16.gmra.mrb[0].mxu0 %v831
        %v971 = vpop.f32.mrb[0].mxu0
        %v972 = vadd.f32 0.0, %v971
        %v973 = vpop.f32.mrb[0].mxu0
        %v974 = vadd.f32 0.0, %v973
        %v975 = vpop.f32.mrb[0].mxu0
        %v976 = vadd.f32 0.0, %v975
        %v977 = vpop.f32.mrb[0].mxu0
        %v978 = vadd.f32 0.0, %v977
        %979 = vmatprep.mubr.bf16.mxu0 0
        %980 = vmatmul.mubr.bf16.gmra.mrb[0].mxu0 %v834
        %v981 = vpop.f32.mrb[0].mxu0
        %v982 = vadd.f32 0.0, %v981
        %v983 = vpop.f32.mrb[0].mxu0
        %v984 = vadd.f32 0.0, %v983
        %v985 = vpop.f32.mrb[0].mxu0
        %v986 = vadd.f32 0.0, %v985
        %v987 = vpop.f32.mrb[0].mxu0
        %v988 = vadd.f32 0.0, %v987
        %989 = vmatprep.mubr.bf16.mxu0 0
        %990 = vmatmul.mubr.bf16.gmra.mrb[0].mxu0 %v837
        %v991 = vpop.f32.mrb[0].mxu0
        %v992 = vadd.f32 0.0, %v991
        %v993 = vpop.f32.mrb[0].mxu0
        %v994 = vadd.f32 0.0, %v993
        %v995 = vpop.f32.mrb[0].mxu0
        %v996 = vadd.f32 0.0, %v995
        %v997 = vpop.f32.mrb[0].mxu0
        %v998 = vadd.f32 0.0, %v997
        %999 = vdwg.mxu0
        %s1001 = sor.u32 256, 1
        %1002 = vrot.lane.b32.xlu0 %v924, %s1001
        %v1003 = vpop.permute.xlu0 %1002
        %s1005 = sor.u32 256, 9
        %1006 = vrot.lane.b32.xlu0 %v928, %s1005
        %v1007 = vpop.permute.xlu0 %1006
        %s1009 = sor.u32 256, 17
        %1010 = vrot.lane.b32.xlu0 %v934, %s1009
        %v1011 = vpop.permute.xlu0 %1010
        %s1013 = sor.u32 256, 25
        %1014 = vrot.lane.b32.xlu0 %v938, %s1013
        %v1015 = vpop.permute.xlu0 %1014
        %s1017 = sor.u32 256, 33
        %1018 = vrot.lane.b32.xlu0 %v944, %s1017
        %v1019 = vpop.permute.xlu0 %1018
        %s1021 = sor.u32 256, 41
        %1022 = vrot.lane.b32.xlu0 %v948, %s1021
        %v1023 = vpop.permute.xlu0 %1022
        %s1025 = sor.u32 256, 49
        %1026 = vrot.lane.b32.xlu0 %v954, %s1025
        %v1027 = vpop.permute.xlu0 %1026
        %s1029 = sor.u32 256, 57
        %1030 = vrot.lane.b32.xlu0 %v958, %s1029
        %v1031 = vpop.permute.xlu0 %1030
        %s1033 = sor.u32 256, 65
        %1034 = vrot.lane.b32.xlu0 %v964, %s1033
        %v1035 = vpop.permute.xlu0 %1034
        %s1037 = sor.u32 256, 73
        %1038 = vrot.lane.b32.xlu0 %v968, %s1037
        %v1039 = vpop.permute.xlu0 %1038
        %s1041 = sor.u32 256, 81
        %1042 = vrot.lane.b32.xlu0 %v974, %s1041
        %v1043 = vpop.permute.xlu0 %1042
        %s1045 = sor.u32 256, 89
        %1046 = vrot.lane.b32.xlu0 %v978, %s1045
        %v1047 = vpop.permute.xlu0 %1046
        %s1049 = sor.u32 256, 97
        %1050 = vrot.lane.b32.xlu0 %v984, %s1049
        %v1051 = vpop.permute.xlu0 %1050
        %s1053 = sor.u32 256, 105
        %1054 = vrot.lane.b32.xlu0 %v988, %s1053
        %v1055 = vpop.permute.xlu0 %1054
        %s1057 = sor.u32 256, 113
        %1058 = vrot.lane.b32.xlu0 %v994, %s1057
        %v1059 = vpop.permute.xlu0 %1058
        %s1061 = sor.u32 256, 121
        %1062 = vrot.lane.b32.xlu0 %v998, %s1061
        %v1063 = vpop.permute.xlu0 %1062
        %v1064 = vadd.f32 %v922, %v1003
        %v1065 = vadd.f32 %v926, %v1007
        %v1066 = vadd.f32 %v932, %v1011
        %v1067 = vadd.f32 %v936, %v1015
        %v1068 = vadd.f32 %v942, %v1019
        %v1069 = vadd.f32 %v946, %v1023
        %v1070 = vadd.f32 %v952, %v1027
        %v1071 = vadd.f32 %v956, %v1031
        %v1072 = vadd.f32 %v962, %v1035
        %v1073 = vadd.f32 %v966, %v1039
        %v1074 = vadd.f32 %v972, %v1043
        %v1075 = vadd.f32 %v976, %v1047
        %v1076 = vadd.f32 %v982, %v1051
        %v1077 = vadd.f32 %v986, %v1055
        %v1078 = vadd.f32 %v992, %v1059
        %v1079 = vadd.f32 %v996, %v1063
        %v1080 = vmul.f32 %v1064, 0.17677669
        %v1081 = vmul.f32 %v1065, 0.17677669
        %v1082 = vmul.f32 %v1066, 0.17677669
        %v1083 = vmul.f32 %v1067, 0.17677669
        %v1084 = vmul.f32 %v1068, 0.17677669
        %v1085 = vmul.f32 %v1069, 0.17677669
        %v1086 = vmul.f32 %v1070, 0.17677669
        %v1087 = vmul.f32 %v1071, 0.17677669
        %v1088 = vmul.f32 %v1072, 0.17677669
        %v1089 = vmul.f32 %v1073, 0.17677669
        %v1090 = vmul.f32 %v1074, 0.17677669
        %v1091 = vmul.f32 %v1075, 0.17677669
        %v1092 = vmul.f32 %v1076, 0.17677669
        %v1093 = vmul.f32 %v1077, 0.17677669
        %v1094 = vmul.f32 %v1078, 0.17677669
        %v1095 = vmul.f32 %v1079, 0.17677669
        %v1096 = vadd.f32 %v1080, %v758
        %v1097 = vadd.f32 %v1081, %v759
        %v1098 = vadd.f32 %v1082, %v760
        %v1099 = vadd.f32 %v1083, %v761
        %v1100 = vadd.f32 %v1084, %v762
        %v1101 = vadd.f32 %v1085, %v763
        %v1102 = vadd.f32 %v1086, %v764
        %v1103 = vadd.f32 %v1087, %v765
        %v1104 = vadd.f32 %v1088, %v766
        %v1105 = vadd.f32 %v1089, %v767
        %v1106 = vadd.f32 %v1090, %v768
        %v1107 = vadd.f32 %v1091, %v769
        %v1108 = vadd.f32 %v1092, %v770
        %v1109 = vadd.f32 %v1093, %v771
        %v1110 = vadd.f32 %v1094, %v772
        %v1111 = vadd.f32 %v1095, %v773
        %1112 = vmax.xlane.f32.xlu0 %v1096
        %v1113 = vpop.xlane.xlu0 %1112
        %1114 = vmax.xlane.f32.xlu0 %v1097
        %v1115 = vpop.xlane.xlu0 %1114
        %1116 = vmax.xlane.f32.xlu0 %v1098
        %v1117 = vpop.xlane.xlu0 %1116
        %1118 = vmax.xlane.f32.xlu0 %v1099
        %v1119 = vpop.xlane.xlu0 %1118
        %1120 = vmax.xlane.f32.xlu0 %v1100
        %v1121 = vpop.xlane.xlu0 %1120
        %1122 = vmax.xlane.f32.xlu0 %v1101
        %v1123 = vpop.xlane.xlu0 %1122
        %1124 = vmax.xlane.f32.xlu0 %v1102
        %v1125 = vpop.xlane.xlu0 %1124
        %1126 = vmax.xlane.f32.xlu0 %v1103
        %v1127 = vpop.xlane.xlu0 %1126
        %1128 = vmax.xlane.f32.xlu0 %v1104
        %v1129 = vpop.xlane.xlu0 %1128
        %1130 = vmax.xlane.f32.xlu0 %v1105
        %v1131 = vpop.xlane.xlu0 %1130
        %1132 = vmax.xlane.f32.xlu0 %v1106
        %v1133 = vpop.xlane.xlu0 %1132
        %1134 = vmax.xlane.f32.xlu0 %v1107
        %v1135 = vpop.xlane.xlu0 %1134
        %1136 = vmax.xlane.f32.xlu0 %v1108
        %v1137 = vpop.xlane.xlu0 %1136
        %1138 = vmax.xlane.f32.xlu0 %v1109
        %v1139 = vpop.xlane.xlu0 %1138
        %1140 = vmax.xlane.f32.xlu0 %v1110
        %v1141 = vpop.xlane.xlu0 %1140
        %1142 = vmax.xlane.f32.xlu0 %v1111
        %v1143 = vpop.xlane.xlu0 %1142
        %v1144 = vsub.f32 %v1096, %v1113
        %v1145 = vsub.f32 %v1097, %v1115
        %v1146 = vsub.f32 %v1098, %v1117
        %v1147 = vsub.f32 %v1099, %v1119
        %v1148 = vsub.f32 %v1100, %v1121
        %v1149 = vsub.f32 %v1101, %v1123
        %v1150 = vsub.f32 %v1102, %v1125
        %v1151 = vsub.f32 %v1103, %v1127
        %v1152 = vsub.f32 %v1104, %v1129
        %v1153 = vsub.f32 %v1105, %v1131
        %v1154 = vsub.f32 %v1106, %v1133
        %v1155 = vsub.f32 %v1107, %v1135
        %v1156 = vsub.f32 %v1108, %v1137
        %v1157 = vsub.f32 %v1109, %v1139
        %v1158 = vsub.f32 %v1110, %v1141
        %v1159 = vsub.f32 %v1111, %v1143
        %v1160 = vmul.f32 %v1144, 1.442695
        %v1161 = vpow.pop %v1160
        %v1162 = vmul.f32 %v1145, 1.442695
        %v1163 = vpow.pop %v1162
        %v1164 = vmul.f32 %v1146, 1.442695
        %v1165 = vpow.pop %v1164
        %v1166 = vmul.f32 %v1147, 1.442695
        %v1167 = vpow.pop %v1166
        %v1168 = vmul.f32 %v1148, 1.442695
        %v1169 = vpow.pop %v1168
        %v1170 = vmul.f32 %v1149, 1.442695
        %v1171 = vpow.pop %v1170
        %v1172 = vmul.f32 %v1150, 1.442695
        %v1173 = vpow.pop %v1172
        %v1174 = vmul.f32 %v1151, 1.442695
        %v1175 = vpow.pop %v1174
        %v1176 = vmul.f32 %v1152, 1.442695
        %v1177 = vpow.pop %v1176
        %v1178 = vmul.f32 %v1153, 1.442695
        %v1179 = vpow.pop %v1178
        %v1180 = vmul.f32 %v1154, 1.442695
        %v1181 = vpow.pop %v1180
        %v1182 = vmul.f32 %v1155, 1.442695
        %v1183 = vpow.pop %v1182
        %v1184 = vmul.f32 %v1156, 1.442695
        %v1185 = vpow.pop %v1184
        %v1186 = vmul.f32 %v1157, 1.442695
        %v1187 = vpow.pop %v1186
        %v1188 = vmul.f32 %v1158, 1.442695
        %v1189 = vpow.pop %v1188
        %v1190 = vmul.f32 %v1159, 1.442695
        %v1191 = vpow.pop %v1190
        %1192 = vadd.xlane.f32.xlu0 %v1161
        %v1193 = vpop.xlane.xlu0 %1192
        %1194 = vadd.xlane.f32.xlu0 %v1163
        %v1195 = vpop.xlane.xlu0 %1194
        %1196 = vadd.xlane.f32.xlu0 %v1165
        %v1197 = vpop.xlane.xlu0 %1196
        %1198 = vadd.xlane.f32.xlu0 %v1167
        %v1199 = vpop.xlane.xlu0 %1198
        %1200 = vadd.xlane.f32.xlu0 %v1169
        %v1201 = vpop.xlane.xlu0 %1200
        %1202 = vadd.xlane.f32.xlu0 %v1171
        %v1203 = vpop.xlane.xlu0 %1202
        %1204 = vadd.xlane.f32.xlu0 %v1173
        %v1205 = vpop.xlane.xlu0 %1204
        %1206 = vadd.xlane.f32.xlu0 %v1175
        %v1207 = vpop.xlane.xlu0 %1206
        %1208 = vadd.xlane.f32.xlu0 %v1177
        %v1209 = vpop.xlane.xlu0 %1208
        %1210 = vadd.xlane.f32.xlu0 %v1179
        %v1211 = vpop.xlane.xlu0 %1210
        %1212 = vadd.xlane.f32.xlu0 %v1181
        %v1213 = vpop.xlane.xlu0 %1212
        %1214 = vadd.xlane.f32.xlu0 %v1183
        %v1215 = vpop.xlane.xlu0 %1214
        %1216 = vadd.xlane.f32.xlu0 %v1185
        %v1217 = vpop.xlane.xlu0 %1216
        %1218 = vadd.xlane.f32.xlu0 %v1187
        %v1219 = vpop.xlane.xlu0 %1218
        %1220 = vadd.xlane.f32.xlu0 %v1189
        %v1221 = vpop.xlane.xlu0 %1220
        %1222 = vadd.xlane.f32.xlu0 %v1191
        %v1223 = vpop.xlane.xlu0 %1222
        %v1224 = vrcp.pop %v1193
        %v1225 = vmul.f32 %v1161, %v1224
        %v1226 = vrcp.pop %v1195
        %v1227 = vmul.f32 %v1163, %v1226
        %v1228 = vrcp.pop %v1197
        %v1229 = vmul.f32 %v1165, %v1228
        %v1230 = vrcp.pop %v1199
        %v1231 = vmul.f32 %v1167, %v1230
        %v1232 = vrcp.pop %v1201
        %v1233 = vmul.f32 %v1169, %v1232
        %v1234 = vrcp.pop %v1203
        %v1235 = vmul.f32 %v1171, %v1234
        %v1236 = vrcp.pop %v1205
        %v1237 = vmul.f32 %v1173, %v1236
        %v1238 = vrcp.pop %v1207
        %v1239 = vmul.f32 %v1175, %v1238
        %v1240 = vrcp.pop %v1209
        %v1241 = vmul.f32 %v1177, %v1240
        %v1242 = vrcp.pop %v1211
        %v1243 = vmul.f32 %v1179, %v1242
        %v1244 = vrcp.pop %v1213
        %v1245 = vmul.f32 %v1181, %v1244
        %v1246 = vrcp.pop %v1215
        %v1247 = vmul.f32 %v1183, %v1246
        %v1248 = vrcp.pop %v1217
        %v1249 = vmul.f32 %v1185, %v1248
        %v1250 = vrcp.pop %v1219
        %v1251 = vmul.f32 %v1187, %v1250
        %v1252 = vrcp.pop %v1221
        %v1253 = vmul.f32 %v1189, %v1252
        %v1254 = vrcp.pop %v1223
        %v1255 = vmul.f32 %v1191, %v1254
        %v1256 = vpack.c.bf16 %v1227, %v1225
        %v1257 = vpack.c.bf16 %v1231, %v1229
        %v1258 = vpack.c.bf16 %v1235, %v1233
        %v1259 = vpack.c.bf16 %v1239, %v1237
        %v1260 = vpack.c.bf16 %v1243, %v1241
        %v1261 = vpack.c.bf16 %v1247, %v1245
        %v1262 = vpack.c.bf16 %v1251, %v1249
        %v1263 = vpack.c.bf16 %v1255, %v1253
        %1264 = vmatprep.subr.bf16.mxu0 0
        %1265 = vmatpush1.bf16.msra.mxu0 %v715
        %1266 = vmatprep.subr.bf16.mxu0 0
        %1267 = vmatpush1.bf16.msra.mxu0 %v716
        %1268 = vmatprep.subr.bf16.mxu0 0
        %1269 = vmatpush1.bf16.msra.mxu0 %v717
        %1270 = vmatprep.subr.bf16.mxu0 0
        %1271 = vmatpush1.bf16.msra.mxu0 %v718
        %1272 = vmatprep.subr.bf16.mxu0 0
        %1273 = vmatpush1.bf16.msra.mxu0 %v719
        %1274 = vmatprep.subr.bf16.mxu0 0
        %1275 = vmatpush1.bf16.msra.mxu0 %v720
        %1276 = vmatprep.subr.bf16.mxu0 0
        %1277 = vmatpush1.bf16.msra.mxu0 %v721
        %1278 = vmatprep.subr.bf16.mxu0 0
        %1279 = vmatpush1.bf16.msra.mxu0 %v722
        %1280 = vmatprep.subr.bf16.mxu0 0
        %1281 = vmatpush1.bf16.msra.mxu0 0
        %1282 = vmatprep.subr.bf16.mxu0 0
        %1283 = vmatpush1.bf16.msra.mxu0 0
        %1284 = vmatprep.subr.bf16.mxu0 0
        %1285 = vmatpush1.bf16.msra.mxu0 0
        %1286 = vmatprep.subr.bf16.mxu0 0
        %1287 = vmatpush1.bf16.msra.mxu0 0
        %1288 = vmatprep.subr.bf16.mxu0 0
        %1289 = vmatpush1.bf16.msra.mxu0 0
        %1290 = vmatprep.subr.bf16.mxu0 0
        %1291 = vmatpush1.bf16.msra.mxu0 0
        %1292 = vmatprep.subr.bf16.mxu0 0
        %1293 = vmatpush1.bf16.msra.mxu0 0
        %1294 = vmatprep.subr.bf16.mxu0 0
        %1295 = vmatpush1.bf16.msra.mxu0 0
        %1296 = vmatprep.mubr.bf16.mxu0 0
        %1297 = vmatmul.mubr.bf16.gmra.mrb[0].mxu0 %v1256
        %v1298 = vpop.f32.mrb[0].mxu0
        %v1299 = vadd.f32 0.0, %v1298
        %v1300 = vpop.f32.mrb[0].mxu0
        %v1301 = vpop.f32.mrb[0].mxu0
        %v1302 = vadd.f32 0.0, %v1301
        %v1303 = vpop.f32.mrb[0].mxu0
        %1304 = vmatprep.mubr.bf16.mxu0 0
        %1305 = vmatmul.mubr.bf16.gmra.mrb[0].mxu0 %v1257
        %v1306 = vpop.f32.mrb[0].mxu0
        %v1307 = vadd.f32 0.0, %v1306
        %v1308 = vpop.f32.mrb[0].mxu0
        %v1309 = vpop.f32.mrb[0].mxu0
        %v1310 = vadd.f32 0.0, %v1309
        %v1311 = vpop.f32.mrb[0].mxu0
        %1312 = vmatprep.mubr.bf16.mxu0 0
        %1313 = vmatmul.mubr.bf16.gmra.mrb[0].mxu0 %v1258
        %v1314 = vpop.f32.mrb[0].mxu0
        %v1315 = vadd.f32 0.0, %v1314
        %v1316 = vpop.f32.mrb[0].mxu0
        %v1317 = vpop.f32.mrb[0].mxu0
        %v1318 = vadd.f32 0.0, %v1317
        %v1319 = vpop.f32.mrb[0].mxu0
        %1320 = vmatprep.mubr.bf16.mxu0 0
        %1321 = vmatmul.mubr.bf16.gmra.mrb[0].mxu0 %v1259
        %v1322 = vpop.f32.mrb[0].mxu0
        %v1323 = vadd.f32 0.0, %v1322
        %v1324 = vpop.f32.mrb[0].mxu0
        %v1325 = vpop.f32.mrb[0].mxu0
        %v1326 = vadd.f32 0.0, %v1325
        %v1327 = vpop.f32.mrb[0].mxu0
        %1328 = vmatprep.mubr.bf16.mxu0 0
        %1329 = vmatmul.mubr.bf16.gmra.mrb[0].mxu0 %v1260
        %v1330 = vpop.f32.mrb[0].mxu0
        %v1331 = vadd.f32 0.0, %v1330
        %v1332 = vpop.f32.mrb[0].mxu0
        %v1333 = vpop.f32.mrb[0].mxu0
        %v1334 = vadd.f32 0.0, %v1333
        %v1335 = vpop.f32.mrb[0].mxu0
        %1336 = vmatprep.mubr.bf16.mxu0 0
        %1337 = vmatmul.mubr.bf16.gmra.mrb[0].mxu0 %v1261
        %v1338 = vpop.f32.mrb[0].mxu0
        %v1339 = vadd.f32 0.0, %v1338
        %v1340 = vpop.f32.mrb[0].mxu0
        %v1341 = vpop.f32.mrb[0].mxu0
        %v1342 = vadd.f32 0.0, %v1341
        %v1343 = vpop.f32.mrb[0].mxu0
        %1344 = vmatprep.mubr.bf16.mxu0 0
        %1345 = vmatmul.mubr.bf16.gmra.mrb[0].mxu0 %v1262
        %v1346 = vpop.f32.mrb[0].mxu0
        %v1347 = vadd.f32 0.0, %v1346
        %v1348 = vpop.f32.mrb[0].mxu0
        %v1349 = vpop.f32.mrb[0].mxu0
        %v1350 = vadd.f32 0.0, %v1349
        %v1351 = vpop.f32.mrb[0].mxu0
        %1352 = vmatprep.mubr.bf16.mxu0 0
        %1353 = vmatmul.mubr.bf16.gmra.mrb[0].mxu0 %v1263
        %v1354 = vpop.f32.mrb[0].mxu0
        %v1355 = vadd.f32 0.0, %v1354
        %v1356 = vpop.f32.mrb[0].mxu0
        %v1357 = vpop.f32.mrb[0].mxu0
        %v1358 = vadd.f32 0.0, %v1357
        %v1359 = vpop.f32.mrb[0].mxu0
        %1360 = vdwg.mxu0
        %1361 = vst.msk [vmem:[%s230] sm:$0xff] %vm814, %v1299
        %1362 = vst.msk [vmem:[%s230 + $0x8] sm:$0xff] %vm814, %v1302
        %1363 = vst.msk [vmem:[%s230 + $0x10] sm:$0xff] %vm814, %v1307
        %1364 = vst.msk [vmem:[%s230 + $0x18] sm:$0xff] %vm814, %v1310
        %1365 = vst.msk [vmem:[%s230 + $0x20] sm:$0xff] %vm814, %v1315
        %1366 = vst.msk [vmem:[%s230 + $0x28] sm:$0xff] %vm814, %v1318
        %1367 = vst.msk [vmem:[%s230 + $0x30] sm:$0xff] %vm814, %v1323
        %1368 = vst.msk [vmem:[%s230 + $0x38] sm:$0xff] %vm814, %v1326
        %1369 = vst.msk [vmem:[%s230 + $0x40] sm:$0xff] %vm814, %v1331
        %1370 = vst.msk [vmem:[%s230 + $0x48] sm:$0xff] %vm814, %v1334
        %1371 = vst.msk [vmem:[%s230 + $0x50] sm:$0xff] %vm814, %v1339
        %1372 = vst.msk [vmem:[%s230 + $0x58] sm:$0xff] %vm814, %v1342
        %1373 = vst.msk [vmem:[%s230 + $0x60] sm:$0xff] %vm814, %v1347
        %1374 = vst.msk [vmem:[%s230 + $0x68] sm:$0xff] %vm814, %v1350
        %1375 = vst.msk [vmem:[%s230 + $0x70] sm:$0xff] %vm814, %v1355
        %1376 = vst.msk [vmem:[%s230 + $0x78] sm:$0xff] %vm814, %v1358
        %1377 = vrot.lane.b32.xlu0 %v806, 32
        %v1378 = vpop.permute.xlu0 %1377
        %1379 = vrot.lane.b32.xlu0 %v807, 32
        %v1380 = vpop.permute.xlu0 %1379
        %1381 = vrot.lane.b32.xlu0 %v808, 32
        %v1382 = vpop.permute.xlu0 %1381
        %1383 = vrot.lane.b32.xlu0 %v809, 32
        %v1384 = vpop.permute.xlu0 %1383
        %1385 = vrot.lane.b32.xlu0 %v810, 32
        %v1386 = vpop.permute.xlu0 %1385
        %1387 = vrot.lane.b32.xlu0 %v811, 32
        %v1388 = vpop.permute.xlu0 %1387
        %1389 = vrot.lane.b32.xlu0 %v812, 32
        %v1390 = vpop.permute.xlu0 %1389
        %1391 = vrot.lane.b32.xlu0 %v813, 32
        %v1392 = vpop.permute.xlu0 %1391
        %1401 = vrot.lane.b32.xlu0 %v699, 96
        %v1402 = vpop.permute.xlu0 %1401
        %1403 = vrot.lane.b32.xlu0 %v700, 96
        %v1404 = vpop.permute.xlu0 %1403
        %1405 = vrot.lane.b32.xlu0 %v701, 96
        %v1406 = vpop.permute.xlu0 %1405
        %1407 = vrot.lane.b32.xlu0 %v702, 96
        %v1408 = vpop.permute.xlu0 %1407
        %1409 = vrot.lane.b32.xlu0 %v703, 96
        %v1410 = vpop.permute.xlu0 %1409
        %1411 = vrot.lane.b32.xlu0 %v704, 96
        %v1412 = vpop.permute.xlu0 %1411
        %1413 = vrot.lane.b32.xlu0 %v705, 96
        %v1414 = vpop.permute.xlu0 %1413
        %1415 = vrot.lane.b32.xlu0 %v706, 96
        %v1416 = vpop.permute.xlu0 %1415
        %1425 = vrot.lane.b32.xlu0 %v707, 96
        %v1426 = vpop.permute.xlu0 %1425
        %1427 = vrot.lane.b32.xlu0 %v708, 96
        %v1428 = vpop.permute.xlu0 %1427
        %1429 = vrot.lane.b32.xlu0 %v709, 96
        %v1430 = vpop.permute.xlu0 %1429
        %1431 = vrot.lane.b32.xlu0 %v710, 96
        %v1432 = vpop.permute.xlu0 %1431
        %1433 = vrot.lane.b32.xlu0 %v711, 96
        %v1434 = vpop.permute.xlu0 %1433
        %1435 = vrot.lane.b32.xlu0 %v712, 96
        %v1436 = vpop.permute.xlu0 %1435
        %1437 = vrot.lane.b32.xlu0 %v713, 96
        %v1438 = vpop.permute.xlu0 %1437
        %1439 = vrot.lane.b32.xlu0 %v714, 96
        %v1440 = vpop.permute.xlu0 %1439
        %1441 = vrot.lane.b32.xlu0 %v1378, 96
        %v1442 = vpop.permute.xlu0 %1441
        %1443 = vrot.lane.b32.xlu0 %v1380, 96
        %v1444 = vpop.permute.xlu0 %1443
        %1445 = vrot.lane.b32.xlu0 %v1382, 96
        %v1446 = vpop.permute.xlu0 %1445
        %1447 = vrot.lane.b32.xlu0 %v1384, 96
        %v1448 = vpop.permute.xlu0 %1447
        %1449 = vrot.lane.b32.xlu0 %v1386, 96
        %v1450 = vpop.permute.xlu0 %1449
        %1451 = vrot.lane.b32.xlu0 %v1388, 96
        %v1452 = vpop.permute.xlu0 %1451
        %1453 = vrot.lane.b32.xlu0 %v1390, 96
        %v1454 = vpop.permute.xlu0 %1453
        %1455 = vrot.lane.b32.xlu0 %v1392, 96
        %v1456 = vpop.permute.xlu0 %1455
        %v1458 = vsel %vm814, %v1402, 0
        %v1461 = vsel %vm814, %v1404, 0
        %v1464 = vsel %vm814, %v1406, 0
        %v1467 = vsel %vm814, %v1408, 0
        %v1470 = vsel %vm814, %v1410, 0
        %v1473 = vsel %vm814, %v1412, 0
        %v1476 = vsel %vm814, %v1414, 0
        %v1479 = vsel %vm814, %v1416, 0
        %v1482 = vsel %vm814, %v1426, 0
        %v1485 = vsel %vm814, %v1428, 0
        %v1488 = vsel %vm814, %v1430, 0
        %v1491 = vsel %vm814, %v1432, 0
        %v1494 = vsel %vm814, %v1434, 0
        %v1497 = vsel %vm814, %v1436, 0
        %v1500 = vsel %vm814, %v1438, 0
        %v1503 = vsel %vm814, %v1440, 0
        %v1506 = vsel %vm814, %v1442, 0
        %v1509 = vsel %vm814, %v1444, 0
        %v1512 = vsel %vm814, %v1446, 0
        %v1515 = vsel %vm814, %v1448, 0
        %v1518 = vsel %vm814, %v1450, 0
        %v1521 = vsel %vm814, %v1452, 0
        %v1524 = vsel %vm814, %v1454, 0
        %v1527 = vsel %vm814, %v1456, 0
        %1529 = vmatprep.subr.bf16.mxu0 0
        %1530 = vmatpush1.bf16.xpose.msra.mxu0 %v1482
        %1531 = vmatprep.subr.bf16.mxu0 0
        %1532 = vmatpush1.bf16.xpose.msra.mxu0 %v1485
        %1533 = vmatprep.subr.bf16.mxu0 0
        %1534 = vmatpush1.bf16.xpose.msra.mxu0 %v1488
        %1535 = vmatprep.subr.bf16.mxu0 0
        %1536 = vmatpush1.bf16.xpose.msra.mxu0 %v1491
        %1537 = vmatprep.subr.bf16.mxu0 0
        %1538 = vmatpush1.bf16.xpose.msra.mxu0 %v1494
        %1539 = vmatprep.subr.bf16.mxu0 0
        %1540 = vmatpush1.bf16.xpose.msra.mxu0 %v1497
        %1541 = vmatprep.subr.bf16.mxu0 0
        %1542 = vmatpush1.bf16.xpose.msra.mxu0 %v1500
        %1543 = vmatprep.subr.bf16.mxu0 0
        %1544 = vmatpush1.bf16.xpose.msra.mxu0 %v1503
        %1545 = vmatprep.subr.bf16.mxu0 0
        %1546 = vmatpush1.bf16.xpose.msra.mxu0 %v1506
        %1547 = vmatprep.subr.bf16.mxu0 0
        %1548 = vmatpush1.bf16.xpose.msra.mxu0 %v1509
        %1549 = vmatprep.subr.bf16.mxu0 0
        %1550 = vmatpush1.bf16.xpose.msra.mxu0 %v1512
        %1551 = vmatprep.subr.bf16.mxu0 0
        %1552 = vmatpush1.bf16.xpose.msra.mxu0 %v1515
        %1553 = vmatprep.subr.bf16.mxu0 0
        %1554 = vmatpush1.bf16.xpose.msra.mxu0 %v1518
        %1555 = vmatprep.subr.bf16.mxu0 0
        %1556 = vmatpush1.bf16.xpose.msra.mxu0 %v1521
        %1557 = vmatprep.subr.bf16.mxu0 0
        %1558 = vmatpush1.bf16.xpose.msra.mxu0 %v1524
        %1559 = vmatprep.subr.bf16.mxu0 0
        %1560 = vmatpush1.bf16.xpose.msra.mxu0 %v1527
        %1561 = vmatprep.mubr.bf16.mxu0 0
        %1562 = vmatmul.mubr.bf16.gmra.mrb[0].mxu0 %v1458
        %v1563 = vpop.f32.mrb[0].mxu0
        %v1564 = vadd.f32 0.0, %v1563
        %v1565 = vpop.f32.mrb[0].mxu0
        %v1566 = vadd.f32 0.0, %v1565
        %v1567 = vpop.f32.mrb[0].mxu0
        %v1568 = vadd.f32 0.0, %v1567
        %v1569 = vpop.f32.mrb[0].mxu0
        %v1570 = vadd.f32 0.0, %v1569
        %1571 = vmatprep.mubr.bf16.mxu0 0
        %1572 = vmatmul.mubr.bf16.gmra.mrb[0].mxu0 %v1461
        %v1573 = vpop.f32.mrb[0].mxu0
        %v1574 = vadd.f32 0.0, %v1573
        %v1575 = vpop.f32.mrb[0].mxu0
        %v1576 = vadd.f32 0.0, %v1575
        %v1577 = vpop.f32.mrb[0].mxu0
        %v1578 = vadd.f32 0.0, %v1577
        %v1579 = vpop.f32.mrb[0].mxu0
        %v1580 = vadd.f32 0.0, %v1579
        %1581 = vmatprep.mubr.bf16.mxu0 0
        %1582 = vmatmul.mubr.bf16.gmra.mrb[0].mxu0 %v1464
        %v1583 = vpop.f32.mrb[0].mxu0
        %v1584 = vadd.f32 0.0, %v1583
        %v1585 = vpop.f32.mrb[0].mxu0
        %v1586 = vadd.f32 0.0, %v1585
        %v1587 = vpop.f32.mrb[0].mxu0
        %v1588 = vadd.f32 0.0, %v1587
        %v1589 = vpop.f32.mrb[0].mxu0
        %v1590 = vadd.f32 0.0, %v1589
        %1591 = vmatprep.mubr.bf16.mxu0 0
        %1592 = vmatmul.mubr.bf16.gmra.mrb[0].mxu0 %v1467
        %v1593 = vpop.f32.mrb[0].mxu0
        %v1594 = vadd.f32 0.0, %v1593
        %v1595 = vpop.f32.mrb[0].mxu0
        %v1596 = vadd.f32 0.0, %v1595
        %v1597 = vpop.f32.mrb[0].mxu0
        %v1598 = vadd.f32 0.0, %v1597
        %v1599 = vpop.f32.mrb[0].mxu0
        %v1600 = vadd.f32 0.0, %v1599
        %1601 = vmatprep.mubr.bf16.mxu0 0
        %1602 = vmatmul.mubr.bf16.gmra.mrb[0].mxu0 %v1470
        %v1603 = vpop.f32.mrb[0].mxu0
        %v1604 = vadd.f32 0.0, %v1603
        %v1605 = vpop.f32.mrb[0].mxu0
        %v1606 = vadd.f32 0.0, %v1605
        %v1607 = vpop.f32.mrb[0].mxu0
        %v1608 = vadd.f32 0.0, %v1607
        %v1609 = vpop.f32.mrb[0].mxu0
        %v1610 = vadd.f32 0.0, %v1609
        %1611 = vmatprep.mubr.bf16.mxu0 0
        %1612 = vmatmul.mubr.bf16.gmra.mrb[0].mxu0 %v1473
        %v1613 = vpop.f32.mrb[0].mxu0
        %v1614 = vadd.f32 0.0, %v1613
        %v1615 = vpop.f32.mrb[0].mxu0
        %v1616 = vadd.f32 0.0, %v1615
        %v1617 = vpop.f32.mrb[0].mxu0
        %v1618 = vadd.f32 0.0, %v1617
        %v1619 = vpop.f32.mrb[0].mxu0
        %v1620 = vadd.f32 0.0, %v1619
        %1621 = vmatprep.mubr.bf16.mxu0 0
        %1622 = vmatmul.mubr.bf16.gmra.mrb[0].mxu0 %v1476
        %v1623 = vpop.f32.mrb[0].mxu0
        %v1624 = vadd.f32 0.0, %v1623
        %v1625 = vpop.f32.mrb[0].mxu0
        %v1626 = vadd.f32 0.0, %v1625
        %v1627 = vpop.f32.mrb[0].mxu0
        %v1628 = vadd.f32 0.0, %v1627
        %v1629 = vpop.f32.mrb[0].mxu0
        %v1630 = vadd.f32 0.0, %v1629
        %1631 = vmatprep.mubr.bf16.mxu0 0
        %1632 = vmatmul.mubr.bf16.gmra.mrb[0].mxu0 %v1479
        %v1633 = vpop.f32.mrb[0].mxu0
        %v1634 = vadd.f32 0.0, %v1633
        %v1635 = vpop.f32.mrb[0].mxu0
        %v1636 = vadd.f32 0.0, %v1635
        %v1637 = vpop.f32.mrb[0].mxu0
        %v1638 = vadd.f32 0.0, %v1637
        %v1639 = vpop.f32.mrb[0].mxu0
        %v1640 = vadd.f32 0.0, %v1639
        %1641 = vdwg.mxu0
        %s1643 = sor.u32 256, 1
        %1644 = vrot.lane.b32.xlu0 %v1566, %s1643
        %v1645 = vpop.permute.xlu0 %1644
        %s1647 = sor.u32 256, 9
        %1648 = vrot.lane.b32.xlu0 %v1570, %s1647
        %v1649 = vpop.permute.xlu0 %1648
        %s1651 = sor.u32 256, 17
        %1652 = vrot.lane.b32.xlu0 %v1576, %s1651
        %v1653 = vpop.permute.xlu0 %1652
        %s1655 = sor.u32 256, 25
        %1656 = vrot.lane.b32.xlu0 %v1580, %s1655
        %v1657 = vpop.permute.xlu0 %1656
        %s1659 = sor.u32 256, 33
        %1660 = vrot.lane.b32.xlu0 %v1586, %s1659
        %v1661 = vpop.permute.xlu0 %1660
        %s1663 = sor.u32 256, 41
        %1664 = vrot.lane.b32.xlu0 %v1590, %s1663
        %v1665 = vpop.permute.xlu0 %1664
        %s1667 = sor.u32 256, 49
        %1668 = vrot.lane.b32.xlu0 %v1596, %s1667
        %v1669 = vpop.permute.xlu0 %1668
        %s1671 = sor.u32 256, 57
        %1672 = vrot.lane.b32.xlu0 %v1600, %s1671
        %v1673 = vpop.permute.xlu0 %1672
        %s1675 = sor.u32 256, 65
        %1676 = vrot.lane.b32.xlu0 %v1606, %s1675
        %v1677 = vpop.permute.xlu0 %1676
        %s1679 = sor.u32 256, 73
        %1680 = vrot.lane.b32.xlu0 %v1610, %s1679
        %v1681 = vpop.permute.xlu0 %1680
        %s1683 = sor.u32 256, 81
        %1684 = vrot.lane.b32.xlu0 %v1616, %s1683
        %v1685 = vpop.permute.xlu0 %1684
        %s1687 = sor.u32 256, 89
        %1688 = vrot.lane.b32.xlu0 %v1620, %s1687
        %v1689 = vpop.permute.xlu0 %1688
        %s1691 = sor.u32 256, 97
        %1692 = vrot.lane.b32.xlu0 %v1626, %s1691
        %v1693 = vpop.permute.xlu0 %1692
        %s1695 = sor.u32 256, 105
        %1696 = vrot.lane.b32.xlu0 %v1630, %s1695
        %v1697 = vpop.permute.xlu0 %1696
        %s1699 = sor.u32 256, 113
        %1700 = vrot.lane.b32.xlu0 %v1636, %s1699
        %v1701 = vpop.permute.xlu0 %1700
        %s1703 = sor.u32 256, 121
        %1704 = vrot.lane.b32.xlu0 %v1640, %s1703
        %v1705 = vpop.permute.xlu0 %1704
        %v1706 = vadd.f32 %v1564, %v1645
        %v1707 = vadd.f32 %v1568, %v1649
        %v1708 = vadd.f32 %v1574, %v1653
        %v1709 = vadd.f32 %v1578, %v1657
        %v1710 = vadd.f32 %v1584, %v1661
        %v1711 = vadd.f32 %v1588, %v1665
        %v1712 = vadd.f32 %v1594, %v1669
        %v1713 = vadd.f32 %v1598, %v1673
        %v1714 = vadd.f32 %v1604, %v1677
        %v1715 = vadd.f32 %v1608, %v1681
        %v1716 = vadd.f32 %v1614, %v1685
        %v1717 = vadd.f32 %v1618, %v1689
        %v1718 = vadd.f32 %v1624, %v1693
        %v1719 = vadd.f32 %v1628, %v1697
        %v1720 = vadd.f32 %v1634, %v1701
        %v1721 = vadd.f32 %v1638, %v1705
        %v1722 = vmul.f32 %v1706, 0.17677669
        %v1723 = vmul.f32 %v1707, 0.17677669
        %v1724 = vmul.f32 %v1708, 0.17677669
        %v1725 = vmul.f32 %v1709, 0.17677669
        %v1726 = vmul.f32 %v1710, 0.17677669
        %v1727 = vmul.f32 %v1711, 0.17677669
        %v1728 = vmul.f32 %v1712, 0.17677669
        %v1729 = vmul.f32 %v1713, 0.17677669
        %v1730 = vmul.f32 %v1714, 0.17677669
        %v1731 = vmul.f32 %v1715, 0.17677669
        %v1732 = vmul.f32 %v1716, 0.17677669
        %v1733 = vmul.f32 %v1717, 0.17677669
        %v1734 = vmul.f32 %v1718, 0.17677669
        %v1735 = vmul.f32 %v1719, 0.17677669
        %v1736 = vmul.f32 %v1720, 0.17677669
        %v1737 = vmul.f32 %v1721, 0.17677669
        %v1738 = vadd.f32 %v1722, %v758
        %v1739 = vadd.f32 %v1723, %v759
        %v1740 = vadd.f32 %v1724, %v760
        %v1741 = vadd.f32 %v1725, %v761
        %v1742 = vadd.f32 %v1726, %v762
        %v1743 = vadd.f32 %v1727, %v763
        %v1744 = vadd.f32 %v1728, %v764
        %v1745 = vadd.f32 %v1729, %v765
        %v1746 = vadd.f32 %v1730, %v766
        %v1747 = vadd.f32 %v1731, %v767
        %v1748 = vadd.f32 %v1732, %v768
        %v1749 = vadd.f32 %v1733, %v769
        %v1750 = vadd.f32 %v1734, %v770
        %v1751 = vadd.f32 %v1735, %v771
        %v1752 = vadd.f32 %v1736, %v772
        %v1753 = vadd.f32 %v1737, %v773
        %1754 = vmax.xlane.f32.xlu0 %v1738
        %v1755 = vpop.xlane.xlu0 %1754
        %1756 = vmax.xlane.f32.xlu0 %v1739
        %v1757 = vpop.xlane.xlu0 %1756
        %1758 = vmax.xlane.f32.xlu0 %v1740
        %v1759 = vpop.xlane.xlu0 %1758
        %1760 = vmax.xlane.f32.xlu0 %v1741
        %v1761 = vpop.xlane.xlu0 %1760
        %1762 = vmax.xlane.f32.xlu0 %v1742
        %v1763 = vpop.xlane.xlu0 %1762
        %1764 = vmax.xlane.f32.xlu0 %v1743
        %v1765 = vpop.xlane.xlu0 %1764
        %1766 = vmax.xlane.f32.xlu0 %v1744
        %v1767 = vpop.xlane.xlu0 %1766
        %1768 = vmax.xlane.f32.xlu0 %v1745
        %v1769 = vpop.xlane.xlu0 %1768
        %1770 = vmax.xlane.f32.xlu0 %v1746
        %v1771 = vpop.xlane.xlu0 %1770
        %1772 = vmax.xlane.f32.xlu0 %v1747
        %v1773 = vpop.xlane.xlu0 %1772
        %1774 = vmax.xlane.f32.xlu0 %v1748
        %v1775 = vpop.xlane.xlu0 %1774
        %1776 = vmax.xlane.f32.xlu0 %v1749
        %v1777 = vpop.xlane.xlu0 %1776
        %1778 = vmax.xlane.f32.xlu0 %v1750
        %v1779 = vpop.xlane.xlu0 %1778
        %1780 = vmax.xlane.f32.xlu0 %v1751
        %v1781 = vpop.xlane.xlu0 %1780
        %1782 = vmax.xlane.f32.xlu0 %v1752
        %v1783 = vpop.xlane.xlu0 %1782
        %1784 = vmax.xlane.f32.xlu0 %v1753
        %v1785 = vpop.xlane.xlu0 %1784
        %v1786 = vsub.f32 %v1738, %v1755
        %v1787 = vsub.f32 %v1739, %v1757
        %v1788 = vsub.f32 %v1740, %v1759
        %v1789 = vsub.f32 %v1741, %v1761
        %v1790 = vsub.f32 %v1742, %v1763
        %v1791 = vsub.f32 %v1743, %v1765
        %v1792 = vsub.f32 %v1744, %v1767
        %v1793 = vsub.f32 %v1745, %v1769
        %v1794 = vsub.f32 %v1746, %v1771
        %v1795 = vsub.f32 %v1747, %v1773
        %v1796 = vsub.f32 %v1748, %v1775
        %v1797 = vsub.f32 %v1749, %v1777
        %v1798 = vsub.f32 %v1750, %v1779
        %v1799 = vsub.f32 %v1751, %v1781
        %v1800 = vsub.f32 %v1752, %v1783
        %v1801 = vsub.f32 %v1753, %v1785
        %v1802 = vmul.f32 %v1786, 1.442695
        %v1803 = vpow.pop %v1802
        %v1804 = vmul.f32 %v1787, 1.442695
        %v1805 = vpow.pop %v1804
        %v1806 = vmul.f32 %v1788, 1.442695
        %v1807 = vpow.pop %v1806
        %v1808 = vmul.f32 %v1789, 1.442695
        %v1809 = vpow.pop %v1808
        %v1810 = vmul.f32 %v1790, 1.442695
        %v1811 = vpow.pop %v1810
        %v1812 = vmul.f32 %v1791, 1.442695
        %v1813 = vpow.pop %v1812
        %v1814 = vmul.f32 %v1792, 1.442695
        %v1815 = vpow.pop %v1814
        %v1816 = vmul.f32 %v1793, 1.442695
        %v1817 = vpow.pop %v1816
        %v1818 = vmul.f32 %v1794, 1.442695
        %v1819 = vpow.pop %v1818
        %v1820 = vmul.f32 %v1795, 1.442695
        %v1821 = vpow.pop %v1820
        %v1822 = vmul.f32 %v1796, 1.442695
        %v1823 = vpow.pop %v1822
        %v1824 = vmul.f32 %v1797, 1.442695
        %v1825 = vpow.pop %v1824
        %v1826 = vmul.f32 %v1798, 1.442695
        %v1827 = vpow.pop %v1826
        %v1828 = vmul.f32 %v1799, 1.442695
        %v1829 = vpow.pop %v1828
        %v1830 = vmul.f32 %v1800, 1.442695
        %v1831 = vpow.pop %v1830
        %v1832 = vmul.f32 %v1801, 1.442695
        %v1833 = vpow.pop %v1832
        %1834 = vadd.xlane.f32.xlu0 %v1803
        %v1835 = vpop.xlane.xlu0 %1834
        %1836 = vadd.xlane.f32.xlu0 %v1805
        %v1837 = vpop.xlane.xlu0 %1836
        %1838 = vadd.xlane.f32.xlu0 %v1807
        %v1839 = vpop.xlane.xlu0 %1838
        %1840 = vadd.xlane.f32.xlu0 %v1809
        %v1841 = vpop.xlane.xlu0 %1840
        %1842 = vadd.xlane.f32.xlu0 %v1811
        %v1843 = vpop.xlane.xlu0 %1842
        %1844 = vadd.xlane.f32.xlu0 %v1813
        %v1845 = vpop.xlane.xlu0 %1844
        %1846 = vadd.xlane.f32.xlu0 %v1815
        %v1847 = vpop.xlane.xlu0 %1846
        %1848 = vadd.xlane.f32.xlu0 %v1817
        %v1849 = vpop.xlane.xlu0 %1848
        %1850 = vadd.xlane.f32.xlu0 %v1819
        %v1851 = vpop.xlane.xlu0 %1850
        %1852 = vadd.xlane.f32.xlu0 %v1821
        %v1853 = vpop.xlane.xlu0 %1852
        %1854 = vadd.xlane.f32.xlu0 %v1823
        %v1855 = vpop.xlane.xlu0 %1854
        %1856 = vadd.xlane.f32.xlu0 %v1825
        %v1857 = vpop.xlane.xlu0 %1856
        %1858 = vadd.xlane.f32.xlu0 %v1827
        %v1859 = vpop.xlane.xlu0 %1858
        %1860 = vadd.xlane.f32.xlu0 %v1829
        %v1861 = vpop.xlane.xlu0 %1860
        %1862 = vadd.xlane.f32.xlu0 %v1831
        %v1863 = vpop.xlane.xlu0 %1862
        %1864 = vadd.xlane.f32.xlu0 %v1833
        %v1865 = vpop.xlane.xlu0 %1864
        %v1866 = vrcp.pop %v1835
        %v1867 = vmul.f32 %v1803, %v1866
        %v1868 = vrcp.pop %v1837
        %v1869 = vmul.f32 %v1805, %v1868
        %v1870 = vrcp.pop %v1839
        %v1871 = vmul.f32 %v1807, %v1870
        %v1872 = vrcp.pop %v1841
        %v1873 = vmul.f32 %v1809, %v1872
        %v1874 = vrcp.pop %v1843
        %v1875 = vmul.f32 %v1811, %v1874
        %v1876 = vrcp.pop %v1845
        %v1877 = vmul.f32 %v1813, %v1876
        %v1878 = vrcp.pop %v1847
        %v1879 = vmul.f32 %v1815, %v1878
        %v1880 = vrcp.pop %v1849
        %v1881 = vmul.f32 %v1817, %v1880
        %v1882 = vrcp.pop %v1851
        %v1883 = vmul.f32 %v1819, %v1882
        %v1884 = vrcp.pop %v1853
        %v1885 = vmul.f32 %v1821, %v1884
        %v1886 = vrcp.pop %v1855
        %v1887 = vmul.f32 %v1823, %v1886
        %v1888 = vrcp.pop %v1857
        %v1889 = vmul.f32 %v1825, %v1888
        %v1890 = vrcp.pop %v1859
        %v1891 = vmul.f32 %v1827, %v1890
        %v1892 = vrcp.pop %v1861
        %v1893 = vmul.f32 %v1829, %v1892
        %v1894 = vrcp.pop %v1863
        %v1895 = vmul.f32 %v1831, %v1894
        %v1896 = vrcp.pop %v1865
        %v1897 = vmul.f32 %v1833, %v1896
        %v1898 = vpack.c.bf16 %v1869, %v1867
        %v1899 = vpack.c.bf16 %v1873, %v1871
        %v1900 = vpack.c.bf16 %v1877, %v1875
        %v1901 = vpack.c.bf16 %v1881, %v1879
        %v1902 = vpack.c.bf16 %v1885, %v1883
        %v1903 = vpack.c.bf16 %v1889, %v1887
        %v1904 = vpack.c.bf16 %v1893, %v1891
        %v1905 = vpack.c.bf16 %v1897, %v1895
        %1914 = vrot.lane.b32.xlu0 %v715, 96
        %v1915 = vpop.permute.xlu0 %1914
        %1916 = vrot.lane.b32.xlu0 %v716, 96
        %v1917 = vpop.permute.xlu0 %1916
        %1918 = vrot.lane.b32.xlu0 %v717, 96
        %v1919 = vpop.permute.xlu0 %1918
        %1920 = vrot.lane.b32.xlu0 %v718, 96
        %v1921 = vpop.permute.xlu0 %1920
        %1922 = vrot.lane.b32.xlu0 %v719, 96
        %v1923 = vpop.permute.xlu0 %1922
        %1924 = vrot.lane.b32.xlu0 %v720, 96
        %v1925 = vpop.permute.xlu0 %1924
        %1926 = vrot.lane.b32.xlu0 %v721, 96
        %v1927 = vpop.permute.xlu0 %1926
        %1928 = vrot.lane.b32.xlu0 %v722, 96
        %v1929 = vpop.permute.xlu0 %1928
        %1938 = vmatprep.subr.bf16.mxu0 0
        %1939 = vmatpush1.bf16.msra.mxu0 %v1915
        %1940 = vmatprep.subr.bf16.mxu0 0
        %1941 = vmatpush1.bf16.msra.mxu0 %v1917
        %1942 = vmatprep.subr.bf16.mxu0 0
        %1943 = vmatpush1.bf16.msra.mxu0 %v1919
        %1944 = vmatprep.subr.bf16.mxu0 0
        %1945 = vmatpush1.bf16.msra.mxu0 %v1921
        %1946 = vmatprep.subr.bf16.mxu0 0
        %1947 = vmatpush1.bf16.msra.mxu0 %v1923
        %1948 = vmatprep.subr.bf16.mxu0 0
        %1949 = vmatpush1.bf16.msra.mxu0 %v1925
        %1950 = vmatprep.subr.bf16.mxu0 0
        %1951 = vmatpush1.bf16.msra.mxu0 %v1927
        %1952 = vmatprep.subr.bf16.mxu0 0
        %1953 = vmatpush1.bf16.msra.mxu0 %v1929
        %1954 = vmatprep.subr.bf16.mxu0 0
        %1955 = vmatpush1.bf16.msra.mxu0 0
        %1956 = vmatprep.subr.bf16.mxu0 0
        %1957 = vmatpush1.bf16.msra.mxu0 0
        %1958 = vmatprep.subr.bf16.mxu0 0
        %1959 = vmatpush1.bf16.msra.mxu0 0
        %1960 = vmatprep.subr.bf16.mxu0 0
        %1961 = vmatpush1.bf16.msra.mxu0 0
        %1962 = vmatprep.subr.bf16.mxu0 0
        %1963 = vmatpush1.bf16.msra.mxu0 0
        %1964 = vmatprep.subr.bf16.mxu0 0
        %1965 = vmatpush1.bf16.msra.mxu0 0
        %1966 = vmatprep.subr.bf16.mxu0 0
        %1967 = vmatpush1.bf16.msra.mxu0 0
        %1968 = vmatprep.subr.bf16.mxu0 0
        %1969 = vmatpush1.bf16.msra.mxu0 0
        %1970 = vmatprep.mubr.bf16.mxu0 0
        %1971 = vmatmul.mubr.bf16.gmra.mrb[0].mxu0 %v1898
        %v1972 = vpop.f32.mrb[0].mxu0
        %v1973 = vadd.f32 0.0, %v1972
        %v1974 = vpop.f32.mrb[0].mxu0
        %v1975 = vpop.f32.mrb[0].mxu0
        %v1976 = vadd.f32 0.0, %v1975
        %v1977 = vpop.f32.mrb[0].mxu0
        %1978 = vmatprep.mubr.bf16.mxu0 0
        %1979 = vmatmul.mubr.bf16.gmra.mrb[0].mxu0 %v1899
        %v1980 = vpop.f32.mrb[0].mxu0
        %v1981 = vadd.f32 0.0, %v1980
        %v1982 = vpop.f32.mrb[0].mxu0
        %v1983 = vpop.f32.mrb[0].mxu0
        %v1984 = vadd.f32 0.0, %v1983
        %v1985 = vpop.f32.mrb[0].mxu0
        %1986 = vmatprep.mubr.bf16.mxu0 0
        %1987 = vmatmul.mubr.bf16.gmra.mrb[0].mxu0 %v1900
        %v1988 = vpop.f32.mrb[0].mxu0
        %v1989 = vadd.f32 0.0, %v1988
        %v1990 = vpop.f32.mrb[0].mxu0
        %v1991 = vpop.f32.mrb[0].mxu0
        %v1992 = vadd.f32 0.0, %v1991
        %v1993 = vpop.f32.mrb[0].mxu0
        %1994 = vmatprep.mubr.bf16.mxu0 0
        %1995 = vmatmul.mubr.bf16.gmra.mrb[0].mxu0 %v1901
        %v1996 = vpop.f32.mrb[0].mxu0
        %v1997 = vadd.f32 0.0, %v1996
        %v1998 = vpop.f32.mrb[0].mxu0
        %v1999 = vpop.f32.mrb[0].mxu0
        %v2000 = vadd.f32 0.0, %v1999
        %v2001 = vpop.f32.mrb[0].mxu0
        %2002 = vmatprep.mubr.bf16.mxu0 0
        %2003 = vmatmul.mubr.bf16.gmra.mrb[0].mxu0 %v1902
        %v2004 = vpop.f32.mrb[0].mxu0
        %v2005 = vadd.f32 0.0, %v2004
        %v2006 = vpop.f32.mrb[0].mxu0
        %v2007 = vpop.f32.mrb[0].mxu0
        %v2008 = vadd.f32 0.0, %v2007
        %v2009 = vpop.f32.mrb[0].mxu0
        %2010 = vmatprep.mubr.bf16.mxu0 0
        %2011 = vmatmul.mubr.bf16.gmra.mrb[0].mxu0 %v1903
        %v2012 = vpop.f32.mrb[0].mxu0
        %v2013 = vadd.f32 0.0, %v2012
        %v2014 = vpop.f32.mrb[0].mxu0
        %v2015 = vpop.f32.mrb[0].mxu0
        %v2016 = vadd.f32 0.0, %v2015
        %v2017 = vpop.f32.mrb[0].mxu0
        %2018 = vmatprep.mubr.bf16.mxu0 0
        %2019 = vmatmul.mubr.bf16.gmra.mrb[0].mxu0 %v1904
        %v2020 = vpop.f32.mrb[0].mxu0
        %v2021 = vadd.f32 0.0, %v2020
        %v2022 = vpop.f32.mrb[0].mxu0
        %v2023 = vpop.f32.mrb[0].mxu0
        %v2024 = vadd.f32 0.0, %v2023
        %v2025 = vpop.f32.mrb[0].mxu0
        %2026 = vmatprep.mubr.bf16.mxu0 0
        %2027 = vmatmul.mubr.bf16.gmra.mrb[0].mxu0 %v1905
        %v2028 = vpop.f32.mrb[0].mxu0
        %v2029 = vadd.f32 0.0, %v2028
        %v2030 = vpop.f32.mrb[0].mxu0
        %v2031 = vpop.f32.mrb[0].mxu0
        %v2032 = vadd.f32 0.0, %v2031
        %v2033 = vpop.f32.mrb[0].mxu0
        %2034 = vdwg.mxu0
        %2051 = vrot.lane.b32.xlu0 %v1973, 32
        %v2052 = vpop.permute.xlu0 %2051
        %2053 = vrot.lane.b32.xlu0 %v1976, 32
        %v2054 = vpop.permute.xlu0 %2053
        %2055 = vrot.lane.b32.xlu0 %v1981, 32
        %v2056 = vpop.permute.xlu0 %2055
        %2057 = vrot.lane.b32.xlu0 %v1984, 32
        %v2058 = vpop.permute.xlu0 %2057
        %2059 = vrot.lane.b32.xlu0 %v1989, 32
        %v2060 = vpop.permute.xlu0 %2059
        %2061 = vrot.lane.b32.xlu0 %v1992, 32
        %v2062 = vpop.permute.xlu0 %2061
        %2063 = vrot.lane.b32.xlu0 %v1997, 32
        %v2064 = vpop.permute.xlu0 %2063
        %2065 = vrot.lane.b32.xlu0 %v2000, 32
        %v2066 = vpop.permute.xlu0 %2065
        %2067 = vrot.lane.b32.xlu0 %v2005, 32
        %v2068 = vpop.permute.xlu0 %2067
        %2069 = vrot.lane.b32.xlu0 %v2008, 32
        %v2070 = vpop.permute.xlu0 %2069
        %2071 = vrot.lane.b32.xlu0 %v2013, 32
        %v2072 = vpop.permute.xlu0 %2071
        %2073 = vrot.lane.b32.xlu0 %v2016, 32
        %v2074 = vpop.permute.xlu0 %2073
        %2075 = vrot.lane.b32.xlu0 %v2021, 32
        %v2076 = vpop.permute.xlu0 %2075
        %2077 = vrot.lane.b32.xlu0 %v2024, 32
        %v2078 = vpop.permute.xlu0 %2077
        %2079 = vrot.lane.b32.xlu0 %v2029, 32
        %v2080 = vpop.permute.xlu0 %2079
        %2081 = vrot.lane.b32.xlu0 %v2032, 32
        %v2082 = vpop.permute.xlu0 %2081
        %vm2099 = vcmask 523520
        %2100 = vst.msk [vmem:[%s230] sm:$0xff] %vm2099, %v2052
        %2101 = vst.msk [vmem:[%s230 + $0x8] sm:$0xff] %vm2099, %v2054
        %2102 = vst.msk [vmem:[%s230 + $0x10] sm:$0xff] %vm2099, %v2056
        %2103 = vst.msk [vmem:[%s230 + $0x18] sm:$0xff] %vm2099, %v2058
        %2104 = vst.msk [vmem:[%s230 + $0x20] sm:$0xff] %vm2099, %v2060
        %2105 = vst.msk [vmem:[%s230 + $0x28] sm:$0xff] %vm2099, %v2062
        %2106 = vst.msk [vmem:[%s230 + $0x30] sm:$0xff] %vm2099, %v2064
        %2107 = vst.msk [vmem:[%s230 + $0x38] sm:$0xff] %vm2099, %v2066
        %2108 = vst.msk [vmem:[%s230 + $0x40] sm:$0xff] %vm2099, %v2068
        %2109 = vst.msk [vmem:[%s230 + $0x48] sm:$0xff] %vm2099, %v2070
        %2110 = vst.msk [vmem:[%s230 + $0x50] sm:$0xff] %vm2099, %v2072
        %2111 = vst.msk [vmem:[%s230 + $0x58] sm:$0xff] %vm2099, %v2074
        %2112 = vst.msk [vmem:[%s230 + $0x60] sm:$0xff] %vm2099, %v2076
        %2113 = vst.msk [vmem:[%s230 + $0x68] sm:$0xff] %vm2099, %v2078
        %2114 = vst.msk [vmem:[%s230 + $0x70] sm:$0xff] %vm2099, %v2080
        %2115 = vst.msk [vmem:[%s230 + $0x78] sm:$0xff] %vm2099, %v2082
        %2116 = vrot.lane.b32.xlu0 %v806, 64
        %v2117 = vpop.permute.xlu0 %2116
        %2118 = vrot.lane.b32.xlu0 %v807, 64
        %v2119 = vpop.permute.xlu0 %2118
        %2120 = vrot.lane.b32.xlu0 %v808, 64
        %v2121 = vpop.permute.xlu0 %2120
        %2122 = vrot.lane.b32.xlu0 %v809, 64
        %v2123 = vpop.permute.xlu0 %2122
        %2124 = vrot.lane.b32.xlu0 %v810, 64
        %v2125 = vpop.permute.xlu0 %2124
        %2126 = vrot.lane.b32.xlu0 %v811, 64
        %v2127 = vpop.permute.xlu0 %2126
        %2128 = vrot.lane.b32.xlu0 %v812, 64
        %v2129 = vpop.permute.xlu0 %2128
        %2130 = vrot.lane.b32.xlu0 %v813, 64
        %v2131 = vpop.permute.xlu0 %2130
        %2132 = vrot.lane.b32.xlu0 %v699, 64
        %v2133 = vpop.permute.xlu0 %2132
        %2134 = vrot.lane.b32.xlu0 %v700, 64
        %v2135 = vpop.permute.xlu0 %2134
        %2136 = vrot.lane.b32.xlu0 %v701, 64
        %v2137 = vpop.permute.xlu0 %2136
        %2138 = vrot.lane.b32.xlu0 %v702, 64
        %v2139 = vpop.permute.xlu0 %2138
        %2140 = vrot.lane.b32.xlu0 %v703, 64
        %v2141 = vpop.permute.xlu0 %2140
        %2142 = vrot.lane.b32.xlu0 %v704, 64
        %v2143 = vpop.permute.xlu0 %2142
        %2144 = vrot.lane.b32.xlu0 %v705, 64
        %v2145 = vpop.permute.xlu0 %2144
        %2146 = vrot.lane.b32.xlu0 %v706, 64
        %v2147 = vpop.permute.xlu0 %2146
        %2148 = vrot.lane.b32.xlu0 %v707, 64
        %v2149 = vpop.permute.xlu0 %2148
        %2150 = vrot.lane.b32.xlu0 %v708, 64
        %v2151 = vpop.permute.xlu0 %2150
        %2152 = vrot.lane.b32.xlu0 %v709, 64
        %v2153 = vpop.permute.xlu0 %2152
        %2154 = vrot.lane.b32.xlu0 %v710, 64
        %v2155 = vpop.permute.xlu0 %2154
        %2156 = vrot.lane.b32.xlu0 %v711, 64
        %v2157 = vpop.permute.xlu0 %2156
        %2158 = vrot.lane.b32.xlu0 %v712, 64
        %v2159 = vpop.permute.xlu0 %2158
        %2160 = vrot.lane.b32.xlu0 %v713, 64
        %v2161 = vpop.permute.xlu0 %2160
        %2162 = vrot.lane.b32.xlu0 %v714, 64
        %v2163 = vpop.permute.xlu0 %2162
        %2164 = vrot.lane.b32.xlu0 %v2117, 64
        %v2165 = vpop.permute.xlu0 %2164
        %2166 = vrot.lane.b32.xlu0 %v2119, 64
        %v2167 = vpop.permute.xlu0 %2166
        %2168 = vrot.lane.b32.xlu0 %v2121, 64
        %v2169 = vpop.permute.xlu0 %2168
        %2170 = vrot.lane.b32.xlu0 %v2123, 64
        %v2171 = vpop.permute.xlu0 %2170
        %2172 = vrot.lane.b32.xlu0 %v2125, 64
        %v2173 = vpop.permute.xlu0 %2172
        %2174 = vrot.lane.b32.xlu0 %v2127, 64
        %v2175 = vpop.permute.xlu0 %2174
        %2176 = vrot.lane.b32.xlu0 %v2129, 64
        %v2177 = vpop.permute.xlu0 %2176
        %2178 = vrot.lane.b32.xlu0 %v2131, 64
        %v2179 = vpop.permute.xlu0 %2178
        %v2181 = vsel %vm814, %v2133, 0
        %v2184 = vsel %vm814, %v2135, 0
        %v2187 = vsel %vm814, %v2137, 0
        %v2190 = vsel %vm814, %v2139, 0
        %v2193 = vsel %vm814, %v2141, 0
        %v2196 = vsel %vm814, %v2143, 0
        %v2199 = vsel %vm814, %v2145, 0
        %v2202 = vsel %vm814, %v2147, 0
        %v2205 = vsel %vm814, %v2149, 0
        %v2208 = vsel %vm814, %v2151, 0
        %v2211 = vsel %vm814, %v2153, 0
        %v2214 = vsel %vm814, %v2155, 0
        %v2217 = vsel %vm814, %v2157, 0
        %v2220 = vsel %vm814, %v2159, 0
        %v2223 = vsel %vm814, %v2161, 0
        %v2226 = vsel %vm814, %v2163, 0
        %v2229 = vsel %vm814, %v2165, 0
        %v2232 = vsel %vm814, %v2167, 0
        %v2235 = vsel %vm814, %v2169, 0
        %v2238 = vsel %vm814, %v2171, 0
        %v2241 = vsel %vm814, %v2173, 0
        %v2244 = vsel %vm814, %v2175, 0
        %v2247 = vsel %vm814, %v2177, 0
        %v2250 = vsel %vm814, %v2179, 0
        %2252 = vmatprep.subr.bf16.mxu0 0
        %2253 = vmatpush1.bf16.xpose.msra.mxu0 %v2205
        %2254 = vmatprep.subr.bf16.mxu0 0
        %2255 = vmatpush1.bf16.xpose.msra.mxu0 %v2208
        %2256 = vmatprep.subr.bf16.mxu0 0
        %2257 = vmatpush1.bf16.xpose.msra.mxu0 %v2211
        %2258 = vmatprep.subr.bf16.mxu0 0
        %2259 = vmatpush1.bf16.xpose.msra.mxu0 %v2214
        %2260 = vmatprep.subr.bf16.mxu0 0
        %2261 = vmatpush1.bf16.xpose.msra.mxu0 %v2217
        %2262 = vmatprep.subr.bf16.mxu0 0
        %2263 = vmatpush1.bf16.xpose.msra.mxu0 %v2220
        %2264 = vmatprep.subr.bf16.mxu0 0
        %2265 = vmatpush1.bf16.xpose.msra.mxu0 %v2223
        %2266 = vmatprep.subr.bf16.mxu0 0
        %2267 = vmatpush1.bf16.xpose.msra.mxu0 %v2226
        %2268 = vmatprep.subr.bf16.mxu0 0
        %2269 = vmatpush1.bf16.xpose.msra.mxu0 %v2229
        %2270 = vmatprep.subr.bf16.mxu0 0
        %2271 = vmatpush1.bf16.xpose.msra.mxu0 %v2232
        %2272 = vmatprep.subr.bf16.mxu0 0
        %2273 = vmatpush1.bf16.xpose.msra.mxu0 %v2235
        %2274 = vmatprep.subr.bf16.mxu0 0
        %2275 = vmatpush1.bf16.xpose.msra.mxu0 %v2238
        %2276 = vmatprep.subr.bf16.mxu0 0
        %2277 = vmatpush1.bf16.xpose.msra.mxu0 %v2241
        %2278 = vmatprep.subr.bf16.mxu0 0
        %2279 = vmatpush1.bf16.xpose.msra.mxu0 %v2244
        %2280 = vmatprep.subr.bf16.mxu0 0
        %2281 = vmatpush1.bf16.xpose.msra.mxu0 %v2247
        %2282 = vmatprep.subr.bf16.mxu0 0
        %2283 = vmatpush1.bf16.xpose.msra.mxu0 %v2250
        %2284 = vmatprep.mubr.bf16.mxu0 0
        %2285 = vmatmul.mubr.bf16.gmra.mrb[0].mxu0 %v2181
        %v2286 = vpop.f32.mrb[0].mxu0
        %v2287 = vadd.f32 0.0, %v2286
        %v2288 = vpop.f32.mrb[0].mxu0
        %v2289 = vadd.f32 0.0, %v2288
        %v2290 = vpop.f32.mrb[0].mxu0
        %v2291 = vadd.f32 0.0, %v2290
        %v2292 = vpop.f32.mrb[0].mxu0
        %v2293 = vadd.f32 0.0, %v2292
        %2294 = vmatprep.mubr.bf16.mxu0 0
        %2295 = vmatmul.mubr.bf16.gmra.mrb[0].mxu0 %v2184
        %v2296 = vpop.f32.mrb[0].mxu0
        %v2297 = vadd.f32 0.0, %v2296
        %v2298 = vpop.f32.mrb[0].mxu0
        %v2299 = vadd.f32 0.0, %v2298
        %v2300 = vpop.f32.mrb[0].mxu0
        %v2301 = vadd.f32 0.0, %v2300
        %v2302 = vpop.f32.mrb[0].mxu0
        %v2303 = vadd.f32 0.0, %v2302
        %2304 = vmatprep.mubr.bf16.mxu0 0
        %2305 = vmatmul.mubr.bf16.gmra.mrb[0].mxu0 %v2187
        %v2306 = vpop.f32.mrb[0].mxu0
        %v2307 = vadd.f32 0.0, %v2306
        %v2308 = vpop.f32.mrb[0].mxu0
        %v2309 = vadd.f32 0.0, %v2308
        %v2310 = vpop.f32.mrb[0].mxu0
        %v2311 = vadd.f32 0.0, %v2310
        %v2312 = vpop.f32.mrb[0].mxu0
        %v2313 = vadd.f32 0.0, %v2312
        %2314 = vmatprep.mubr.bf16.mxu0 0
        %2315 = vmatmul.mubr.bf16.gmra.mrb[0].mxu0 %v2190
        %v2316 = vpop.f32.mrb[0].mxu0
        %v2317 = vadd.f32 0.0, %v2316
        %v2318 = vpop.f32.mrb[0].mxu0
        %v2319 = vadd.f32 0.0, %v2318
        %v2320 = vpop.f32.mrb[0].mxu0
        %v2321 = vadd.f32 0.0, %v2320
        %v2322 = vpop.f32.mrb[0].mxu0
        %v2323 = vadd.f32 0.0, %v2322
        %2324 = vmatprep.mubr.bf16.mxu0 0
        %2325 = vmatmul.mubr.bf16.gmra.mrb[0].mxu0 %v2193
        %v2326 = vpop.f32.mrb[0].mxu0
        %v2327 = vadd.f32 0.0, %v2326
        %v2328 = vpop.f32.mrb[0].mxu0
        %v2329 = vadd.f32 0.0, %v2328
        %v2330 = vpop.f32.mrb[0].mxu0
        %v2331 = vadd.f32 0.0, %v2330
        %v2332 = vpop.f32.mrb[0].mxu0
        %v2333 = vadd.f32 0.0, %v2332
        %2334 = vmatprep.mubr.bf16.mxu0 0
        %2335 = vmatmul.mubr.bf16.gmra.mrb[0].mxu0 %v2196
        %v2336 = vpop.f32.mrb[0].mxu0
        %v2337 = vadd.f32 0.0, %v2336
        %v2338 = vpop.f32.mrb[0].mxu0
        %v2339 = vadd.f32 0.0, %v2338
        %v2340 = vpop.f32.mrb[0].mxu0
        %v2341 = vadd.f32 0.0, %v2340
        %v2342 = vpop.f32.mrb[0].mxu0
        %v2343 = vadd.f32 0.0, %v2342
        %2344 = vmatprep.mubr.bf16.mxu0 0
        %2345 = vmatmul.mubr.bf16.gmra.mrb[0].mxu0 %v2199
        %v2346 = vpop.f32.mrb[0].mxu0
        %v2347 = vadd.f32 0.0, %v2346
        %v2348 = vpop.f32.mrb[0].mxu0
        %v2349 = vadd.f32 0.0, %v2348
        %v2350 = vpop.f32.mrb[0].mxu0
        %v2351 = vadd.f32 0.0, %v2350
        %v2352 = vpop.f32.mrb[0].mxu0
        %v2353 = vadd.f32 0.0, %v2352
        %2354 = vmatprep.mubr.bf16.mxu0 0
        %2355 = vmatmul.mubr.bf16.gmra.mrb[0].mxu0 %v2202
        %v2356 = vpop.f32.mrb[0].mxu0
        %v2357 = vadd.f32 0.0, %v2356
        %v2358 = vpop.f32.mrb[0].mxu0
        %v2359 = vadd.f32 0.0, %v2358
        %v2360 = vpop.f32.mrb[0].mxu0
        %v2361 = vadd.f32 0.0, %v2360
        %v2362 = vpop.f32.mrb[0].mxu0
        %v2363 = vadd.f32 0.0, %v2362
        %2364 = vdwg.mxu0
        %s2366 = sor.u32 256, 1
        %2367 = vrot.lane.b32.xlu0 %v2289, %s2366
        %v2368 = vpop.permute.xlu0 %2367
        %s2370 = sor.u32 256, 9
        %2371 = vrot.lane.b32.xlu0 %v2293, %s2370
        %v2372 = vpop.permute.xlu0 %2371
        %s2374 = sor.u32 256, 17
        %2375 = vrot.lane.b32.xlu0 %v2299, %s2374
        %v2376 = vpop.permute.xlu0 %2375
        %s2378 = sor.u32 256, 25
        %2379 = vrot.lane.b32.xlu0 %v2303, %s2378
        %v2380 = vpop.permute.xlu0 %2379
        %s2382 = sor.u32 256, 33
        %2383 = vrot.lane.b32.xlu0 %v2309, %s2382
        %v2384 = vpop.permute.xlu0 %2383
        %s2386 = sor.u32 256, 41
        %2387 = vrot.lane.b32.xlu0 %v2313, %s2386
        %v2388 = vpop.permute.xlu0 %2387
        %s2390 = sor.u32 256, 49
        %2391 = vrot.lane.b32.xlu0 %v2319, %s2390
        %v2392 = vpop.permute.xlu0 %2391
        %s2394 = sor.u32 256, 57
        %2395 = vrot.lane.b32.xlu0 %v2323, %s2394
        %v2396 = vpop.permute.xlu0 %2395
        %s2398 = sor.u32 256, 65
        %2399 = vrot.lane.b32.xlu0 %v2329, %s2398
        %v2400 = vpop.permute.xlu0 %2399
        %s2402 = sor.u32 256, 73
        %2403 = vrot.lane.b32.xlu0 %v2333, %s2402
        %v2404 = vpop.permute.xlu0 %2403
        %s2406 = sor.u32 256, 81
        %2407 = vrot.lane.b32.xlu0 %v2339, %s2406
        %v2408 = vpop.permute.xlu0 %2407
        %s2410 = sor.u32 256, 89
        %2411 = vrot.lane.b32.xlu0 %v2343, %s2410
        %v2412 = vpop.permute.xlu0 %2411
        %s2414 = sor.u32 256, 97
        %2415 = vrot.lane.b32.xlu0 %v2349, %s2414
        %v2416 = vpop.permute.xlu0 %2415
        %s2418 = sor.u32 256, 105
        %2419 = vrot.lane.b32.xlu0 %v2353, %s2418
        %v2420 = vpop.permute.xlu0 %2419
        %s2422 = sor.u32 256, 113
        %2423 = vrot.lane.b32.xlu0 %v2359, %s2422
        %v2424 = vpop.permute.xlu0 %2423
        %s2426 = sor.u32 256, 121
        %2427 = vrot.lane.b32.xlu0 %v2363, %s2426
        %v2428 = vpop.permute.xlu0 %2427
        %v2429 = vadd.f32 %v2287, %v2368
        %v2430 = vadd.f32 %v2291, %v2372
        %v2431 = vadd.f32 %v2297, %v2376
        %v2432 = vadd.f32 %v2301, %v2380
        %v2433 = vadd.f32 %v2307, %v2384
        %v2434 = vadd.f32 %v2311, %v2388
        %v2435 = vadd.f32 %v2317, %v2392
        %v2436 = vadd.f32 %v2321, %v2396
        %v2437 = vadd.f32 %v2327, %v2400
        %v2438 = vadd.f32 %v2331, %v2404
        %v2439 = vadd.f32 %v2337, %v2408
        %v2440 = vadd.f32 %v2341, %v2412
        %v2441 = vadd.f32 %v2347, %v2416
        %v2442 = vadd.f32 %v2351, %v2420
        %v2443 = vadd.f32 %v2357, %v2424
        %v2444 = vadd.f32 %v2361, %v2428
        %v2445 = vmul.f32 %v2429, 0.17677669
        %v2446 = vmul.f32 %v2430, 0.17677669
        %v2447 = vmul.f32 %v2431, 0.17677669
        %v2448 = vmul.f32 %v2432, 0.17677669
        %v2449 = vmul.f32 %v2433, 0.17677669
        %v2450 = vmul.f32 %v2434, 0.17677669
        %v2451 = vmul.f32 %v2435, 0.17677669
        %v2452 = vmul.f32 %v2436, 0.17677669
        %v2453 = vmul.f32 %v2437, 0.17677669
        %v2454 = vmul.f32 %v2438, 0.17677669
        %v2455 = vmul.f32 %v2439, 0.17677669
        %v2456 = vmul.f32 %v2440, 0.17677669
        %v2457 = vmul.f32 %v2441, 0.17677669
        %v2458 = vmul.f32 %v2442, 0.17677669
        %v2459 = vmul.f32 %v2443, 0.17677669
        %v2460 = vmul.f32 %v2444, 0.17677669
        %v2461 = vadd.f32 %v2445, %v758
        %v2462 = vadd.f32 %v2446, %v759
        %v2463 = vadd.f32 %v2447, %v760
        %v2464 = vadd.f32 %v2448, %v761
        %v2465 = vadd.f32 %v2449, %v762
        %v2466 = vadd.f32 %v2450, %v763
        %v2467 = vadd.f32 %v2451, %v764
        %v2468 = vadd.f32 %v2452, %v765
        %v2469 = vadd.f32 %v2453, %v766
        %v2470 = vadd.f32 %v2454, %v767
        %v2471 = vadd.f32 %v2455, %v768
        %v2472 = vadd.f32 %v2456, %v769
        %v2473 = vadd.f32 %v2457, %v770
        %v2474 = vadd.f32 %v2458, %v771
        %v2475 = vadd.f32 %v2459, %v772
        %v2476 = vadd.f32 %v2460, %v773
        %2477 = vmax.xlane.f32.xlu0 %v2461
        %v2478 = vpop.xlane.xlu0 %2477
        %2479 = vmax.xlane.f32.xlu0 %v2462
        %v2480 = vpop.xlane.xlu0 %2479
        %2481 = vmax.xlane.f32.xlu0 %v2463
        %v2482 = vpop.xlane.xlu0 %2481
        %2483 = vmax.xlane.f32.xlu0 %v2464
        %v2484 = vpop.xlane.xlu0 %2483
        %2485 = vmax.xlane.f32.xlu0 %v2465
        %v2486 = vpop.xlane.xlu0 %2485
        %2487 = vmax.xlane.f32.xlu0 %v2466
        %v2488 = vpop.xlane.xlu0 %2487
        %2489 = vmax.xlane.f32.xlu0 %v2467
        %v2490 = vpop.xlane.xlu0 %2489
        %2491 = vmax.xlane.f32.xlu0 %v2468
        %v2492 = vpop.xlane.xlu0 %2491
        %2493 = vmax.xlane.f32.xlu0 %v2469
        %v2494 = vpop.xlane.xlu0 %2493
        %2495 = vmax.xlane.f32.xlu0 %v2470
        %v2496 = vpop.xlane.xlu0 %2495
        %2497 = vmax.xlane.f32.xlu0 %v2471
        %v2498 = vpop.xlane.xlu0 %2497
        %2499 = vmax.xlane.f32.xlu0 %v2472
        %v2500 = vpop.xlane.xlu0 %2499
        %2501 = vmax.xlane.f32.xlu0 %v2473
        %v2502 = vpop.xlane.xlu0 %2501
        %2503 = vmax.xlane.f32.xlu0 %v2474
        %v2504 = vpop.xlane.xlu0 %2503
        %2505 = vmax.xlane.f32.xlu0 %v2475
        %v2506 = vpop.xlane.xlu0 %2505
        %2507 = vmax.xlane.f32.xlu0 %v2476
        %v2508 = vpop.xlane.xlu0 %2507
        %v2509 = vsub.f32 %v2461, %v2478
        %v2510 = vsub.f32 %v2462, %v2480
        %v2511 = vsub.f32 %v2463, %v2482
        %v2512 = vsub.f32 %v2464, %v2484
        %v2513 = vsub.f32 %v2465, %v2486
        %v2514 = vsub.f32 %v2466, %v2488
        %v2515 = vsub.f32 %v2467, %v2490
        %v2516 = vsub.f32 %v2468, %v2492
        %v2517 = vsub.f32 %v2469, %v2494
        %v2518 = vsub.f32 %v2470, %v2496
        %v2519 = vsub.f32 %v2471, %v2498
        %v2520 = vsub.f32 %v2472, %v2500
        %v2521 = vsub.f32 %v2473, %v2502
        %v2522 = vsub.f32 %v2474, %v2504
        %v2523 = vsub.f32 %v2475, %v2506
        %v2524 = vsub.f32 %v2476, %v2508
        %v2525 = vmul.f32 %v2509, 1.442695
        %v2526 = vpow.pop %v2525
        %v2527 = vmul.f32 %v2510, 1.442695
        %v2528 = vpow.pop %v2527
        %v2529 = vmul.f32 %v2511, 1.442695
        %v2530 = vpow.pop %v2529
        %v2531 = vmul.f32 %v2512, 1.442695
        %v2532 = vpow.pop %v2531
        %v2533 = vmul.f32 %v2513, 1.442695
        %v2534 = vpow.pop %v2533
        %v2535 = vmul.f32 %v2514, 1.442695
        %v2536 = vpow.pop %v2535
        %v2537 = vmul.f32 %v2515, 1.442695
        %v2538 = vpow.pop %v2537
        %v2539 = vmul.f32 %v2516, 1.442695
        %v2540 = vpow.pop %v2539
        %v2541 = vmul.f32 %v2517, 1.442695
        %v2542 = vpow.pop %v2541
        %v2543 = vmul.f32 %v2518, 1.442695
        %v2544 = vpow.pop %v2543
        %v2545 = vmul.f32 %v2519, 1.442695
        %v2546 = vpow.pop %v2545
        %v2547 = vmul.f32 %v2520, 1.442695
        %v2548 = vpow.pop %v2547
        %v2549 = vmul.f32 %v2521, 1.442695
        %v2550 = vpow.pop %v2549
        %v2551 = vmul.f32 %v2522, 1.442695
        %v2552 = vpow.pop %v2551
        %v2553 = vmul.f32 %v2523, 1.442695
        %v2554 = vpow.pop %v2553
        %v2555 = vmul.f32 %v2524, 1.442695
        %v2556 = vpow.pop %v2555
        %2557 = vadd.xlane.f32.xlu0 %v2526
        %v2558 = vpop.xlane.xlu0 %2557
        %2559 = vadd.xlane.f32.xlu0 %v2528
        %v2560 = vpop.xlane.xlu0 %2559
        %2561 = vadd.xlane.f32.xlu0 %v2530
        %v2562 = vpop.xlane.xlu0 %2561
        %2563 = vadd.xlane.f32.xlu0 %v2532
        %v2564 = vpop.xlane.xlu0 %2563
        %2565 = vadd.xlane.f32.xlu0 %v2534
        %v2566 = vpop.xlane.xlu0 %2565
        %2567 = vadd.xlane.f32.xlu0 %v2536
        %v2568 = vpop.xlane.xlu0 %2567
        %2569 = vadd.xlane.f32.xlu0 %v2538
        %v2570 = vpop.xlane.xlu0 %2569
        %2571 = vadd.xlane.f32.xlu0 %v2540
        %v2572 = vpop.xlane.xlu0 %2571
        %2573 = vadd.xlane.f32.xlu0 %v2542
        %v2574 = vpop.xlane.xlu0 %2573
        %2575 = vadd.xlane.f32.xlu0 %v2544
        %v2576 = vpop.xlane.xlu0 %2575
        %2577 = vadd.xlane.f32.xlu0 %v2546
        %v2578 = vpop.xlane.xlu0 %2577
        %2579 = vadd.xlane.f32.xlu0 %v2548
        %v2580 = vpop.xlane.xlu0 %2579
        %2581 = vadd.xlane.f32.xlu0 %v2550
        %v2582 = vpop.xlane.xlu0 %2581
        %2583 = vadd.xlane.f32.xlu0 %v2552
        %v2584 = vpop.xlane.xlu0 %2583
        %2585 = vadd.xlane.f32.xlu0 %v2554
        %v2586 = vpop.xlane.xlu0 %2585
        %2587 = vadd.xlane.f32.xlu0 %v2556
        %v2588 = vpop.xlane.xlu0 %2587
        %v2589 = vrcp.pop %v2558
        %v2590 = vmul.f32 %v2526, %v2589
        %v2591 = vrcp.pop %v2560
        %v2592 = vmul.f32 %v2528, %v2591
        %v2593 = vrcp.pop %v2562
        %v2594 = vmul.f32 %v2530, %v2593
        %v2595 = vrcp.pop %v2564
        %v2596 = vmul.f32 %v2532, %v2595
        %v2597 = vrcp.pop %v2566
        %v2598 = vmul.f32 %v2534, %v2597
        %v2599 = vrcp.pop %v2568
        %v2600 = vmul.f32 %v2536, %v2599
        %v2601 = vrcp.pop %v2570
        %v2602 = vmul.f32 %v2538, %v2601
        %v2603 = vrcp.pop %v2572
        %v2604 = vmul.f32 %v2540, %v2603
        %v2605 = vrcp.pop %v2574
        %v2606 = vmul.f32 %v2542, %v2605
        %v2607 = vrcp.pop %v2576
        %v2608 = vmul.f32 %v2544, %v2607
        %v2609 = vrcp.pop %v2578
        %v2610 = vmul.f32 %v2546, %v2609
        %v2611 = vrcp.pop %v2580
        %v2612 = vmul.f32 %v2548, %v2611
        %v2613 = vrcp.pop %v2582
        %v2614 = vmul.f32 %v2550, %v2613
        %v2615 = vrcp.pop %v2584
        %v2616 = vmul.f32 %v2552, %v2615
        %v2617 = vrcp.pop %v2586
        %v2618 = vmul.f32 %v2554, %v2617
        %v2619 = vrcp.pop %v2588
        %v2620 = vmul.f32 %v2556, %v2619
        %v2621 = vpack.c.bf16 %v2592, %v2590
        %v2622 = vpack.c.bf16 %v2596, %v2594
        %v2623 = vpack.c.bf16 %v2600, %v2598
        %v2624 = vpack.c.bf16 %v2604, %v2602
        %v2625 = vpack.c.bf16 %v2608, %v2606
        %v2626 = vpack.c.bf16 %v2612, %v2610
        %v2627 = vpack.c.bf16 %v2616, %v2614
        %v2628 = vpack.c.bf16 %v2620, %v2618
        %2629 = vrot.lane.b32.xlu0 %v715, 64
        %v2630 = vpop.permute.xlu0 %2629
        %2631 = vrot.lane.b32.xlu0 %v716, 64
        %v2632 = vpop.permute.xlu0 %2631
        %2633 = vrot.lane.b32.xlu0 %v717, 64
        %v2634 = vpop.permute.xlu0 %2633
        %2635 = vrot.lane.b32.xlu0 %v718, 64
        %v2636 = vpop.permute.xlu0 %2635
        %2637 = vrot.lane.b32.xlu0 %v719, 64
        %v2638 = vpop.permute.xlu0 %2637
        %2639 = vrot.lane.b32.xlu0 %v720, 64
        %v2640 = vpop.permute.xlu0 %2639
        %2641 = vrot.lane.b32.xlu0 %v721, 64
        %v2642 = vpop.permute.xlu0 %2641
        %2643 = vrot.lane.b32.xlu0 %v722, 64
        %v2644 = vpop.permute.xlu0 %2643
        %2653 = vmatprep.subr.bf16.mxu0 0
        %2654 = vmatpush1.bf16.msra.mxu0 %v2630
        %2655 = vmatprep.subr.bf16.mxu0 0
        %2656 = vmatpush1.bf16.msra.mxu0 %v2632
        %2657 = vmatprep.subr.bf16.mxu0 0
        %2658 = vmatpush1.bf16.msra.mxu0 %v2634
        %2659 = vmatprep.subr.bf16.mxu0 0
        %2660 = vmatpush1.bf16.msra.mxu0 %v2636
        %2661 = vmatprep.subr.bf16.mxu0 0
        %2662 = vmatpush1.bf16.msra.mxu0 %v2638
        %2663 = vmatprep.subr.bf16.mxu0 0
        %2664 = vmatpush1.bf16.msra.mxu0 %v2640
        %2665 = vmatprep.subr.bf16.mxu0 0
        %2666 = vmatpush1.bf16.msra.mxu0 %v2642
        %2667 = vmatprep.subr.bf16.mxu0 0
        %2668 = vmatpush1.bf16.msra.mxu0 %v2644
        %2669 = vmatprep.subr.bf16.mxu0 0
        %2670 = vmatpush1.bf16.msra.mxu0 0
        %2671 = vmatprep.subr.bf16.mxu0 0
        %2672 = vmatpush1.bf16.msra.mxu0 0
        %2673 = vmatprep.subr.bf16.mxu0 0
        %2674 = vmatpush1.bf16.msra.mxu0 0
        %2675 = vmatprep.subr.bf16.mxu0 0
        %2676 = vmatpush1.bf16.msra.mxu0 0
        %2677 = vmatprep.subr.bf16.mxu0 0
        %2678 = vmatpush1.bf16.msra.mxu0 0
        %2679 = vmatprep.subr.bf16.mxu0 0
        %2680 = vmatpush1.bf16.msra.mxu0 0
        %2681 = vmatprep.subr.bf16.mxu0 0
        %2682 = vmatpush1.bf16.msra.mxu0 0
        %2683 = vmatprep.subr.bf16.mxu0 0
        %2684 = vmatpush1.bf16.msra.mxu0 0
        %2685 = vmatprep.mubr.bf16.mxu0 0
        %2686 = vmatmul.mubr.bf16.gmra.mrb[0].mxu0 %v2621
        %v2687 = vpop.f32.mrb[0].mxu0
        %v2688 = vadd.f32 0.0, %v2687
        %v2689 = vpop.f32.mrb[0].mxu0
        %v2690 = vpop.f32.mrb[0].mxu0
        %v2691 = vadd.f32 0.0, %v2690
        %v2692 = vpop.f32.mrb[0].mxu0
        %2693 = vmatprep.mubr.bf16.mxu0 0
        %2694 = vmatmul.mubr.bf16.gmra.mrb[0].mxu0 %v2622
        %v2695 = vpop.f32.mrb[0].mxu0
        %v2696 = vadd.f32 0.0, %v2695
        %v2697 = vpop.f32.mrb[0].mxu0
        %v2698 = vpop.f32.mrb[0].mxu0
        %v2699 = vadd.f32 0.0, %v2698
        %v2700 = vpop.f32.mrb[0].mxu0
        %2701 = vmatprep.mubr.bf16.mxu0 0
        %2702 = vmatmul.mubr.bf16.gmra.mrb[0].mxu0 %v2623
        %v2703 = vpop.f32.mrb[0].mxu0
        %v2704 = vadd.f32 0.0, %v2703
        %v2705 = vpop.f32.mrb[0].mxu0
        %v2706 = vpop.f32.mrb[0].mxu0
        %v2707 = vadd.f32 0.0, %v2706
        %v2708 = vpop.f32.mrb[0].mxu0
        %2709 = vmatprep.mubr.bf16.mxu0 0
        %2710 = vmatmul.mubr.bf16.gmra.mrb[0].mxu0 %v2624
        %v2711 = vpop.f32.mrb[0].mxu0
        %v2712 = vadd.f32 0.0, %v2711
        %v2713 = vpop.f32.mrb[0].mxu0
        %v2714 = vpop.f32.mrb[0].mxu0
        %v2715 = vadd.f32 0.0, %v2714
        %v2716 = vpop.f32.mrb[0].mxu0
        %2717 = vmatprep.mubr.bf16.mxu0 0
        %2718 = vmatmul.mubr.bf16.gmra.mrb[0].mxu0 %v2625
        %v2719 = vpop.f32.mrb[0].mxu0
        %v2720 = vadd.f32 0.0, %v2719
        %v2721 = vpop.f32.mrb[0].mxu0
        %v2722 = vpop.f32.mrb[0].mxu0
        %v2723 = vadd.f32 0.0, %v2722
        %v2724 = vpop.f32.mrb[0].mxu0
        %2725 = vmatprep.mubr.bf16.mxu0 0
        %2726 = vmatmul.mubr.bf16.gmra.mrb[0].mxu0 %v2626
        %v2727 = vpop.f32.mrb[0].mxu0
        %v2728 = vadd.f32 0.0, %v2727
        %v2729 = vpop.f32.mrb[0].mxu0
        %v2730 = vpop.f32.mrb[0].mxu0
        %v2731 = vadd.f32 0.0, %v2730
        %v2732 = vpop.f32.mrb[0].mxu0
        %2733 = vmatprep.mubr.bf16.mxu0 0
        %2734 = vmatmul.mubr.bf16.gmra.mrb[0].mxu0 %v2627
        %v2735 = vpop.f32.mrb[0].mxu0
        %v2736 = vadd.f32 0.0, %v2735
        %v2737 = vpop.f32.mrb[0].mxu0
        %v2738 = vpop.f32.mrb[0].mxu0
        %v2739 = vadd.f32 0.0, %v2738
        %v2740 = vpop.f32.mrb[0].mxu0
        %2741 = vmatprep.mubr.bf16.mxu0 0
        %2742 = vmatmul.mubr.bf16.gmra.mrb[0].mxu0 %v2628
        %v2743 = vpop.f32.mrb[0].mxu0
        %v2744 = vadd.f32 0.0, %v2743
        %v2745 = vpop.f32.mrb[0].mxu0
        %v2746 = vpop.f32.mrb[0].mxu0
        %v2747 = vadd.f32 0.0, %v2746
        %v2748 = vpop.f32.mrb[0].mxu0
        %2749 = vdwg.mxu0
        %2766 = vrot.lane.b32.xlu0 %v2688, 64
        %v2767 = vpop.permute.xlu0 %2766
        %2768 = vrot.lane.b32.xlu0 %v2691, 64
        %v2769 = vpop.permute.xlu0 %2768
        %2770 = vrot.lane.b32.xlu0 %v2696, 64
        %v2771 = vpop.permute.xlu0 %2770
        %2772 = vrot.lane.b32.xlu0 %v2699, 64
        %v2773 = vpop.permute.xlu0 %2772
        %2774 = vrot.lane.b32.xlu0 %v2704, 64
        %v2775 = vpop.permute.xlu0 %2774
        %2776 = vrot.lane.b32.xlu0 %v2707, 64
        %v2777 = vpop.permute.xlu0 %2776
        %2778 = vrot.lane.b32.xlu0 %v2712, 64
        %v2779 = vpop.permute.xlu0 %2778
        %2780 = vrot.lane.b32.xlu0 %v2715, 64
        %v2781 = vpop.permute.xlu0 %2780
        %2782 = vrot.lane.b32.xlu0 %v2720, 64
        %v2783 = vpop.permute.xlu0 %2782
        %2784 = vrot.lane.b32.xlu0 %v2723, 64
        %v2785 = vpop.permute.xlu0 %2784
        %2786 = vrot.lane.b32.xlu0 %v2728, 64
        %v2787 = vpop.permute.xlu0 %2786
        %2788 = vrot.lane.b32.xlu0 %v2731, 64
        %v2789 = vpop.permute.xlu0 %2788
        %2790 = vrot.lane.b32.xlu0 %v2736, 64
        %v2791 = vpop.permute.xlu0 %2790
        %2792 = vrot.lane.b32.xlu0 %v2739, 64
        %v2793 = vpop.permute.xlu0 %2792
        %2794 = vrot.lane.b32.xlu0 %v2744, 64
        %v2795 = vpop.permute.xlu0 %2794
        %2796 = vrot.lane.b32.xlu0 %v2747, 64
        %v2797 = vpop.permute.xlu0 %2796
        %vm2814 = vcmask 785920
        %2815 = vst.msk [vmem:[%s230] sm:$0xff] %vm2814, %v2767
        %2816 = vst.msk [vmem:[%s230 + $0x8] sm:$0xff] %vm2814, %v2769
        %2817 = vst.msk [vmem:[%s230 + $0x10] sm:$0xff] %vm2814, %v2771
        %2818 = vst.msk [vmem:[%s230 + $0x18] sm:$0xff] %vm2814, %v2773
        %2819 = vst.msk [vmem:[%s230 + $0x20] sm:$0xff] %vm2814, %v2775
        %2820 = vst.msk [vmem:[%s230 + $0x28] sm:$0xff] %vm2814, %v2777
        %2821 = vst.msk [vmem:[%s230 + $0x30] sm:$0xff] %vm2814, %v2779
        %2822 = vst.msk [vmem:[%s230 + $0x38] sm:$0xff] %vm2814, %v2781
        %2823 = vst.msk [vmem:[%s230 + $0x40] sm:$0xff] %vm2814, %v2783
        %2824 = vst.msk [vmem:[%s230 + $0x48] sm:$0xff] %vm2814, %v2785
        %2825 = vst.msk [vmem:[%s230 + $0x50] sm:$0xff] %vm2814, %v2787
        %2826 = vst.msk [vmem:[%s230 + $0x58] sm:$0xff] %vm2814, %v2789
        %2827 = vst.msk [vmem:[%s230 + $0x60] sm:$0xff] %vm2814, %v2791
        %2828 = vst.msk [vmem:[%s230 + $0x68] sm:$0xff] %vm2814, %v2793
        %2829 = vst.msk [vmem:[%s230 + $0x70] sm:$0xff] %vm2814, %v2795
        %2830 = vst.msk [vmem:[%s230 + $0x78] sm:$0xff] %vm2814, %v2797
        %2831 = vrot.lane.b32.xlu0 %v806, 96
        %v2832 = vpop.permute.xlu0 %2831
        %2833 = vrot.lane.b32.xlu0 %v807, 96
        %v2834 = vpop.permute.xlu0 %2833
        %2835 = vrot.lane.b32.xlu0 %v808, 96
        %v2836 = vpop.permute.xlu0 %2835
        %2837 = vrot.lane.b32.xlu0 %v809, 96
        %v2838 = vpop.permute.xlu0 %2837
        %2839 = vrot.lane.b32.xlu0 %v810, 96
        %v2840 = vpop.permute.xlu0 %2839
        %2841 = vrot.lane.b32.xlu0 %v811, 96
        %v2842 = vpop.permute.xlu0 %2841
        %2843 = vrot.lane.b32.xlu0 %v812, 96
        %v2844 = vpop.permute.xlu0 %2843
        %2845 = vrot.lane.b32.xlu0 %v813, 96
        %v2846 = vpop.permute.xlu0 %2845
        %2847 = vrot.lane.b32.xlu0 %v699, 32
        %v2848 = vpop.permute.xlu0 %2847
        %2849 = vrot.lane.b32.xlu0 %v700, 32
        %v2850 = vpop.permute.xlu0 %2849
        %2851 = vrot.lane.b32.xlu0 %v701, 32
        %v2852 = vpop.permute.xlu0 %2851
        %2853 = vrot.lane.b32.xlu0 %v702, 32
        %v2854 = vpop.permute.xlu0 %2853
        %2855 = vrot.lane.b32.xlu0 %v703, 32
        %v2856 = vpop.permute.xlu0 %2855
        %2857 = vrot.lane.b32.xlu0 %v704, 32
        %v2858 = vpop.permute.xlu0 %2857
        %2859 = vrot.lane.b32.xlu0 %v705, 32
        %v2860 = vpop.permute.xlu0 %2859
        %2861 = vrot.lane.b32.xlu0 %v706, 32
        %v2862 = vpop.permute.xlu0 %2861
        %2863 = vrot.lane.b32.xlu0 %v707, 32
        %v2864 = vpop.permute.xlu0 %2863
        %2865 = vrot.lane.b32.xlu0 %v708, 32
        %v2866 = vpop.permute.xlu0 %2865
        %2867 = vrot.lane.b32.xlu0 %v709, 32
        %v2868 = vpop.permute.xlu0 %2867
        %2869 = vrot.lane.b32.xlu0 %v710, 32
        %v2870 = vpop.permute.xlu0 %2869
        %2871 = vrot.lane.b32.xlu0 %v711, 32
        %v2872 = vpop.permute.xlu0 %2871
        %2873 = vrot.lane.b32.xlu0 %v712, 32
        %v2874 = vpop.permute.xlu0 %2873
        %2875 = vrot.lane.b32.xlu0 %v713, 32
        %v2876 = vpop.permute.xlu0 %2875
        %2877 = vrot.lane.b32.xlu0 %v714, 32
        %v2878 = vpop.permute.xlu0 %2877
        %2879 = vrot.lane.b32.xlu0 %v2832, 32
        %v2880 = vpop.permute.xlu0 %2879
        %2881 = vrot.lane.b32.xlu0 %v2834, 32
        %v2882 = vpop.permute.xlu0 %2881
        %2883 = vrot.lane.b32.xlu0 %v2836, 32
        %v2884 = vpop.permute.xlu0 %2883
        %2885 = vrot.lane.b32.xlu0 %v2838, 32
        %v2886 = vpop.permute.xlu0 %2885
        %2887 = vrot.lane.b32.xlu0 %v2840, 32
        %v2888 = vpop.permute.xlu0 %2887
        %2889 = vrot.lane.b32.xlu0 %v2842, 32
        %v2890 = vpop.permute.xlu0 %2889
        %2891 = vrot.lane.b32.xlu0 %v2844, 32
        %v2892 = vpop.permute.xlu0 %2891
        %2893 = vrot.lane.b32.xlu0 %v2846, 32
        %v2894 = vpop.permute.xlu0 %2893
        %v2896 = vsel %vm814, %v2848, 0
        %v2899 = vsel %vm814, %v2850, 0
        %v2902 = vsel %vm814, %v2852, 0
        %v2905 = vsel %vm814, %v2854, 0
        %v2908 = vsel %vm814, %v2856, 0
        %v2911 = vsel %vm814, %v2858, 0
        %v2914 = vsel %vm814, %v2860, 0
        %v2917 = vsel %vm814, %v2862, 0
        %v2920 = vsel %vm814, %v2864, 0
        %v2923 = vsel %vm814, %v2866, 0
        %v2926 = vsel %vm814, %v2868, 0
        %v2929 = vsel %vm814, %v2870, 0
        %v2932 = vsel %vm814, %v2872, 0
        %v2935 = vsel %vm814, %v2874, 0
        %v2938 = vsel %vm814, %v2876, 0
        %v2941 = vsel %vm814, %v2878, 0
        %v2944 = vsel %vm814, %v2880, 0
        %v2947 = vsel %vm814, %v2882, 0
        %v2950 = vsel %vm814, %v2884, 0
        %v2953 = vsel %vm814, %v2886, 0
        %v2956 = vsel %vm814, %v2888, 0
        %v2959 = vsel %vm814, %v2890, 0
        %v2962 = vsel %vm814, %v2892, 0
        %v2965 = vsel %vm814, %v2894, 0
        %2967 = vmatprep.subr.bf16.mxu0 0
        %2968 = vmatpush1.bf16.xpose.msra.mxu0 %v2920
        %2969 = vmatprep.subr.bf16.mxu0 0
        %2970 = vmatpush1.bf16.xpose.msra.mxu0 %v2923
        %2971 = vmatprep.subr.bf16.mxu0 0
        %2972 = vmatpush1.bf16.xpose.msra.mxu0 %v2926
        %2973 = vmatprep.subr.bf16.mxu0 0
        %2974 = vmatpush1.bf16.xpose.msra.mxu0 %v2929
        %2975 = vmatprep.subr.bf16.mxu0 0
        %2976 = vmatpush1.bf16.xpose.msra.mxu0 %v2932
        %2977 = vmatprep.subr.bf16.mxu0 0
        %2978 = vmatpush1.bf16.xpose.msra.mxu0 %v2935
        %2979 = vmatprep.subr.bf16.mxu0 0
        %2980 = vmatpush1.bf16.xpose.msra.mxu0 %v2938
        %2981 = vmatprep.subr.bf16.mxu0 0
        %2982 = vmatpush1.bf16.xpose.msra.mxu0 %v2941
        %2983 = vmatprep.subr.bf16.mxu0 0
        %2984 = vmatpush1.bf16.xpose.msra.mxu0 %v2944
        %2985 = vmatprep.subr.bf16.mxu0 0
        %2986 = vmatpush1.bf16.xpose.msra.mxu0 %v2947
        %2987 = vmatprep.subr.bf16.mxu0 0
        %2988 = vmatpush1.bf16.xpose.msra.mxu0 %v2950
        %2989 = vmatprep.subr.bf16.mxu0 0
        %2990 = vmatpush1.bf16.xpose.msra.mxu0 %v2953
        %2991 = vmatprep.subr.bf16.mxu0 0
        %2992 = vmatpush1.bf16.xpose.msra.mxu0 %v2956
        %2993 = vmatprep.subr.bf16.mxu0 0
        %2994 = vmatpush1.bf16.xpose.msra.mxu0 %v2959
        %2995 = vmatprep.subr.bf16.mxu0 0
        %2996 = vmatpush1.bf16.xpose.msra.mxu0 %v2962
        %2997 = vmatprep.subr.bf16.mxu0 0
        %2998 = vmatpush1.bf16.xpose.msra.mxu0 %v2965
        %2999 = vmatprep.mubr.bf16.mxu0 0
        %3000 = vmatmul.mubr.bf16.gmra.mrb[0].mxu0 %v2896
        %v3001 = vpop.f32.mrb[0].mxu0
        %v3002 = vadd.f32 0.0, %v3001
        %v3003 = vpop.f32.mrb[0].mxu0
        %v3004 = vadd.f32 0.0, %v3003
        %v3005 = vpop.f32.mrb[0].mxu0
        %v3006 = vadd.f32 0.0, %v3005
        %v3007 = vpop.f32.mrb[0].mxu0
        %v3008 = vadd.f32 0.0, %v3007
        %3009 = vmatprep.mubr.bf16.mxu0 0
        %3010 = vmatmul.mubr.bf16.gmra.mrb[0].mxu0 %v2899
        %v3011 = vpop.f32.mrb[0].mxu0
        %v3012 = vadd.f32 0.0, %v3011
        %v3013 = vpop.f32.mrb[0].mxu0
        %v3014 = vadd.f32 0.0, %v3013
        %v3015 = vpop.f32.mrb[0].mxu0
        %v3016 = vadd.f32 0.0, %v3015
        %v3017 = vpop.f32.mrb[0].mxu0
        %v3018 = vadd.f32 0.0, %v3017
        %3019 = vmatprep.mubr.bf16.mxu0 0
        %3020 = vmatmul.mubr.bf16.gmra.mrb[0].mxu0 %v2902
        %v3021 = vpop.f32.mrb[0].mxu0
        %v3022 = vadd.f32 0.0, %v3021
        %v3023 = vpop.f32.mrb[0].mxu0
        %v3024 = vadd.f32 0.0, %v3023
        %v3025 = vpop.f32.mrb[0].mxu0
        %v3026 = vadd.f32 0.0, %v3025
        %v3027 = vpop.f32.mrb[0].mxu0
        %v3028 = vadd.f32 0.0, %v3027
        %3029 = vmatprep.mubr.bf16.mxu0 0
        %3030 = vmatmul.mubr.bf16.gmra.mrb[0].mxu0 %v2905
        %v3031 = vpop.f32.mrb[0].mxu0
        %v3032 = vadd.f32 0.0, %v3031
        %v3033 = vpop.f32.mrb[0].mxu0
        %v3034 = vadd.f32 0.0, %v3033
        %v3035 = vpop.f32.mrb[0].mxu0
        %v3036 = vadd.f32 0.0, %v3035
        %v3037 = vpop.f32.mrb[0].mxu0
        %v3038 = vadd.f32 0.0, %v3037
        %3039 = vmatprep.mubr.bf16.mxu0 0
        %3040 = vmatmul.mubr.bf16.gmra.mrb[0].mxu0 %v2908
        %v3041 = vpop.f32.mrb[0].mxu0
        %v3042 = vadd.f32 0.0, %v3041
        %v3043 = vpop.f32.mrb[0].mxu0
        %v3044 = vadd.f32 0.0, %v3043
        %v3045 = vpop.f32.mrb[0].mxu0
        %v3046 = vadd.f32 0.0, %v3045
        %v3047 = vpop.f32.mrb[0].mxu0
        %v3048 = vadd.f32 0.0, %v3047
        %3049 = vmatprep.mubr.bf16.mxu0 0
        %3050 = vmatmul.mubr.bf16.gmra.mrb[0].mxu0 %v2911
        %v3051 = vpop.f32.mrb[0].mxu0
        %v3052 = vadd.f32 0.0, %v3051
        %v3053 = vpop.f32.mrb[0].mxu0
        %v3054 = vadd.f32 0.0, %v3053
        %v3055 = vpop.f32.mrb[0].mxu0
        %v3056 = vadd.f32 0.0, %v3055
        %v3057 = vpop.f32.mrb[0].mxu0
        %v3058 = vadd.f32 0.0, %v3057
        %3059 = vmatprep.mubr.bf16.mxu0 0
        %3060 = vmatmul.mubr.bf16.gmra.mrb[0].mxu0 %v2914
        %v3061 = vpop.f32.mrb[0].mxu0
        %v3062 = vadd.f32 0.0, %v3061
        %v3063 = vpop.f32.mrb[0].mxu0
        %v3064 = vadd.f32 0.0, %v3063
        %v3065 = vpop.f32.mrb[0].mxu0
        %v3066 = vadd.f32 0.0, %v3065
        %v3067 = vpop.f32.mrb[0].mxu0
        %v3068 = vadd.f32 0.0, %v3067
        %3069 = vmatprep.mubr.bf16.mxu0 0
        %3070 = vmatmul.mubr.bf16.gmra.mrb[0].mxu0 %v2917
        %v3071 = vpop.f32.mrb[0].mxu0
        %v3072 = vadd.f32 0.0, %v3071
        %v3073 = vpop.f32.mrb[0].mxu0
        %v3074 = vadd.f32 0.0, %v3073
        %v3075 = vpop.f32.mrb[0].mxu0
        %v3076 = vadd.f32 0.0, %v3075
        %v3077 = vpop.f32.mrb[0].mxu0
        %v3078 = vadd.f32 0.0, %v3077
        %3079 = vdwg.mxu0
        %s3081 = sor.u32 256, 1
        %3082 = vrot.lane.b32.xlu0 %v3004, %s3081
        %v3083 = vpop.permute.xlu0 %3082
        %s3085 = sor.u32 256, 9
        %3086 = vrot.lane.b32.xlu0 %v3008, %s3085
        %v3087 = vpop.permute.xlu0 %3086
        %s3089 = sor.u32 256, 17
        %3090 = vrot.lane.b32.xlu0 %v3014, %s3089
        %v3091 = vpop.permute.xlu0 %3090
        %s3093 = sor.u32 256, 25
        %3094 = vrot.lane.b32.xlu0 %v3018, %s3093
        %v3095 = vpop.permute.xlu0 %3094
        %s3097 = sor.u32 256, 33
        %3098 = vrot.lane.b32.xlu0 %v3024, %s3097
        %v3099 = vpop.permute.xlu0 %3098
        %s3101 = sor.u32 256, 41
        %3102 = vrot.lane.b32.xlu0 %v3028, %s3101
        %v3103 = vpop.permute.xlu0 %3102
        %s3105 = sor.u32 256, 49
        %3106 = vrot.lane.b32.xlu0 %v3034, %s3105
        %v3107 = vpop.permute.xlu0 %3106
        %s3109 = sor.u32 256, 57
        %3110 = vrot.lane.b32.xlu0 %v3038, %s3109
        %v3111 = vpop.permute.xlu0 %3110
        %s3113 = sor.u32 256, 65
        %3114 = vrot.lane.b32.xlu0 %v3044, %s3113
        %v3115 = vpop.permute.xlu0 %3114
        %s3117 = sor.u32 256, 73
        %3118 = vrot.lane.b32.xlu0 %v3048, %s3117
        %v3119 = vpop.permute.xlu0 %3118
        %s3121 = sor.u32 256, 81
        %3122 = vrot.lane.b32.xlu0 %v3054, %s3121
        %v3123 = vpop.permute.xlu0 %3122
        %s3125 = sor.u32 256, 89
        %3126 = vrot.lane.b32.xlu0 %v3058, %s3125
        %v3127 = vpop.permute.xlu0 %3126
        %s3129 = sor.u32 256, 97
        %3130 = vrot.lane.b32.xlu0 %v3064, %s3129
        %v3131 = vpop.permute.xlu0 %3130
        %s3133 = sor.u32 256, 105
        %3134 = vrot.lane.b32.xlu0 %v3068, %s3133
        %v3135 = vpop.permute.xlu0 %3134
        %s3137 = sor.u32 256, 113
        %3138 = vrot.lane.b32.xlu0 %v3074, %s3137
        %v3139 = vpop.permute.xlu0 %3138
        %s3141 = sor.u32 256, 121
        %3142 = vrot.lane.b32.xlu0 %v3078, %s3141
        %v3143 = vpop.permute.xlu0 %3142
        %v3144 = vadd.f32 %v3002, %v3083
        %v3145 = vadd.f32 %v3006, %v3087
        %v3146 = vadd.f32 %v3012, %v3091
        %v3147 = vadd.f32 %v3016, %v3095
        %v3148 = vadd.f32 %v3022, %v3099
        %v3149 = vadd.f32 %v3026, %v3103
        %v3150 = vadd.f32 %v3032, %v3107
        %v3151 = vadd.f32 %v3036, %v3111
        %v3152 = vadd.f32 %v3042, %v3115
        %v3153 = vadd.f32 %v3046, %v3119
        %v3154 = vadd.f32 %v3052, %v3123
        %v3155 = vadd.f32 %v3056, %v3127
        %v3156 = vadd.f32 %v3062, %v3131
        %v3157 = vadd.f32 %v3066, %v3135
        %v3158 = vadd.f32 %v3072, %v3139
        %v3159 = vadd.f32 %v3076, %v3143
        %v3160 = vmul.f32 %v3144, 0.17677669
        %v3161 = vmul.f32 %v3145, 0.17677669
        %v3162 = vmul.f32 %v3146, 0.17677669
        %v3163 = vmul.f32 %v3147, 0.17677669
        %v3164 = vmul.f32 %v3148, 0.17677669
        %v3165 = vmul.f32 %v3149, 0.17677669
        %v3166 = vmul.f32 %v3150, 0.17677669
        %v3167 = vmul.f32 %v3151, 0.17677669
        %v3168 = vmul.f32 %v3152, 0.17677669
        %v3169 = vmul.f32 %v3153, 0.17677669
        %v3170 = vmul.f32 %v3154, 0.17677669
        %v3171 = vmul.f32 %v3155, 0.17677669
        %v3172 = vmul.f32 %v3156, 0.17677669
        %v3173 = vmul.f32 %v3157, 0.17677669
        %v3174 = vmul.f32 %v3158, 0.17677669
        %v3175 = vmul.f32 %v3159, 0.17677669
        %v3176 = vadd.f32 %v3160, %v758
        %v3177 = vadd.f32 %v3161, %v759
        %v3178 = vadd.f32 %v3162, %v760
        %v3179 = vadd.f32 %v3163, %v761
        %v3180 = vadd.f32 %v3164, %v762
        %v3181 = vadd.f32 %v3165, %v763
        %v3182 = vadd.f32 %v3166, %v764
        %v3183 = vadd.f32 %v3167, %v765
        %v3184 = vadd.f32 %v3168, %v766
        %v3185 = vadd.f32 %v3169, %v767
        %v3186 = vadd.f32 %v3170, %v768
        %v3187 = vadd.f32 %v3171, %v769
        %v3188 = vadd.f32 %v3172, %v770
        %v3189 = vadd.f32 %v3173, %v771
        %v3190 = vadd.f32 %v3174, %v772
        %v3191 = vadd.f32 %v3175, %v773
        %3192 = vmax.xlane.f32.xlu0 %v3176
        %v3193 = vpop.xlane.xlu0 %3192
        %3194 = vmax.xlane.f32.xlu0 %v3177
        %v3195 = vpop.xlane.xlu0 %3194
        %3196 = vmax.xlane.f32.xlu0 %v3178
        %v3197 = vpop.xlane.xlu0 %3196
        %3198 = vmax.xlane.f32.xlu0 %v3179
        %v3199 = vpop.xlane.xlu0 %3198
        %3200 = vmax.xlane.f32.xlu0 %v3180
        %v3201 = vpop.xlane.xlu0 %3200
        %3202 = vmax.xlane.f32.xlu0 %v3181
        %v3203 = vpop.xlane.xlu0 %3202
        %3204 = vmax.xlane.f32.xlu0 %v3182
        %v3205 = vpop.xlane.xlu0 %3204
        %3206 = vmax.xlane.f32.xlu0 %v3183
        %v3207 = vpop.xlane.xlu0 %3206
        %3208 = vmax.xlane.f32.xlu0 %v3184
        %v3209 = vpop.xlane.xlu0 %3208
        %3210 = vmax.xlane.f32.xlu0 %v3185
        %v3211 = vpop.xlane.xlu0 %3210
        %3212 = vmax.xlane.f32.xlu0 %v3186
        %v3213 = vpop.xlane.xlu0 %3212
        %3214 = vmax.xlane.f32.xlu0 %v3187
        %v3215 = vpop.xlane.xlu0 %3214
        %3216 = vmax.xlane.f32.xlu0 %v3188
        %v3217 = vpop.xlane.xlu0 %3216
        %3218 = vmax.xlane.f32.xlu0 %v3189
        %v3219 = vpop.xlane.xlu0 %3218
        %3220 = vmax.xlane.f32.xlu0 %v3190
        %v3221 = vpop.xlane.xlu0 %3220
        %3222 = vmax.xlane.f32.xlu0 %v3191
        %v3223 = vpop.xlane.xlu0 %3222
        %v3224 = vsub.f32 %v3176, %v3193
        %v3225 = vsub.f32 %v3177, %v3195
        %v3226 = vsub.f32 %v3178, %v3197
        %v3227 = vsub.f32 %v3179, %v3199
        %v3228 = vsub.f32 %v3180, %v3201
        %v3229 = vsub.f32 %v3181, %v3203
        %v3230 = vsub.f32 %v3182, %v3205
        %v3231 = vsub.f32 %v3183, %v3207
        %v3232 = vsub.f32 %v3184, %v3209
        %v3233 = vsub.f32 %v3185, %v3211
        %v3234 = vsub.f32 %v3186, %v3213
        %v3235 = vsub.f32 %v3187, %v3215
        %v3236 = vsub.f32 %v3188, %v3217
        %v3237 = vsub.f32 %v3189, %v3219
        %v3238 = vsub.f32 %v3190, %v3221
        %v3239 = vsub.f32 %v3191, %v3223
        %v3240 = vmul.f32 %v3224, 1.442695
        %v3241 = vpow.pop %v3240
        %v3242 = vmul.f32 %v3225, 1.442695
        %v3243 = vpow.pop %v3242
        %v3244 = vmul.f32 %v3226, 1.442695
        %v3245 = vpow.pop %v3244
        %v3246 = vmul.f32 %v3227, 1.442695
        %v3247 = vpow.pop %v3246
        %v3248 = vmul.f32 %v3228, 1.442695
        %v3249 = vpow.pop %v3248
        %v3250 = vmul.f32 %v3229, 1.442695
        %v3251 = vpow.pop %v3250
        %v3252 = vmul.f32 %v3230, 1.442695
        %v3253 = vpow.pop %v3252
        %v3254 = vmul.f32 %v3231, 1.442695
        %v3255 = vpow.pop %v3254
        %v3256 = vmul.f32 %v3232, 1.442695
        %v3257 = vpow.pop %v3256
        %v3258 = vmul.f32 %v3233, 1.442695
        %v3259 = vpow.pop %v3258
        %v3260 = vmul.f32 %v3234, 1.442695
        %v3261 = vpow.pop %v3260
        %v3262 = vmul.f32 %v3235, 1.442695
        %v3263 = vpow.pop %v3262
        %v3264 = vmul.f32 %v3236, 1.442695
        %v3265 = vpow.pop %v3264
        %v3266 = vmul.f32 %v3237, 1.442695
        %v3267 = vpow.pop %v3266
        %v3268 = vmul.f32 %v3238, 1.442695
        %v3269 = vpow.pop %v3268
        %v3270 = vmul.f32 %v3239, 1.442695
        %v3271 = vpow.pop %v3270
        %3272 = vadd.xlane.f32.xlu0 %v3241
        %v3273 = vpop.xlane.xlu0 %3272
        %3274 = vadd.xlane.f32.xlu0 %v3243
        %v3275 = vpop.xlane.xlu0 %3274
        %3276 = vadd.xlane.f32.xlu0 %v3245
        %v3277 = vpop.xlane.xlu0 %3276
        %3278 = vadd.xlane.f32.xlu0 %v3247
        %v3279 = vpop.xlane.xlu0 %3278
        %3280 = vadd.xlane.f32.xlu0 %v3249
        %v3281 = vpop.xlane.xlu0 %3280
        %3282 = vadd.xlane.f32.xlu0 %v3251
        %v3283 = vpop.xlane.xlu0 %3282
        %3284 = vadd.xlane.f32.xlu0 %v3253
        %v3285 = vpop.xlane.xlu0 %3284
        %3286 = vadd.xlane.f32.xlu0 %v3255
        %v3287 = vpop.xlane.xlu0 %3286
        %3288 = vadd.xlane.f32.xlu0 %v3257
        %v3289 = vpop.xlane.xlu0 %3288
        %3290 = vadd.xlane.f32.xlu0 %v3259
        %v3291 = vpop.xlane.xlu0 %3290
        %3292 = vadd.xlane.f32.xlu0 %v3261
        %v3293 = vpop.xlane.xlu0 %3292
        %3294 = vadd.xlane.f32.xlu0 %v3263
        %v3295 = vpop.xlane.xlu0 %3294
        %3296 = vadd.xlane.f32.xlu0 %v3265
        %v3297 = vpop.xlane.xlu0 %3296
        %3298 = vadd.xlane.f32.xlu0 %v3267
        %v3299 = vpop.xlane.xlu0 %3298
        %3300 = vadd.xlane.f32.xlu0 %v3269
        %v3301 = vpop.xlane.xlu0 %3300
        %3302 = vadd.xlane.f32.xlu0 %v3271
        %v3303 = vpop.xlane.xlu0 %3302
        %v3304 = vrcp.pop %v3273
        %v3305 = vmul.f32 %v3241, %v3304
        %v3306 = vrcp.pop %v3275
        %v3307 = vmul.f32 %v3243, %v3306
        %v3308 = vrcp.pop %v3277
        %v3309 = vmul.f32 %v3245, %v3308
        %v3310 = vrcp.pop %v3279
        %v3311 = vmul.f32 %v3247, %v3310
        %v3312 = vrcp.pop %v3281
        %v3313 = vmul.f32 %v3249, %v3312
        %v3314 = vrcp.pop %v3283
        %v3315 = vmul.f32 %v3251, %v3314
        %v3316 = vrcp.pop %v3285
        %v3317 = vmul.f32 %v3253, %v3316
        %v3318 = vrcp.pop %v3287
        %v3319 = vmul.f32 %v3255, %v3318
        %v3320 = vrcp.pop %v3289
        %v3321 = vmul.f32 %v3257, %v3320
        %v3322 = vrcp.pop %v3291
        %v3323 = vmul.f32 %v3259, %v3322
        %v3324 = vrcp.pop %v3293
        %v3325 = vmul.f32 %v3261, %v3324
        %v3326 = vrcp.pop %v3295
        %v3327 = vmul.f32 %v3263, %v3326
        %v3328 = vrcp.pop %v3297
        %v3329 = vmul.f32 %v3265, %v3328
        %v3330 = vrcp.pop %v3299
        %v3331 = vmul.f32 %v3267, %v3330
        %v3332 = vrcp.pop %v3301
        %v3333 = vmul.f32 %v3269, %v3332
        %v3334 = vrcp.pop %v3303
        %v3335 = vmul.f32 %v3271, %v3334
        %v3336 = vpack.c.bf16 %v3307, %v3305
        %v3337 = vpack.c.bf16 %v3311, %v3309
        %v3338 = vpack.c.bf16 %v3315, %v3313
        %v3339 = vpack.c.bf16 %v3319, %v3317
        %v3340 = vpack.c.bf16 %v3323, %v3321
        %v3341 = vpack.c.bf16 %v3327, %v3325
        %v3342 = vpack.c.bf16 %v3331, %v3329
        %v3343 = vpack.c.bf16 %v3335, %v3333
        %3344 = vrot.lane.b32.xlu0 %v715, 32
        %v3345 = vpop.permute.xlu0 %3344
        %3346 = vrot.lane.b32.xlu0 %v716, 32
        %v3347 = vpop.permute.xlu0 %3346
        %3348 = vrot.lane.b32.xlu0 %v717, 32
        %v3349 = vpop.permute.xlu0 %3348
        %3350 = vrot.lane.b32.xlu0 %v718, 32
        %v3351 = vpop.permute.xlu0 %3350
        %3352 = vrot.lane.b32.xlu0 %v719, 32
        %v3353 = vpop.permute.xlu0 %3352
        %3354 = vrot.lane.b32.xlu0 %v720, 32
        %v3355 = vpop.permute.xlu0 %3354
        %3356 = vrot.lane.b32.xlu0 %v721, 32
        %v3357 = vpop.permute.xlu0 %3356
        %3358 = vrot.lane.b32.xlu0 %v722, 32
        %v3359 = vpop.permute.xlu0 %3358
        %3368 = vmatprep.subr.bf16.mxu0 0
        %3369 = vmatpush1.bf16.msra.mxu0 %v3345
        %3370 = vmatprep.subr.bf16.mxu0 0
        %3371 = vmatpush1.bf16.msra.mxu0 %v3347
        %3372 = vmatprep.subr.bf16.mxu0 0
        %3373 = vmatpush1.bf16.msra.mxu0 %v3349
        %3374 = vmatprep.subr.bf16.mxu0 0
        %3375 = vmatpush1.bf16.msra.mxu0 %v3351
        %3376 = vmatprep.subr.bf16.mxu0 0
        %3377 = vmatpush1.bf16.msra.mxu0 %v3353
        %3378 = vmatprep.subr.bf16.mxu0 0
        %3379 = vmatpush1.bf16.msra.mxu0 %v3355
        %3380 = vmatprep.subr.bf16.mxu0 0
        %3381 = vmatpush1.bf16.msra.mxu0 %v3357
        %3382 = vmatprep.subr.bf16.mxu0 0
        %3383 = vmatpush1.bf16.msra.mxu0 %v3359
        %3384 = vmatprep.subr.bf16.mxu0 0
        %3385 = vmatpush1.bf16.msra.mxu0 0
        %3386 = vmatprep.subr.bf16.mxu0 0
        %3387 = vmatpush1.bf16.msra.mxu0 0
        %3388 = vmatprep.subr.bf16.mxu0 0
        %3389 = vmatpush1.bf16.msra.mxu0 0
        %3390 = vmatprep.subr.bf16.mxu0 0
        %3391 = vmatpush1.bf16.msra.mxu0 0
        %3392 = vmatprep.subr.bf16.mxu0 0
        %3393 = vmatpush1.bf16.msra.mxu0 0
        %3394 = vmatprep.subr.bf16.mxu0 0
        %3395 = vmatpush1.bf16.msra.mxu0 0
        %3396 = vmatprep.subr.bf16.mxu0 0
        %3397 = vmatpush1.bf16.msra.mxu0 0
        %3398 = vmatprep.subr.bf16.mxu0 0
        %3399 = vmatpush1.bf16.msra.mxu0 0
        %3400 = vmatprep.mubr.bf16.mxu0 0
        %3401 = vmatmul.mubr.bf16.gmra.mrb[0].mxu0 %v3336
        %v3402 = vpop.f32.mrb[0].mxu0
        %v3403 = vadd.f32 0.0, %v3402
        %v3404 = vpop.f32.mrb[0].mxu0
        %v3405 = vpop.f32.mrb[0].mxu0
        %v3406 = vadd.f32 0.0, %v3405
        %v3407 = vpop.f32.mrb[0].mxu0
        %3408 = vmatprep.mubr.bf16.mxu0 0
        %3409 = vmatmul.mubr.bf16.gmra.mrb[0].mxu0 %v3337
        %v3410 = vpop.f32.mrb[0].mxu0
        %v3411 = vadd.f32 0.0, %v3410
        %v3412 = vpop.f32.mrb[0].mxu0
        %v3413 = vpop.f32.mrb[0].mxu0
        %v3414 = vadd.f32 0.0, %v3413
        %v3415 = vpop.f32.mrb[0].mxu0
        %3416 = vmatprep.mubr.bf16.mxu0 0
        %3417 = vmatmul.mubr.bf16.gmra.mrb[0].mxu0 %v3338
        %v3418 = vpop.f32.mrb[0].mxu0
        %v3419 = vadd.f32 0.0, %v3418
        %v3420 = vpop.f32.mrb[0].mxu0
        %v3421 = vpop.f32.mrb[0].mxu0
        %v3422 = vadd.f32 0.0, %v3421
        %v3423 = vpop.f32.mrb[0].mxu0
        %3424 = vmatprep.mubr.bf16.mxu0 0
        %3425 = vmatmul.mubr.bf16.gmra.mrb[0].mxu0 %v3339
        %v3426 = vpop.f32.mrb[0].mxu0
        %v3427 = vadd.f32 0.0, %v3426
        %v3428 = vpop.f32.mrb[0].mxu0
        %v3429 = vpop.f32.mrb[0].mxu0
        %v3430 = vadd.f32 0.0, %v3429
        %v3431 = vpop.f32.mrb[0].mxu0
        %3432 = vmatprep.mubr.bf16.mxu0 0
        %3433 = vmatmul.mubr.bf16.gmra.mrb[0].mxu0 %v3340
        %v3434 = vpop.f32.mrb[0].mxu0
        %v3435 = vadd.f32 0.0, %v3434
        %v3436 = vpop.f32.mrb[0].mxu0
        %v3437 = vpop.f32.mrb[0].mxu0
        %v3438 = vadd.f32 0.0, %v3437
        %v3439 = vpop.f32.mrb[0].mxu0
        %3440 = vmatprep.mubr.bf16.mxu0 0
        %3441 = vmatmul.mubr.bf16.gmra.mrb[0].mxu0 %v3341
        %v3442 = vpop.f32.mrb[0].mxu0
        %v3443 = vadd.f32 0.0, %v3442
        %v3444 = vpop.f32.mrb[0].mxu0
        %v3445 = vpop.f32.mrb[0].mxu0
        %v3446 = vadd.f32 0.0, %v3445
        %v3447 = vpop.f32.mrb[0].mxu0
        %3448 = vmatprep.mubr.bf16.mxu0 0
        %3449 = vmatmul.mubr.bf16.gmra.mrb[0].mxu0 %v3342
        %v3450 = vpop.f32.mrb[0].mxu0
        %v3451 = vadd.f32 0.0, %v3450
        %v3452 = vpop.f32.mrb[0].mxu0
        %v3453 = vpop.f32.mrb[0].mxu0
        %v3454 = vadd.f32 0.0, %v3453
        %v3455 = vpop.f32.mrb[0].mxu0
        %3456 = vmatprep.mubr.bf16.mxu0 0
        %3457 = vmatmul.mubr.bf16.gmra.mrb[0].mxu0 %v3343
        %v3458 = vpop.f32.mrb[0].mxu0
        %v3459 = vadd.f32 0.0, %v3458
        %v3460 = vpop.f32.mrb[0].mxu0
        %v3461 = vpop.f32.mrb[0].mxu0
        %v3462 = vadd.f32 0.0, %v3461
        %v3463 = vpop.f32.mrb[0].mxu0
        %3464 = vdwg.mxu0
        %3481 = vrot.lane.b32.xlu0 %v3403, 96
        %v3482 = vpop.permute.xlu0 %3481
        %3483 = vrot.lane.b32.xlu0 %v3406, 96
        %v3484 = vpop.permute.xlu0 %3483
        %3485 = vrot.lane.b32.xlu0 %v3411, 96
        %v3486 = vpop.permute.xlu0 %3485
        %3487 = vrot.lane.b32.xlu0 %v3414, 96
        %v3488 = vpop.permute.xlu0 %3487
        %3489 = vrot.lane.b32.xlu0 %v3419, 96
        %v3490 = vpop.permute.xlu0 %3489
        %3491 = vrot.lane.b32.xlu0 %v3422, 96
        %v3492 = vpop.permute.xlu0 %3491
        %3493 = vrot.lane.b32.xlu0 %v3427, 96
        %v3494 = vpop.permute.xlu0 %3493
        %3495 = vrot.lane.b32.xlu0 %v3430, 96
        %v3496 = vpop.permute.xlu0 %3495
        %3497 = vrot.lane.b32.xlu0 %v3435, 96
        %v3498 = vpop.permute.xlu0 %3497
        %3499 = vrot.lane.b32.xlu0 %v3438, 96
        %v3500 = vpop.permute.xlu0 %3499
        %3501 = vrot.lane.b32.xlu0 %v3443, 96
        %v3502 = vpop.permute.xlu0 %3501
        %3503 = vrot.lane.b32.xlu0 %v3446, 96
        %v3504 = vpop.permute.xlu0 %3503
        %3505 = vrot.lane.b32.xlu0 %v3451, 96
        %v3506 = vpop.permute.xlu0 %3505
        %3507 = vrot.lane.b32.xlu0 %v3454, 96
        %v3508 = vpop.permute.xlu0 %3507
        %3509 = vrot.lane.b32.xlu0 %v3459, 96
        %v3510 = vpop.permute.xlu0 %3509
        %3511 = vrot.lane.b32.xlu0 %v3462, 96
        %v3512 = vpop.permute.xlu0 %3511
        %vm3529 = vcmask 1048320
        %3530 = vst.msk [vmem:[%s230] sm:$0xff] %vm3529, %v3482
        %3531 = vst.msk [vmem:[%s230 + $0x8] sm:$0xff] %vm3529, %v3484
        %3532 = vst.msk [vmem:[%s230 + $0x10] sm:$0xff] %vm3529, %v3486
        %3533 = vst.msk [vmem:[%s230 + $0x18] sm:$0xff] %vm3529, %v3488
        %3534 = vst.msk [vmem:[%s230 + $0x20] sm:$0xff] %vm3529, %v3490
        %3535 = vst.msk [vmem:[%s230 + $0x28] sm:$0xff] %vm3529, %v3492
        %3536 = vst.msk [vmem:[%s230 + $0x30] sm:$0xff] %vm3529, %v3494
        %3537 = vst.msk [vmem:[%s230 + $0x38] sm:$0xff] %vm3529, %v3496
        %3538 = vst.msk [vmem:[%s230 + $0x40] sm:$0xff] %vm3529, %v3498
        %3539 = vst.msk [vmem:[%s230 + $0x48] sm:$0xff] %vm3529, %v3500
        %3540 = vst.msk [vmem:[%s230 + $0x50] sm:$0xff] %vm3529, %v3502
        %3541 = vst.msk [vmem:[%s230 + $0x58] sm:$0xff] %vm3529, %v3504
        %3542 = vst.msk [vmem:[%s230 + $0x60] sm:$0xff] %vm3529, %v3506
        %3543 = vst.msk [vmem:[%s230 + $0x68] sm:$0xff] %vm3529, %v3508
        %3544 = vst.msk [vmem:[%s230 + $0x70] sm:$0xff] %vm3529, %v3510
        %3545 = vst.msk [vmem:[%s230 + $0x78] sm:$0xff] %vm3529, %v3512
        %s3546 = sand.u32 %s119, 1
        %s3547 = scalar_lea.sflag [#allocation4], %s3546
        %s3548 = sand.u32 %s119, 1
        %s3549 = smul.addr %s3548, 128
        %s3550 = scalar_lea.vmem [#allocation7], %s3549
        // Predicated region
        $region45: #{tpu_custom_call.1} parent=35 // pred_check
          %p3551 = pneg %p129
        $region46: #{tpu_custom_call.1} parent=35 // pred_check_branch
          %3553 = sbr.rel (%p3551) target = $region48
        $region47: #{tpu_custom_call.1} parent=35 // pred_region
          %s3555 = ssub.s32 2048, 2048
          %3556 = vsyncadd %s3547, %s3555
          %s3557 = smul.addr %s22, 16
          %s3558 = smul.addr %s3557, 128
          %s3559 = scalar_lea.hbm %s4, %s3558
          %s3560 = sshll.u32 %s3550, 4
          %s3561 = int_to_ptr.vmem [resolvable:$true] %s3560
          %3566 = dma.vmem_to_hbm [thread:$0]  %s3561, 2048, %s3559, %s3547, 128, 128, 8
        $region48: #{tpu_custom_call.1} parent=35 // pred_fallthru
          _
      $region36: #{tpu_custom_call.1} parent=5 // pred_fallthru
        _
      %p3567 = scmp.le.s32.totalorder 2, %s17
      // Predicated region
      $region49: #{tpu_custom_call.1} parent=5 // pred_check
        %p3568 = pneg %p3567
      $region50: #{tpu_custom_call.1} parent=5 // pred_check_branch
        %3570 = sbr.rel (%p3568) target = $region52
      $region51: #{tpu_custom_call.1} parent=5 // pred_region
        %s3571 = ssub.s32 %s17, 2
        // Predicated region
        $region53: #{tpu_custom_call.1} parent=51 // pred_check
          %p3572 = pneg %p135
        $region54: #{tpu_custom_call.1} parent=51 // pred_check_branch
          %3574 = sbr.rel (%p3572) target = $region56
        $region55: #{tpu_custom_call.1} parent=51 // pred_region
          %s3575 = sand.u32 %s120, 1
          %s3576 = scalar_lea.sflag [#allocation4], %s3575
          %s3577 = sand.u32 %s120, 1
          %s3578 = smul.addr %s3577, 128
          %s3579 = scalar_lea.vmem [#allocation7], %s3578
          %3580 = dma.done %s3576, 2048
        $region56: #{tpu_custom_call.1} parent=51 // pred_fallthru
          _
      $region52: #{tpu_custom_call.1} parent=5 // pred_fallthru
        _
    $region6: #{tpu_custom_call.1} parent=1 // loop_footer
      %s21 = sadd.s32 1, %s17
    $region7: #{tpu_custom_call.1} parent=1 // loop_footer_branch
      %16 = sbr.rel target = $region3
    $region8: #{tpu_custom_call.1} parent=1 // loop_exit
      _
    %3581 = vsyncpa [#allocation3], 1
    %s3582 = scalar_lea.sflag [#allocation3], 1
    %3583 = vsyncpa %s3582, 1
    %3584 = vsyncpa [#allocation6], 1
    %3585 = vsyncpa [#allocation4], 1
    %s3586 = scalar_lea.sflag [#allocation4], 1
    %3587 = vsyncpa %s3586, 1

</llo_original>
